<compile_context>
chip_gen: v7x
topology: tpu7x:2x2x1
jax: 0.10.0
libtpu: 0.0.40
codegen_flags: <defaults>
</compile_context>

<pallas_src>
import math
import functools

import jax
import jax.numpy as jnp
from jax.experimental import pallas as pl
from jax.experimental.pallas import tpu as pltpu


def self_attention_kernel(
    x_ref,        # (1, S, E)  bf16
    wqkv_ref,     # (E, 3E)    bf16  (packed [Wq*scale | Wk | Wv])
    bqkv_ref,     # (1, 3E)    f32   (packed [bq*scale | bk | bv])
    wd_ref,       # (E, E)     bf16
    bd_ref,       # (1, E)     f32
    gamma_ref,    # (1, E)     f32
    beta_ref,     # (1, E)     f32
    o_ref,        # (1, S, E)  f32
    *, num_heads: int, head_dim: int,
):
    E = num_heads * head_dim
    bf16, f32 = jnp.bfloat16, jnp.float32

    xb = x_ref[0]                                    # (S, E) bf16

    # ---- fused Q/K/V projection: one bf16 MXU matmul, f32 accumulation ----
    qkv = jnp.dot(xb, wqkv_ref[...], preferred_element_type=f32)
    qkv = qkv + bqkv_ref[...]                        # (S, 3E) f32

    q = qkv[:, 0 * E:1 * E]                          # already pre-scaled by 1/sqrt(D)
    k = qkv[:, 1 * E:2 * E]
    v = qkv[:, 2 * E:3 * E]

    # ---- head-batched layout (H, S, D) ----
    def to_heads(t):
        return jnp.stack(
            [t[:, h * head_dim:(h + 1) * head_dim] for h in range(num_heads)],
            axis=0)

    qh = to_heads(q).astype(bf16)                    # (H, S, D)
    kh = to_heads(k).astype(bf16)
    vh = to_heads(v).astype(bf16)

    # ---- batched scaled dot-product attention (scale already folded into q) ----
    scores = jnp.einsum("hsd,htd->hst", qh, kh,
                        preferred_element_type=f32)  # (H, S, S) f32

    m = jnp.max(scores, axis=-1, keepdims=True)
    e = jnp.exp(scores - m)                          # values in [0, 1], bf16-safe
    denom = jnp.sum(e, axis=-1, keepdims=True)       # f32 row sums
    # dropout: eval mode -> identity

    # Deferred normalization: P@V with unnormalized weights, then one EUP reciprocal
    # multiplied into the (H,S,D) context (cheaper than scaling the (H,S,S) probs).
    ctx_h = jnp.einsum("hst,htd->hsd", e.astype(bf16), vh,
                       preferred_element_type=f32)   # (H, S, D) f32
    ctx_h = ctx_h * pl.reciprocal(denom, approx=True)

    # back to (S, E)  == permute(0,2,1,3) + reshape in the PyTorch module
    ctx = jnp.concatenate([ctx_h[h] for h in range(num_heads)], axis=-1)

    # ---- residual dense: out = ctx + dense1(ctx) ----
    out = ctx + (jnp.dot(ctx.astype(bf16), wd_ref[...],
                         preferred_element_type=f32) + bd_ref[...])

    # ---- LayerNorm over last dim (eps=1e-5, PyTorch default), f32 statistics ----
    mean = jnp.mean(out, axis=-1, keepdims=True)
    cen = out - mean
    var = jnp.mean(cen * cen, axis=-1, keepdims=True)
    normed = cen * jax.lax.rsqrt(var + 1e-5) * gamma_ref[...] + beta_ref[...]

    o_ref[0] = normed.astype(o_ref.dtype)


def self_attention(x, params, *, num_heads: int):
    """x: (B, S, E) float32.  params: dict of f32 weights (see init_params)."""
    B, S, E = x.shape
    assert E % num_heads == 0
    head_dim = E // num_heads
    scale = 1.0 / math.sqrt(head_dim)

    # Host-side packing: fold the attention scale into the Q projection, pack QKV,
    # pre-cast matmul weights to bf16 (halves weight DMA bytes, fewer MXU boundaries).
    wqkv = jnp.concatenate(
        [params["wq"] * scale, params["wk"], params["wv"]],
        axis=1).astype(jnp.bfloat16)                             # (E, 3E) bf16
    bqkv = jnp.concatenate(
        [params["bq"] * scale, params["bk"], params["bv"]],
        axis=1)                                                  # (1, 3E) f32
    wd = params["wd"].astype(jnp.bfloat16)                       # (E, E)  bf16
    xb = x.astype(jnp.bfloat16)                                  # (B,S,E) bf16

    kernel = functools.partial(
        self_attention_kernel, num_heads=num_heads, head_dim=head_dim)

    return pl.pallas_call(
        kernel,
        out_shape=jax.ShapeDtypeStruct((B, S, E), jnp.float32),
        grid_spec=pltpu.PrefetchScalarGridSpec(
            num_scalar_prefetch=0,
            grid=(B,),
            in_specs=[
                pl.BlockSpec((1, S, E), lambda b: (b, 0, 0)),    # x (bf16)
                pl.BlockSpec((E, 3 * E), lambda b: (0, 0)),      # Wqkv (bf16)
                pl.BlockSpec((1, 3 * E), lambda b: (0, 0)),      # bqkv
                pl.BlockSpec((E, E), lambda b: (0, 0)),          # Wd (bf16)
                pl.BlockSpec((1, E), lambda b: (0, 0)),          # bd
                pl.BlockSpec((1, E), lambda b: (0, 0)),          # gamma
                pl.BlockSpec((1, E), lambda b: (0, 0)),          # beta
            ],
            out_specs=pl.BlockSpec((1, S, E), lambda b: (b, 0, 0)),
        ),
        compiler_params=pltpu.CompilerParams(
            dimension_semantics=("parallel",),
            vmem_limit_bytes=32 * 1024 * 1024,
        ),
    )(xb, wqkv, bqkv, wd, params["bd"], params["gamma"], params["beta"])


def init_params(key, emb_size):
    """Deterministic init mimicking PyTorch nn.Linear default (uniform +-1/sqrt(fan_in)).
    Weights are stored transposed to (in, out) so the kernel computes x @ W + b."""
    bound = 1.0 / math.sqrt(emb_size)
    keys = jax.random.split(key, 8)

    def lin(kw, kb):
        w = jax.random.uniform(kw, (emb_size, emb_size), jnp.float32, -bound, bound)
        b = jax.random.uniform(kb, (1, emb_size), jnp.float32, -bound, bound)
        return w, b

    wq, bq = lin(keys[0], keys[1])
    wk, bk = lin(keys[2], keys[3])
    wv, bv = lin(keys[4], keys[5])
    wd, bd = lin(keys[6], keys[7])
    gamma = jnp.ones((1, emb_size), jnp.float32)
    beta = jnp.zeros((1, emb_size), jnp.float32)
    return dict(wq=wq, bq=bq, wk=wk, bk=bk, wv=wv, bv=bv,
                wd=wd, bd=bd, gamma=gamma, beta=beta)


def reference_f32(x, params, num_heads):
    """Plain-JAX f32 reference of the PyTorch forward (eval-mode dropout)."""
    B, S, E = x.shape
    D = E // num_heads
    q = x @ params["wq"] + params["bq"]
    k = x @ params["wk"] + params["bk"]
    v = x @ params["wv"] + params["bv"]

    def split(t):
        return t.reshape(B, S, num_heads, D).transpose(0, 2, 1, 3)  # (B,H,S,D)

    qh, kh, vh = split(q), split(k), split(v)
    scores = jnp.einsum("bhsd,bhtd->bhst", qh, kh) / math.sqrt(D)
    probs = jax.nn.softmax(scores, axis=-1)
    ctx = jnp.einsum("bhst,bhtd->bhsd", probs, vh)
    ctx = ctx.transpose(0, 2, 1, 3).reshape(B, S, E)
    out = ctx + (ctx @ params["wd"] + params["bd"])
    mean = out.mean(-1, keepdims=True)
    var = ((out - mean) ** 2).mean(-1, keepdims=True)
    return (out - mean) / jnp.sqrt(var + 1e-5) * params["gamma"] + params["beta"]


def reference_mixed(x, params, num_heads):
    """Reference mirroring the kernel's precision strategy:
    bf16 MXU operands, f32 accumulation, f32 softmax / LayerNorm statistics."""
    B, S, E = x.shape
    D = E // num_heads
    bf16, f32 = jnp.bfloat16, jnp.float32
    xb = x.astype(bf16)

    def lin(w, b):
        return jnp.einsum("bse,ef->bsf", xb, w.astype(bf16),
                          preferred_element_type=f32) + b

    q = lin(params["wq"], params["bq"])
    k = lin(params["wk"], params["bk"])
    v = lin(params["wv"], params["bv"])

    def split(t):
        return t.reshape(B, S, num_heads, D).transpose(0, 2, 1, 3)

    qh, kh, vh = (split(q).astype(bf16), split(k).astype(bf16), split(v).astype(bf16))
    scores = jnp.einsum("bhsd,bhtd->bhst", qh, kh,
                        preferred_element_type=f32) / math.sqrt(D)
    probs = jax.nn.softmax(scores, axis=-1)
    ctx = jnp.einsum("bhst,bhtd->bhsd", probs.astype(bf16), vh,
                     preferred_element_type=f32)
    ctx = ctx.transpose(0, 2, 1, 3).reshape(B, S, E)
    out = ctx + (jnp.einsum("bse,ef->bsf", ctx.astype(bf16),
                            params["wd"].astype(bf16),
                            preferred_element_type=f32) + params["bd"])
    mean = out.mean(-1, keepdims=True)
    var = ((out - mean) ** 2).mean(-1, keepdims=True)
    return (out - mean) / jnp.sqrt(var + 1e-5) * params["gamma"] + params["beta"]


if __name__ == "__main__":
    B, S, E, H = 2, 128, 128, 4   # batch, seq, emb_size, heads (head_dim = 32)
    key = jax.random.PRNGKey(0)
    kx, kp = jax.random.split(key)
    x = jax.random.normal(kx, (B, S, E), jnp.float32)
    params = init_params(kp, E)

    out = self_attention(x, params, num_heads=H)
    out = jax.block_until_ready(out)
    assert out.shape == (B, S, E)

    ref_m = reference_mixed(x, params, H)
    ref_f = reference_f32(x, params, H)
    err_mixed = float(jnp.max(jnp.abs(out - ref_m)))
    err_f32 = float(jnp.max(jnp.abs(out - ref_f)))

    # Tight check vs a reference using the same bf16-operand/f32-accumulate matmul
    # precision as the kernel; loose sanity bound vs the exact-f32 math reference
    # (bf16 MXU operands are the intended precision trade-off).
    assert err_mixed < 2.5e-2, f"mismatch vs mixed-precision reference: {err_mixed}"
    assert err_f32 < 1.5e-1, f"mismatch vs f32 reference: {err_f32}"
    print("KERNEL_OK")
</pallas_src>

<mosaic_0001>
module attributes {stable_mosaic.version = 11 : i64} {
  func.func @self_attention_kernel(%arg0: i32, %arg1: memref<1x128x128xbf16, #tpu.memory_space<vmem>>, %arg2: memref<128x384xbf16, #tpu.memory_space<vmem>>, %arg3: memref<1x384xf32, #tpu.memory_space<vmem>>, %arg4: memref<128x128xbf16, #tpu.memory_space<vmem>>, %arg5: memref<1x128xf32, #tpu.memory_space<vmem>>, %arg6: memref<1x128xf32, #tpu.memory_space<vmem>>, %arg7: memref<1x128xf32, #tpu.memory_space<vmem>>, %arg8: memref<1x128x128xf32, #tpu.memory_space<vmem>>) attributes {dimension_semantics = [#tpu.dimension_semantics<parallel>], iteration_bounds = array<i64: 2>, scalar_prefetch = 0 : i64, scratch_operands = 0 : i64, tpu.core_type = #tpu.core_type<tc>, window_params = [{transform_indices = @transform_0, window_bounds = array<i64: 1, 128, 128>}, {pipeline_mode = #tpu.pipeline_mode<synchronous>, transform_indices = @transform_1, window_bounds = array<i64: 128, 384>}, {pipeline_mode = #tpu.pipeline_mode<synchronous>, transform_indices = @transform_2, window_bounds = array<i64: 1, 384>}, {pipeline_mode = #tpu.pipeline_mode<synchronous>, transform_indices = @transform_3, window_bounds = array<i64: 128, 128>}, {pipeline_mode = #tpu.pipeline_mode<synchronous>, transform_indices = @transform_4, window_bounds = array<i64: 1, 128>}, {pipeline_mode = #tpu.pipeline_mode<synchronous>, transform_indices = @transform_5, window_bounds = array<i64: 1, 128>}, {pipeline_mode = #tpu.pipeline_mode<synchronous>, transform_indices = @transform_6, window_bounds = array<i64: 1, 128>}, {transform_indices = @transform_7, window_bounds = array<i64: 1, 128, 128>}]} {
    %c0 = arith.constant 0 : index
    %c0_0 = arith.constant 0 : index
    %c0_1 = arith.constant 0 : index
    %0 = vector.load %arg1[%c0, %c0_0, %c0_1] : memref<1x128x128xbf16, #tpu.memory_space<vmem>>, vector<1x128x128xbf16>
    %1 = vector.shape_cast %0 : vector<1x128x128xbf16> to vector<128x128xbf16>
    %c0_2 = arith.constant 0 : index
    %c0_3 = arith.constant 0 : index
    %2 = vector.load %arg2[%c0_2, %c0_3] : memref<128x384xbf16, #tpu.memory_space<vmem>>, vector<128x384xbf16>
    %cst = arith.constant dense<0.000000e+00> : vector<128x384xf32>
    %3 = tpu.matmul %1, %2, %cst {dimension_numbers = #tpu.dot_dimension_numbers<[1], [0], [0], [1], [0, 0, 1, 1], [], []>} : vector<128x128xbf16>, vector<128x384xbf16>, vector<128x384xf32> -> vector<128x384xf32>
    %c0_4 = arith.constant 0 : index
    %c0_5 = arith.constant 0 : index
    %4 = vector.load %arg3[%c0_4, %c0_5] : memref<1x384xf32, #tpu.memory_space<vmem>>, vector<1x384xf32>
    %5 = vector.broadcast %4 : vector<1x384xf32> to vector<128x384xf32>
    %6 = arith.addf %3, %5 : vector<128x384xf32>
    %7 = vector.extract_strided_slice %6 {offsets = [0, 0], sizes = [128, 128], strides = [1, 1]} : vector<128x384xf32> to vector<128x128xf32>
    %8 = vector.extract_strided_slice %6 {offsets = [0, 128], sizes = [128, 128], strides = [1, 1]} : vector<128x384xf32> to vector<128x128xf32>
    %9 = vector.extract_strided_slice %6 {offsets = [0, 256], sizes = [128, 128], strides = [1, 1]} : vector<128x384xf32> to vector<128x128xf32>
    %10 = vector.extract_strided_slice %7 {offsets = [0, 0], sizes = [128, 32], strides = [1, 1]} : vector<128x128xf32> to vector<128x32xf32>
    %11 = vector.extract_strided_slice %7 {offsets = [0, 32], sizes = [128, 32], strides = [1, 1]} : vector<128x128xf32> to vector<128x32xf32>
    %12 = vector.extract_strided_slice %7 {offsets = [0, 64], sizes = [128, 32], strides = [1, 1]} : vector<128x128xf32> to vector<128x32xf32>
    %13 = vector.extract_strided_slice %7 {offsets = [0, 96], sizes = [128, 32], strides = [1, 1]} : vector<128x128xf32> to vector<128x32xf32>
    %14 = vector.shape_cast %10 : vector<128x32xf32> to vector<1x128x32xf32>
    %15 = vector.shape_cast %11 : vector<128x32xf32> to vector<1x128x32xf32>
    %16 = vector.shape_cast %12 : vector<128x32xf32> to vector<1x128x32xf32>
    %17 = vector.shape_cast %13 : vector<128x32xf32> to vector<1x128x32xf32>
    %18 = tpu.concatenate %14, %15, %16, %17 in 0 : vector<1x128x32xf32>, vector<1x128x32xf32>, vector<1x128x32xf32>, vector<1x128x32xf32> -> vector<4x128x32xf32>
    %19 = arith.truncf %18 : vector<4x128x32xf32> to vector<4x128x32xbf16>
    %20 = vector.extract_strided_slice %8 {offsets = [0, 0], sizes = [128, 32], strides = [1, 1]} : vector<128x128xf32> to vector<128x32xf32>
    %21 = vector.extract_strided_slice %8 {offsets = [0, 32], sizes = [128, 32], strides = [1, 1]} : vector<128x128xf32> to vector<128x32xf32>
    %22 = vector.extract_strided_slice %8 {offsets = [0, 64], sizes = [128, 32], strides = [1, 1]} : vector<128x128xf32> to vector<128x32xf32>
    %23 = vector.extract_strided_slice %8 {offsets = [0, 96], sizes = [128, 32], strides = [1, 1]} : vector<128x128xf32> to vector<128x32xf32>
    %24 = vector.shape_cast %20 : vector<128x32xf32> to vector<1x128x32xf32>
    %25 = vector.shape_cast %21 : vector<128x32xf32> to vector<1x128x32xf32>
    %26 = vector.shape_cast %22 : vector<128x32xf32> to vector<1x128x32xf32>
    %27 = vector.shape_cast %23 : vector<128x32xf32> to vector<1x128x32xf32>
    %28 = tpu.concatenate %24, %25, %26, %27 in 0 : vector<1x128x32xf32>, vector<1x128x32xf32>, vector<1x128x32xf32>, vector<1x128x32xf32> -> vector<4x128x32xf32>
    %29 = arith.truncf %28 : vector<4x128x32xf32> to vector<4x128x32xbf16>
    %30 = vector.extract_strided_slice %9 {offsets = [0, 0], sizes = [128, 32], strides = [1, 1]} : vector<128x128xf32> to vector<128x32xf32>
    %31 = vector.extract_strided_slice %9 {offsets = [0, 32], sizes = [128, 32], strides = [1, 1]} : vector<128x128xf32> to vector<128x32xf32>
    %32 = vector.extract_strided_slice %9 {offsets = [0, 64], sizes = [128, 32], strides = [1, 1]} : vector<128x128xf32> to vector<128x32xf32>
    %33 = vector.extract_strided_slice %9 {offsets = [0, 96], sizes = [128, 32], strides = [1, 1]} : vector<128x128xf32> to vector<128x32xf32>
    %34 = vector.shape_cast %30 : vector<128x32xf32> to vector<1x128x32xf32>
    %35 = vector.shape_cast %31 : vector<128x32xf32> to vector<1x128x32xf32>
    %36 = vector.shape_cast %32 : vector<128x32xf32> to vector<1x128x32xf32>
    %37 = vector.shape_cast %33 : vector<128x32xf32> to vector<1x128x32xf32>
    %38 = tpu.concatenate %34, %35, %36, %37 in 0 : vector<1x128x32xf32>, vector<1x128x32xf32>, vector<1x128x32xf32>, vector<1x128x32xf32> -> vector<4x128x32xf32>
    %39 = arith.truncf %38 : vector<4x128x32xf32> to vector<4x128x32xbf16>
    "tpu.trace_start"() <{level = 10 : i32, message = "hsd,htd->hst"}> : () -> ()
    %cst_6 = arith.constant dense<0.000000e+00> : vector<4x128x128xf32>
    %40 = tpu.matmul %19, %29, %cst_6 {dimension_numbers = #tpu.dot_dimension_numbers<[2], [2], [1], [1], [0, 0, 0, 1, 1, 1], [0], [0]>} : vector<4x128x32xbf16>, vector<4x128x32xbf16>, vector<4x128x128xf32> -> vector<4x128x128xf32>
    "tpu.trace_stop"() : () -> ()
    %cst_7 = arith.constant dense<0xFF800000> : vector<4x128xf32>
    %41 = vector.multi_reduction <maximumf>, %40, %cst_7 [2] : vector<4x128x128xf32> to vector<4x128xf32>
    %42 = vector.shape_cast %41 : vector<4x128xf32> to vector<4x128x1xf32>
    %43 = vector.broadcast %42 : vector<4x128x1xf32> to vector<4x128x128xf32>
    %44 = arith.subf %40, %43 : vector<4x128x128xf32>
    %45 = math.exp %44 : vector<4x128x128xf32>
    %cst_8 = arith.constant dense<0.000000e+00> : vector<4x128xf32>
    %46 = vector.multi_reduction <add>, %45, %cst_8 [2] : vector<4x128x128xf32> to vector<4x128xf32>
    %47 = vector.shape_cast %46 : vector<4x128xf32> to vector<4x128x1xf32>
    %48 = arith.truncf %45 : vector<4x128x128xf32> to vector<4x128x128xbf16>
    "tpu.trace_start"() <{level = 10 : i32, message = "hst,htd->hsd"}> : () -> ()
    %cst_9 = arith.constant dense<0.000000e+00> : vector<4x128x32xf32>
    %49 = tpu.matmul %48, %39, %cst_9 {dimension_numbers = #tpu.dot_dimension_numbers<[2], [1], [1], [2], [0, 0, 0, 1, 1, 2], [0], [0]>} : vector<4x128x128xbf16>, vector<4x128x32xbf16>, vector<4x128x32xf32> -> vector<4x128x32xf32>
    "tpu.trace_stop"() : () -> ()
    %50 = tpu.reciprocal %47 {approx = true} : vector<4x128x1xf32> -> vector<4x128x1xf32>
    %51 = vector.broadcast %50 : vector<4x128x1xf32> to vector<4x128x32xf32>
    %52 = arith.mulf %49, %51 : vector<4x128x32xf32>
    %53 = vector.extract_strided_slice %52 {offsets = [0, 0, 0], sizes = [1, 128, 32], strides = [1, 1, 1]} : vector<4x128x32xf32> to vector<1x128x32xf32>
    %54 = vector.shape_cast %53 : vector<1x128x32xf32> to vector<128x32xf32>
    %55 = vector.extract_strided_slice %52 {offsets = [1, 0, 0], sizes = [1, 128, 32], strides = [1, 1, 1]} : vector<4x128x32xf32> to vector<1x128x32xf32>
    %56 = vector.shape_cast %55 : vector<1x128x32xf32> to vector<128x32xf32>
    %57 = vector.extract_strided_slice %52 {offsets = [2, 0, 0], sizes = [1, 128, 32], strides = [1, 1, 1]} : vector<4x128x32xf32> to vector<1x128x32xf32>
    %58 = vector.shape_cast %57 : vector<1x128x32xf32> to vector<128x32xf32>
    %59 = vector.extract_strided_slice %52 {offsets = [3, 0, 0], sizes = [1, 128, 32], strides = [1, 1, 1]} : vector<4x128x32xf32> to vector<1x128x32xf32>
    %60 = vector.shape_cast %59 : vector<1x128x32xf32> to vector<128x32xf32>
    %61 = tpu.concatenate %54, %56, %58, %60 in 1 : vector<128x32xf32>, vector<128x32xf32>, vector<128x32xf32>, vector<128x32xf32> -> vector<128x128xf32>
    %62 = arith.truncf %61 : vector<128x128xf32> to vector<128x128xbf16>
    %c0_10 = arith.constant 0 : index
    %c0_11 = arith.constant 0 : index
    %63 = vector.load %arg4[%c0_10, %c0_11] : memref<128x128xbf16, #tpu.memory_space<vmem>>, vector<128x128xbf16>
    %cst_12 = arith.constant dense<0.000000e+00> : vector<128x128xf32>
    %64 = tpu.matmul %62, %63, %cst_12 {dimension_numbers = #tpu.dot_dimension_numbers<[1], [0], [0], [1], [0, 0, 1, 1], [], []>} : vector<128x128xbf16>, vector<128x128xbf16>, vector<128x128xf32> -> vector<128x128xf32>
    %c0_13 = arith.constant 0 : index
    %c0_14 = arith.constant 0 : index
    %65 = vector.load %arg5[%c0_13, %c0_14] : memref<1x128xf32, #tpu.memory_space<vmem>>, vector<1x128xf32>
    %66 = vector.broadcast %65 : vector<1x128xf32> to vector<128x128xf32>
    %67 = arith.addf %64, %66 : vector<128x128xf32>
    %68 = arith.addf %61, %67 : vector<128x128xf32>
    %cst_15 = arith.constant dense<0.000000e+00> : vector<128xf32>
    %69 = vector.multi_reduction <add>, %68, %cst_15 [1] : vector<128x128xf32> to vector<128xf32>
    %70 = vector.shape_cast %69 : vector<128xf32> to vector<128x1xf32>
    %cst_16 = arith.constant 1.280000e+02 : f32
    %71 = vector.broadcast %cst_16 : f32 to vector<128x1xf32>
    %72 = arith.divf %70, %71 : vector<128x1xf32>
    %73 = vector.broadcast %72 : vector<128x1xf32> to vector<128x128xf32>
    %74 = arith.subf %68, %73 : vector<128x128xf32>
    %75 = arith.mulf %74, %74 : vector<128x128xf32>
    %cst_17 = arith.constant dense<0.000000e+00> : vector<128xf32>
    %76 = vector.multi_reduction <add>, %75, %cst_17 [1] : vector<128x128xf32> to vector<128xf32>
    %77 = vector.shape_cast %76 : vector<128xf32> to vector<128x1xf32>
    %cst_18 = arith.constant 1.280000e+02 : f32
    %78 = vector.broadcast %cst_18 : f32 to vector<128x1xf32>
    %79 = arith.divf %77, %78 : vector<128x1xf32>
    %cst_19 = arith.constant 9.99999974E-6 : f32
    %80 = vector.broadcast %cst_19 : f32 to vector<128x1xf32>
    %81 = arith.addf %79, %80 : vector<128x1xf32>
    %82 = math.rsqrt %81 : vector<128x1xf32>
    %83 = vector.broadcast %82 : vector<128x1xf32> to vector<128x128xf32>
    %84 = arith.mulf %74, %83 : vector<128x128xf32>
    %c0_20 = arith.constant 0 : index
    %c0_21 = arith.constant 0 : index
    %85 = vector.load %arg6[%c0_20, %c0_21] : memref<1x128xf32, #tpu.memory_space<vmem>>, vector<1x128xf32>
    %86 = vector.broadcast %85 : vector<1x128xf32> to vector<128x128xf32>
    %87 = arith.mulf %84, %86 : vector<128x128xf32>
    %c0_22 = arith.constant 0 : index
    %c0_23 = arith.constant 0 : index
    %88 = vector.load %arg7[%c0_22, %c0_23] : memref<1x128xf32, #tpu.memory_space<vmem>>, vector<1x128xf32>
    %89 = vector.broadcast %88 : vector<1x128xf32> to vector<128x128xf32>
    %90 = arith.addf %87, %89 : vector<128x128xf32>
    %c0_24 = arith.constant 0 : index
    %c0_25 = arith.constant 0 : index
    %c0_26 = arith.constant 0 : index
    %91 = vector.load %arg8[%c0_24, %c0_25, %c0_26] : memref<1x128x128xf32, #tpu.memory_space<vmem>>, vector<1x128x128xf32>
    %92 = vector.shape_cast %91 : vector<1x128x128xf32> to vector<128x128xf32>
    %93 = vector.shape_cast %90 : vector<128x128xf32> to vector<1x128x128xf32>
    tpu.vector_store %arg8[%c0_24, %c0_25, %c0_26], %93 {strides = array<i32>} : memref<1x128x128xf32, #tpu.memory_space<vmem>>, vector<1x128x128xf32>,
    return
  }
  func.func @transform_0(%arg0: i32) -> (i32, i32, i32) {
    %c0_i32 = arith.constant 0 : i32
    %c0_i32_0 = arith.constant 0 : i32
    %c0_i32_1 = arith.constant 0 : i32
    return %arg0, %c0_i32, %c0_i32_0 : i32, i32, i32
  }
  func.func @transform_1(%arg0: i32) -> (i32, i32) {
    %c0_i32 = arith.constant 0 : i32
    %c0_i32_0 = arith.constant 0 : i32
    %c0_i32_1 = arith.constant 0 : i32
    return %c0_i32, %c0_i32_0 : i32, i32
  }
  func.func @transform_2(%arg0: i32) -> (i32, i32) {
    %c0_i32 = arith.constant 0 : i32
    %c0_i32_0 = arith.constant 0 : i32
    %c0_i32_1 = arith.constant 0 : i32
    return %c0_i32, %c0_i32_0 : i32, i32
  }
  func.func @transform_3(%arg0: i32) -> (i32, i32) {
    %c0_i32 = arith.constant 0 : i32
    %c0_i32_0 = arith.constant 0 : i32
    %c0_i32_1 = arith.constant 0 : i32
    return %c0_i32, %c0_i32_0 : i32, i32
  }
  func.func @transform_4(%arg0: i32) -> (i32, i32) {
    %c0_i32 = arith.constant 0 : i32
    %c0_i32_0 = arith.constant 0 : i32
    %c0_i32_1 = arith.constant 0 : i32
    return %c0_i32, %c0_i32_0 : i32, i32
  }
  func.func @transform_5(%arg0: i32) -> (i32, i32) {
    %c0_i32 = arith.constant 0 : i32
    %c0_i32_0 = arith.constant 0 : i32
    %c0_i32_1 = arith.constant 0 : i32
    return %c0_i32, %c0_i32_0 : i32, i32
  }
  func.func @transform_6(%arg0: i32) -> (i32, i32) {
    %c0_i32 = arith.constant 0 : i32
    %c0_i32_0 = arith.constant 0 : i32
    %c0_i32_1 = arith.constant 0 : i32
    return %c0_i32, %c0_i32_0 : i32, i32
  }
  func.func @transform_7(%arg0: i32) -> (i32, i32, i32) {
    %c0_i32 = arith.constant 0 : i32
    %c0_i32_0 = arith.constant 0 : i32
    %c0_i32_1 = arith.constant 0 : i32
    return %arg0, %c0_i32, %c0_i32_0 : i32, i32, i32
  }
}

</mosaic_0001>

<llo_original>
// kernel: tpu_custom_call.1
$region0: #{tpu_custom_call.1}
  #allocation0 [shape = 'u32[]', space=smem, size = 0x4, offset = 0x4, fixed_abs, tag = 'smem constant byte address 0x4 - core index']
  #allocation1 [shape = 'u32[144,128]{1,0:T(1,128)}', space=vmem, size = 0x12000, scoped, tag = 'internal scratch']
  %s0 = inlined_call_operand.hbm [shape: bf16[2,128,128], index: 0, kind: input, shape index: {}]
  %s1 = inlined_call_operand.hbm [shape: bf16[128,384], index: 1, kind: input, shape index: {}]
  %s2 = inlined_call_operand.vmem [shape: f32[1,384], index: 2, kind: input, shape index: {}]
  %s3 = inlined_call_operand.hbm [shape: bf16[128,128], index: 3, kind: input, shape index: {}]
  %s4 = inlined_call_operand.vmem [shape: f32[1,128], index: 4, kind: input, shape index: {}]
  %s5 = inlined_call_operand.vmem [shape: f32[1,128], index: 5, kind: input, shape index: {}]
  %s6 = inlined_call_operand.vmem [shape: f32[1,128], index: 6, kind: input, shape index: {}]
  %s7 = inlined_call_operand.hbm [shape: f32[2,128,128], index: 7, kind: output, shape index: {}]
  %s8 = sld [smem:[#allocation0]]
  $region73: #{tpu_custom_call.1} parent=0
    _
  %s10 = ssub.s32 1, %s8
  %s11 = scalar_select 0, %s10, %s8
  $region1: #{tpu_custom_call.1} parent=0
    #allocation2 [shape = 'u8[65536]{0}', space=vmem, size = 0x10000, scoped, tag = 'input window, operand 0']
    #allocation3 [shape = 's32[2]{0}', space=sflag, size = 0x8, scoped, tag = 'scoped memory for tpu_custom_call.1']
    #allocation4 [shape = 's32[2]{0}', space=sflag, size = 0x8, scoped, tag = 'scoped memory for tpu_custom_call.1']
    #allocation5 [shape = 'u8[98304]{0}', space=vmem, size = 0x18000, scoped, tag = 'input window, operand 1, single buffered']
    #allocation6 [shape = 's32[1]{0}', space=sflag, size = 0x4, scoped, tag = 'scoped memory for tpu_custom_call.1']
    #allocation7 [shape = 'u8[32768]{0}', space=vmem, size = 0x8000, scoped, tag = 'input window, operand 3, single buffered']
    #allocation8 [shape = 'u8[131072]{0}', space=vmem, size = 0x20000, scoped, tag = 'output window, operand 0']
    %12 = vsyncpa [#allocation3], 0
    %s13 = scalar_lea.sflag [#allocation3], 1
    %14 = vsyncpa %s13, 0
    %15 = vsyncpa [#allocation6], 0
    %16 = vsyncpa [#allocation4], 0
    %s17 = scalar_lea.sflag [#allocation4], 1
    %18 = vsyncpa %s17, 0
    loop: start=0, step=1, limit=4
    $region2: #{tpu_custom_call.1} parent=1 // loop_pre_header
      _
    $region3: #{tpu_custom_call.1} parent=1 // loop_header
      %s20 = sphi 0, %s24
      %p21 = scmp.ge.s32.totalorder %s20, 4
      %s30 = sphi 0, %s32
      %s33 = sphi 0, %s30
      %s34 = sphi 0, %s33
      %s50 = sphi 0, %s34
      %s54 = sphi 0, %s54
      %s56 = sphi 0, %s54
      %s57 = sphi 0, %s56
      %s71 = sphi 0, %s57
      %s75 = sphi 0, %s75
      %s77 = sphi 0, %s75
      %s78 = sphi 0, %s77
      %s92 = sphi 0, %s78
      %s96 = sphi 0, %s96
      %s98 = sphi 0, %s96
      %s99 = sphi 0, %s98
      %s113 = sphi 0, %s99
      %s117 = sphi 0, %s117
      %s119 = sphi 0, %s117
      %s120 = sphi 0, %s119
      %s134 = sphi 0, %s120
      %s138 = sphi 0, %s138
      %s140 = sphi 0, %s138
      %s141 = sphi 0, %s140
      %s155 = sphi 0, %s141
      %s159 = sphi 0, %s159
      %s161 = sphi 0, %s159
      %s162 = sphi 0, %s161
      %s176 = sphi 0, %s162
      %s182 = sphi 0, %s184
      %s185 = sphi 0, %s182
      %s186 = sphi 0, %s185
      %s202 = sphi 0, %s186
    $region4: #{tpu_custom_call.1} parent=1 // loop_header_branch
      %23 = sbr.rel (%p21) target = $region8
    $region5: #{tpu_custom_call.1} parent=1 // loop_body
      %s25 = ssub.s32 %s20, 1
      %s26 = ssub.s32 %s20, 2
      %s27 = sadd.s32 %s20, 1
      %s28 = ssub.s32 %s20, %s27
      %p29 = scmp.eq.s32.totalorder %s28, 0
      %s31 = sadd.s32 %s30, 1
      %s32 = scalar_select %p29, %s30, %s31
      %p35 = pneg %p29
      %p36 = scmp.eq.s32.totalorder %s20, 1
      %p37 = por %p35, %p36
      %p38 = scmp.ne.s32.totalorder %s30, %s33
      %p39 = scmp.eq.s32.totalorder %s20, 0
      %p40 = por %p38, %p39
      %p41 = scmp.ne.s32.totalorder %s30, %s33
      %p42 = scmp.eq.s32.totalorder %s25, 1
      %p43 = por %p41, %p42
      %p44 = scmp.ne.s32.totalorder %s33, %s34
      %p45 = scmp.eq.s32.totalorder %s25, 0
      %p46 = por %p44, %p45
      %p47 = scmp.ne.s32.totalorder %s33, %s34
      %p48 = scmp.eq.s32.totalorder %s26, 1
      %p49 = por %p47, %p48
      %p51 = scmp.ne.s32.totalorder %s34, %s50
      %p52 = scmp.eq.s32.totalorder %s26, 0
      %p53 = por %p51, %p52
      %s55 = sadd.s32 %s54, 1
      %p58 = scmp.eq.s32.totalorder %s20, 1
      %p59 = scmp.ne.s32.totalorder %s54, %s56
      %p60 = scmp.eq.s32.totalorder %s20, 0
      %p61 = por %p59, %p60
      %p62 = scmp.ne.s32.totalorder %s54, %s56
      %p63 = scmp.eq.s32.totalorder %s25, 1
      %p64 = por %p62, %p63
      %p65 = scmp.ne.s32.totalorder %s56, %s57
      %p66 = scmp.eq.s32.totalorder %s25, 0
      %p67 = por %p65, %p66
      %p68 = scmp.ne.s32.totalorder %s56, %s57
      %p69 = scmp.eq.s32.totalorder %s26, 1
      %p70 = por %p68, %p69
      %p72 = scmp.ne.s32.totalorder %s57, %s71
      %p73 = scmp.eq.s32.totalorder %s26, 0
      %p74 = por %p72, %p73
      %s76 = sadd.s32 %s75, 1
      %p79 = scmp.eq.s32.totalorder %s20, 1
      %p80 = scmp.ne.s32.totalorder %s75, %s77
      %p81 = scmp.eq.s32.totalorder %s20, 0
      %p82 = por %p80, %p81
      %p83 = scmp.ne.s32.totalorder %s75, %s77
      %p84 = scmp.eq.s32.totalorder %s25, 1
      %p85 = por %p83, %p84
      %p86 = scmp.ne.s32.totalorder %s77, %s78
      %p87 = scmp.eq.s32.totalorder %s25, 0
      %p88 = por %p86, %p87
      %p89 = scmp.ne.s32.totalorder %s77, %s78
      %p90 = scmp.eq.s32.totalorder %s26, 1
      %p91 = por %p89, %p90
      %p93 = scmp.ne.s32.totalorder %s78, %s92
      %p94 = scmp.eq.s32.totalorder %s26, 0
      %p95 = por %p93, %p94
      %s97 = sadd.s32 %s96, 1
      %p100 = scmp.eq.s32.totalorder %s20, 1
      %p101 = scmp.ne.s32.totalorder %s96, %s98
      %p102 = scmp.eq.s32.totalorder %s20, 0
      %p103 = por %p101, %p102
      %p104 = scmp.ne.s32.totalorder %s96, %s98
      %p105 = scmp.eq.s32.totalorder %s25, 1
      %p106 = por %p104, %p105
      %p107 = scmp.ne.s32.totalorder %s98, %s99
      %p108 = scmp.eq.s32.totalorder %s25, 0
      %p109 = por %p107, %p108
      %p110 = scmp.ne.s32.totalorder %s98, %s99
      %p111 = scmp.eq.s32.totalorder %s26, 1
      %p112 = por %p110, %p111
      %p114 = scmp.ne.s32.totalorder %s99, %s113
      %p115 = scmp.eq.s32.totalorder %s26, 0
      %p116 = por %p114, %p115
      %s118 = sadd.s32 %s117, 1
      %p121 = scmp.eq.s32.totalorder %s20, 1
      %p122 = scmp.ne.s32.totalorder %s117, %s119
      %p123 = scmp.eq.s32.totalorder %s20, 0
      %p124 = por %p122, %p123
      %p125 = scmp.ne.s32.totalorder %s117, %s119
      %p126 = scmp.eq.s32.totalorder %s25, 1
      %p127 = por %p125, %p126
      %p128 = scmp.ne.s32.totalorder %s119, %s120
      %p129 = scmp.eq.s32.totalorder %s25, 0
      %p130 = por %p128, %p129
      %p131 = scmp.ne.s32.totalorder %s119, %s120
      %p132 = scmp.eq.s32.totalorder %s26, 1
      %p133 = por %p131, %p132
      %p135 = scmp.ne.s32.totalorder %s120, %s134
      %p136 = scmp.eq.s32.totalorder %s26, 0
      %p137 = por %p135, %p136
      %s139 = sadd.s32 %s138, 1
      %p142 = scmp.eq.s32.totalorder %s20, 1
      %p143 = scmp.ne.s32.totalorder %s138, %s140
      %p144 = scmp.eq.s32.totalorder %s20, 0
      %p145 = por %p143, %p144
      %p146 = scmp.ne.s32.totalorder %s138, %s140
      %p147 = scmp.eq.s32.totalorder %s25, 1
      %p148 = por %p146, %p147
      %p149 = scmp.ne.s32.totalorder %s140, %s141
      %p150 = scmp.eq.s32.totalorder %s25, 0
      %p151 = por %p149, %p150
      %p152 = scmp.ne.s32.totalorder %s140, %s141
      %p153 = scmp.eq.s32.totalorder %s26, 1
      %p154 = por %p152, %p153
      %p156 = scmp.ne.s32.totalorder %s141, %s155
      %p157 = scmp.eq.s32.totalorder %s26, 0
      %p158 = por %p156, %p157
      %s160 = sadd.s32 %s159, 1
      %p163 = scmp.eq.s32.totalorder %s20, 1
      %p164 = scmp.ne.s32.totalorder %s159, %s161
      %p165 = scmp.eq.s32.totalorder %s20, 0
      %p166 = por %p164, %p165
      %p167 = scmp.ne.s32.totalorder %s159, %s161
      %p168 = scmp.eq.s32.totalorder %s25, 1
      %p169 = por %p167, %p168
      %p170 = scmp.ne.s32.totalorder %s161, %s162
      %p171 = scmp.eq.s32.totalorder %s25, 0
      %p172 = por %p170, %p171
      %p173 = scmp.ne.s32.totalorder %s161, %s162
      %p174 = scmp.eq.s32.totalorder %s26, 1
      %p175 = por %p173, %p174
      %p177 = scmp.ne.s32.totalorder %s162, %s176
      %p178 = scmp.eq.s32.totalorder %s26, 0
      %p179 = por %p177, %p178
      %s180 = ssub.s32 %s20, %s27
      %p181 = scmp.eq.s32.totalorder %s180, 0
      %s183 = sadd.s32 %s182, 1
      %s184 = scalar_select %p181, %s182, %s183
      %p187 = pneg %p181
      %p188 = scmp.eq.s32.totalorder %s20, 1
      %p189 = por %p187, %p188
      %p190 = scmp.ne.s32.totalorder %s182, %s185
      %p191 = scmp.eq.s32.totalorder %s20, 0
      %p192 = por %p190, %p191
      %p193 = scmp.ne.s32.totalorder %s182, %s185
      %p194 = scmp.eq.s32.totalorder %s25, 1
      %p195 = por %p193, %p194
      %p196 = scmp.ne.s32.totalorder %s185, %s186
      %p197 = scmp.eq.s32.totalorder %s25, 0
      %p198 = por %p196, %p197
      %p199 = scmp.ne.s32.totalorder %s185, %s186
      %p200 = scmp.eq.s32.totalorder %s26, 1
      %p201 = por %p199, %p200
      %p203 = scmp.ne.s32.totalorder %s186, %s202
      %p204 = scmp.eq.s32.totalorder %s26, 0
      %p205 = por %p203, %p204
      %p206 = scmp.le.s32.totalorder 1, %s20
      %p207 = scmp.lt.s32.totalorder %s20, 3
      %p208 = pnand %p206, %p207
      %p209 = pneg %p208
      // Predicated region
      $region9: #{tpu_custom_call.1} parent=5 // pred_check
        _
      $region10: #{tpu_custom_call.1} parent=5 // pred_check_branch
        %211 = sbr.rel (%p208) target = $region12
      $region11: #{tpu_custom_call.1} parent=5 // pred_region
        %s212 = ssub.s32 %s20, 1
        // Predicated region
        $region13: #{tpu_custom_call.1} parent=11 // pred_check
          %p213 = pneg %p67
        $region14: #{tpu_custom_call.1} parent=11 // pred_check_branch
          %215 = sbr.rel (%p213) target = $region16
        $region15: #{tpu_custom_call.1} parent=11 // pred_region
          %s217 = ssub.s32 3072, 3072
          %218 = vsyncadd [#allocation6], %s217
          %s219 = sshll.u32 [#allocation5], 4
          %s220 = int_to_ptr.vmem [resolvable:$true] %s219
          %225 = dma.hbm_to_vmem [thread:$0]  %s1, 3072, %s220, [#allocation6], 192, 192, 12
        $region16: #{tpu_custom_call.1} parent=11 // pred_fallthru
          _
        // Predicated region
        $region17: #{tpu_custom_call.1} parent=11 // pred_check
          %p226 = pneg %p88
        $region18: #{tpu_custom_call.1} parent=11 // pred_check_branch
          %228 = sbr.rel (%p226) target = $region20
        $region19: #{tpu_custom_call.1} parent=11 // pred_region
          _
        $region20: #{tpu_custom_call.1} parent=11 // pred_fallthru
          _
        // Predicated region
        $region21: #{tpu_custom_call.1} parent=11 // pred_check
          %p229 = pneg %p109
        $region22: #{tpu_custom_call.1} parent=11 // pred_check_branch
          %231 = sbr.rel (%p229) target = $region24
        $region23: #{tpu_custom_call.1} parent=11 // pred_region
          %s233 = ssub.s32 1024, 1024
          %234 = vsyncadd [#allocation6], %s233
          %s235 = sshll.u32 [#allocation7], 4
          %s236 = int_to_ptr.vmem [resolvable:$true] %s235
          %241 = dma.hbm_to_vmem [thread:$0]  %s3, 1024, %s236, [#allocation6], 64, 64, 4
        $region24: #{tpu_custom_call.1} parent=11 // pred_fallthru
          _
        // Predicated region
        $region25: #{tpu_custom_call.1} parent=11 // pred_check
          %p242 = pneg %p130
        $region26: #{tpu_custom_call.1} parent=11 // pred_check_branch
          %244 = sbr.rel (%p242) target = $region28
        $region27: #{tpu_custom_call.1} parent=11 // pred_region
          _
        $region28: #{tpu_custom_call.1} parent=11 // pred_fallthru
          _
        // Predicated region
        $region29: #{tpu_custom_call.1} parent=11 // pred_check
          %p245 = pneg %p151
        $region30: #{tpu_custom_call.1} parent=11 // pred_check_branch
          %247 = sbr.rel (%p245) target = $region32
        $region31: #{tpu_custom_call.1} parent=11 // pred_region
          _
        $region32: #{tpu_custom_call.1} parent=11 // pred_fallthru
          _
        // Predicated region
        $region33: #{tpu_custom_call.1} parent=11 // pred_check
          %p248 = pneg %p172
        $region34: #{tpu_custom_call.1} parent=11 // pred_check_branch
          %250 = sbr.rel (%p248) target = $region36
        $region35: #{tpu_custom_call.1} parent=11 // pred_region
          _
        $region36: #{tpu_custom_call.1} parent=11 // pred_fallthru
          _
      $region12: #{tpu_custom_call.1} parent=5 // pred_fallthru
        _
      %p251 = scmp.lt.s32.totalorder %s20, 2
      // Predicated region
      $region37: #{tpu_custom_call.1} parent=5 // pred_check
        %p252 = pneg %p251
      $region38: #{tpu_custom_call.1} parent=5 // pred_check_branch
        %254 = sbr.rel (%p252) target = $region40
      $region39: #{tpu_custom_call.1} parent=5 // pred_region
        // Predicated region
        $region41: #{tpu_custom_call.1} parent=39 // pred_check
          %p255 = pneg %p40
        $region42: #{tpu_custom_call.1} parent=39 // pred_check_branch
          %257 = sbr.rel (%p255) target = $region44
        $region43: #{tpu_custom_call.1} parent=39 // pred_region
          %s258 = sand.u32 %s30, 1
          %s259 = scalar_lea.sflag [#allocation3], %s258
          %s260 = sand.u32 %s30, 1
          %s261 = smul.addr %s260, 64
          %s262 = scalar_lea.vmem [#allocation2], %s261
          %s264 = ssub.s32 1024, 1024
          %265 = vsyncadd %s259, %s264
          %s266 = smul.addr %s20, 16
          %s267 = smul.addr %s266, 64
          %s268 = scalar_lea.hbm %s0, %s267
          %s269 = sshll.u32 %s262, 4
          %s270 = int_to_ptr.vmem [resolvable:$true] %s269
          %275 = dma.hbm_to_vmem [thread:$0]  %s268, 1024, %s270, %s259, 64, 64, 4
        $region44: #{tpu_custom_call.1} parent=39 // pred_fallthru
          _
      $region40: #{tpu_custom_call.1} parent=5 // pred_fallthru
        _
      %p276 = scmp.le.s32.totalorder 1, %s20
      %p277 = scmp.lt.s32.totalorder %s20, 3
      %p278 = pnand %p276, %p277
      %p279 = pneg %p278
      // Predicated region
      $region45: #{tpu_custom_call.1} parent=5 // pred_check
        _
      $region46: #{tpu_custom_call.1} parent=5 // pred_check_branch
        %281 = sbr.rel (%p278) target = $region48
      $region47: #{tpu_custom_call.1} parent=5 // pred_region
        %s282 = ssub.s32 %s20, 1
        %s283 = sand.u32 %s33, 1
        %s284 = scalar_lea.sflag [#allocation3], %s283
        %s285 = sand.u32 %s33, 1
        %s286 = smul.addr %s285, 64
        %s287 = scalar_lea.vmem [#allocation2], %s286
        // Predicated region
        $region49: #{tpu_custom_call.1} parent=47 // pred_check
          %p288 = pneg %p46
        $region50: #{tpu_custom_call.1} parent=47 // pred_check_branch
          %290 = sbr.rel (%p288) target = $region52
        $region51: #{tpu_custom_call.1} parent=47 // pred_region
          %291 = dma.done %s284, 1024
        $region52: #{tpu_custom_call.1} parent=47 // pred_fallthru
          _
        // Predicated region
        $region53: #{tpu_custom_call.1} parent=47 // pred_check
          %p292 = pneg %p67
        $region54: #{tpu_custom_call.1} parent=47 // pred_check_branch
          %294 = sbr.rel (%p292) target = $region56
        $region55: #{tpu_custom_call.1} parent=47 // pred_region
          %295 = dma.done [#allocation6], 3072
        $region56: #{tpu_custom_call.1} parent=47 // pred_fallthru
          _
        // Predicated region
        $region57: #{tpu_custom_call.1} parent=47 // pred_check
          %p296 = pneg %p109
        $region58: #{tpu_custom_call.1} parent=47 // pred_check_branch
          %298 = sbr.rel (%p296) target = $region60
        $region59: #{tpu_custom_call.1} parent=47 // pred_region
          %299 = dma.done [#allocation6], 1024
        $region60: #{tpu_custom_call.1} parent=47 // pred_fallthru
          _
        %s300 = sand.u32 %s33, 1
        %s301 = scalar_lea.sflag [#allocation3], %s300
        %s302 = sand.u32 %s33, 1
        %s303 = smul.addr %s302, 64
        %s304 = scalar_lea.vmem [#allocation2], %s303
        %p305 = pneg %p46
        %p306 = pneg %p43
        %p307 = pneg %p67
        %p308 = pneg %p64
        %p309 = pneg %p88
        %p310 = pneg %p85
        %p311 = pneg %p109
        %p312 = pneg %p106
        %p313 = pneg %p130
        %p314 = pneg %p127
        %p315 = pneg %p151
        %p316 = pneg %p148
        %p317 = pneg %p172
        %p318 = pneg %p169
        %p319 = pneg %p198
        %p320 = pneg %p195
        %s321 = sand.u32 %s185, 1
        %s322 = scalar_lea.sflag [#allocation4], %s321
        %s323 = sand.u32 %s185, 1
        %s324 = smul.addr %s323, 128
        %s325 = scalar_lea.vmem [#allocation8], %s324
        %v327 = vld [vmem:[%s287] sm:$0xf]
        %v328 = vld [vmem:[%s287 + $0x4] sm:$0xf]
        %v329 = vld [vmem:[%s287 + $0x8] sm:$0xf]
        %v330 = vld [vmem:[%s287 + $0xc] sm:$0xf]
        %v331 = vld [vmem:[%s287 + $0x10] sm:$0xf]
        %v332 = vld [vmem:[%s287 + $0x14] sm:$0xf]
        %v333 = vld [vmem:[%s287 + $0x18] sm:$0xf]
        %v334 = vld [vmem:[%s287 + $0x1c] sm:$0xf]
        %v335 = vld [vmem:[%s287 + $0x20] sm:$0xf]
        %v336 = vld [vmem:[%s287 + $0x24] sm:$0xf]
        %v337 = vld [vmem:[%s287 + $0x28] sm:$0xf]
        %v338 = vld [vmem:[%s287 + $0x2c] sm:$0xf]
        %v339 = vld [vmem:[%s287 + $0x30] sm:$0xf]
        %v340 = vld [vmem:[%s287 + $0x34] sm:$0xf]
        %v341 = vld [vmem:[%s287 + $0x38] sm:$0xf]
        %v342 = vld [vmem:[%s287 + $0x3c] sm:$0xf]
        %v343 = vld [vmem:[#allocation5] sm:$0xff]
        %v344 = vld [vmem:[#allocation5 + $0x8] sm:$0xf]
        %v345 = vld [vmem:[#allocation5 + $0xc] sm:$0xff]
        %v346 = vld [vmem:[#allocation5 + $0x14] sm:$0xf]
        %v347 = vld [vmem:[#allocation5 + $0x18] sm:$0xff]
        %v348 = vld [vmem:[#allocation5 + $0x20] sm:$0xf]
        %v349 = vld [vmem:[#allocation5 + $0x24] sm:$0xff]
        %v350 = vld [vmem:[#allocation5 + $0x2c] sm:$0xf]
        %v351 = vld [vmem:[#allocation5 + $0x30] sm:$0xff]
        %v352 = vld [vmem:[#allocation5 + $0x38] sm:$0xf]
        %v353 = vld [vmem:[#allocation5 + $0x3c] sm:$0xff]
        %v354 = vld [vmem:[#allocation5 + $0x44] sm:$0xf]
        %v355 = vld [vmem:[#allocation5 + $0x48] sm:$0xff]
        %v356 = vld [vmem:[#allocation5 + $0x50] sm:$0xf]
        %v357 = vld [vmem:[#allocation5 + $0x54] sm:$0xff]
        %v358 = vld [vmem:[#allocation5 + $0x5c] sm:$0xf]
        %v359 = vld [vmem:[#allocation5 + $0x60] sm:$0xff]
        %v360 = vld [vmem:[#allocation5 + $0x68] sm:$0xf]
        %v361 = vld [vmem:[#allocation5 + $0x6c] sm:$0xff]
        %v362 = vld [vmem:[#allocation5 + $0x74] sm:$0xf]
        %v363 = vld [vmem:[#allocation5 + $0x78] sm:$0xff]
        %v364 = vld [vmem:[#allocation5 + $0x80] sm:$0xf]
        %v365 = vld [vmem:[#allocation5 + $0x84] sm:$0xff]
        %v366 = vld [vmem:[#allocation5 + $0x8c] sm:$0xf]
        %v367 = vld [vmem:[#allocation5 + $0x90] sm:$0xff]
        %v368 = vld [vmem:[#allocation5 + $0x98] sm:$0xf]
        %v369 = vld [vmem:[#allocation5 + $0x9c] sm:$0xff]
        %v370 = vld [vmem:[#allocation5 + $0xa4] sm:$0xf]
        %v371 = vld [vmem:[#allocation5 + $0xa8] sm:$0xff]
        %v372 = vld [vmem:[#allocation5 + $0xb0] sm:$0xf]
        %v373 = vld [vmem:[#allocation5 + $0xb4] sm:$0xff]
        %v374 = vld [vmem:[#allocation5 + $0xbc] sm:$0xf]
        %v375 = vld [vmem:[%s2] sm:$0x7]
        %v377 = vlaneseq
        %v378 = vshrl.u32 %v377, 7
        %v379 = vsub.s32 0, %v378
        %v380 = vrot.slane %v375, %v379
        %v381 = vlaneseq
        %v382 = vshrl.u32 %v381, 7
        %v383 = vsub.s32 1, %v382
        %v384 = vrot.slane %v375, %v383
        %v385 = vlaneseq
        %v386 = vshrl.u32 %v385, 7
        %v387 = vsub.s32 2, %v386
        %v388 = vrot.slane %v375, %v387
        %v408 = vunpack.c.l.b16 %v327
        %v409 = vunpack.c.l.b16 %v328
        %v410 = vunpack.c.l.b16 %v329
        %v411 = vunpack.c.l.b16 %v330
        %v412 = vunpack.c.l.b16 %v331
        %v413 = vunpack.c.l.b16 %v332
        %v414 = vunpack.c.l.b16 %v333
        %v415 = vunpack.c.l.b16 %v334
        %v416 = vunpack.c.l.b16 %v335
        %v417 = vunpack.c.l.b16 %v336
        %v418 = vunpack.c.l.b16 %v337
        %v419 = vunpack.c.l.b16 %v338
        %v420 = vunpack.c.l.b16 %v339
        %v421 = vunpack.c.l.b16 %v340
        %v422 = vunpack.c.l.b16 %v341
        %v423 = vunpack.c.l.b16 %v342
        %v424 = vpack.c.b16 %v409, %v408
        %v425 = vpack.c.b16 %v411, %v410
        %v426 = vpack.c.b16 %v413, %v412
        %v427 = vpack.c.b16 %v415, %v414
        %v428 = vpack.c.b16 %v417, %v416
        %v429 = vpack.c.b16 %v419, %v418
        %v430 = vpack.c.b16 %v421, %v420
        %v431 = vpack.c.b16 %v423, %v422
        %v472 = vunpack.c.l.b16 %v343
        %v473 = vunpack.c.h.b16 %v343
        %v474 = vunpack.c.l.b16 %v344
        %v475 = vunpack.c.l.b16 %v345
        %v476 = vunpack.c.h.b16 %v345
        %v477 = vunpack.c.l.b16 %v346
        %v478 = vunpack.c.l.b16 %v347
        %v479 = vunpack.c.h.b16 %v347
        %v480 = vunpack.c.l.b16 %v348
        %v481 = vunpack.c.l.b16 %v349
        %v482 = vunpack.c.h.b16 %v349
        %v483 = vunpack.c.l.b16 %v350
        %v484 = vunpack.c.l.b16 %v351
        %v485 = vunpack.c.h.b16 %v351
        %v486 = vunpack.c.l.b16 %v352
        %v487 = vunpack.c.l.b16 %v353
        %v488 = vunpack.c.h.b16 %v353
        %v489 = vunpack.c.l.b16 %v354
        %v490 = vunpack.c.l.b16 %v355
        %v491 = vunpack.c.h.b16 %v355
        %v492 = vunpack.c.l.b16 %v356
        %v493 = vunpack.c.l.b16 %v357
        %v494 = vunpack.c.h.b16 %v357
        %v495 = vunpack.c.l.b16 %v358
        %v496 = vunpack.c.l.b16 %v359
        %v497 = vunpack.c.h.b16 %v359
        %v498 = vunpack.c.l.b16 %v360
        %v499 = vunpack.c.l.b16 %v361
        %v500 = vunpack.c.h.b16 %v361
        %v501 = vunpack.c.l.b16 %v362
        %v502 = vunpack.c.l.b16 %v363
        %v503 = vunpack.c.h.b16 %v363
        %v504 = vunpack.c.l.b16 %v364
        %v505 = vunpack.c.l.b16 %v365
        %v506 = vunpack.c.h.b16 %v365
        %v507 = vunpack.c.l.b16 %v366
        %v508 = vunpack.c.l.b16 %v367
        %v509 = vunpack.c.h.b16 %v367
        %v510 = vunpack.c.l.b16 %v368
        %v511 = vunpack.c.l.b16 %v369
        %v512 = vunpack.c.h.b16 %v369
        %v513 = vunpack.c.l.b16 %v370
        %v514 = vunpack.c.l.b16 %v371
        %v515 = vunpack.c.h.b16 %v371
        %v516 = vunpack.c.l.b16 %v372
        %v517 = vunpack.c.l.b16 %v373
        %v518 = vunpack.c.h.b16 %v373
        %v519 = vunpack.c.l.b16 %v374
        %v520 = vpack.c.b16 %v475, %v472
        %v521 = vpack.c.b16 %v476, %v473
        %v522 = vpack.c.b16 %v477, %v474
        %v523 = vpack.c.b16 %v481, %v478
        %v524 = vpack.c.b16 %v482, %v479
        %v525 = vpack.c.b16 %v483, %v480
        %v526 = vpack.c.b16 %v487, %v484
        %v527 = vpack.c.b16 %v488, %v485
        %v528 = vpack.c.b16 %v489, %v486
        %v529 = vpack.c.b16 %v493, %v490
        %v530 = vpack.c.b16 %v494, %v491
        %v531 = vpack.c.b16 %v495, %v492
        %v532 = vpack.c.b16 %v499, %v496
        %v533 = vpack.c.b16 %v500, %v497
        %v534 = vpack.c.b16 %v501, %v498
        %v535 = vpack.c.b16 %v505, %v502
        %v536 = vpack.c.b16 %v506, %v503
        %v537 = vpack.c.b16 %v507, %v504
        %v538 = vpack.c.b16 %v511, %v508
        %v539 = vpack.c.b16 %v512, %v509
        %v540 = vpack.c.b16 %v513, %v510
        %v541 = vpack.c.b16 %v517, %v514
        %v542 = vpack.c.b16 %v518, %v515
        %v543 = vpack.c.b16 %v519, %v516
        %568 = vmatprep.subr.bf16.mxu0 %v521
        %569 = vmatpush1.bf16.msra.mxu0 %v520
        %570 = vmatprep.subr.bf16.mxu0 %v524
        %571 = vmatpush1.bf16.msra.mxu0 %v523
        %572 = vmatprep.subr.bf16.mxu0 %v527
        %573 = vmatpush1.bf16.msra.mxu0 %v526
        %574 = vmatprep.subr.bf16.mxu0 %v530
        %575 = vmatpush1.bf16.msra.mxu0 %v529
        %576 = vmatprep.subr.bf16.mxu0 %v533
        %577 = vmatpush1.bf16.msra.mxu0 %v532
        %578 = vmatprep.subr.bf16.mxu0 %v536
        %579 = vmatpush1.bf16.msra.mxu0 %v535
        %580 = vmatprep.subr.bf16.mxu0 %v539
        %581 = vmatpush1.bf16.msra.mxu0 %v538
        %582 = vmatprep.subr.bf16.mxu0 %v542
        %583 = vmatpush1.bf16.msra.mxu0 %v541
        %584 = vmatprep.subr.bf16.mxu0 0
        %585 = vmatpush1.bf16.msra.mxu0 0
        %586 = vmatprep.subr.bf16.mxu0 0
        %587 = vmatpush1.bf16.msra.mxu0 0
        %588 = vmatprep.subr.bf16.mxu0 0
        %589 = vmatpush1.bf16.msra.mxu0 0
        %590 = vmatprep.subr.bf16.mxu0 0
        %591 = vmatpush1.bf16.msra.mxu0 0
        %592 = vmatprep.subr.bf16.mxu0 0
        %593 = vmatpush1.bf16.msra.mxu0 0
        %594 = vmatprep.subr.bf16.mxu0 0
        %595 = vmatpush1.bf16.msra.mxu0 0
        %596 = vmatprep.subr.bf16.mxu0 0
        %597 = vmatpush1.bf16.msra.mxu0 0
        %598 = vmatprep.subr.bf16.mxu0 0
        %599 = vmatpush1.bf16.msra.mxu0 0
        %600 = vmatprep.mubr.bf16.mxu0 0
        %601 = vmatmul.mubr.bf16.gmra.mrb[0].mxu0 %v424
        %v602 = vpop.f32.mrb[0].mxu0
        %v603 = vadd.f32 %v380, %v602
        %v604 = vpop.f32.mrb[0].mxu0
        %v605 = vadd.f32 %v384, %v604
        %v606 = vpop.f32.mrb[0].mxu0
        %v607 = vadd.f32 %v380, %v606
        %v608 = vpop.f32.mrb[0].mxu0
        %v609 = vadd.f32 %v384, %v608
        %610 = vmatprep.mubr.bf16.mxu0 0
        %611 = vmatmul.mubr.bf16.gmra.mrb[0].mxu0 %v425
        %v612 = vpop.f32.mrb[0].mxu0
        %v613 = vadd.f32 %v380, %v612
        %v614 = vpop.f32.mrb[0].mxu0
        %v615 = vadd.f32 %v384, %v614
        %v616 = vpop.f32.mrb[0].mxu0
        %v617 = vadd.f32 %v380, %v616
        %v618 = vpop.f32.mrb[0].mxu0
        %v619 = vadd.f32 %v384, %v618
        %620 = vmatprep.mubr.bf16.mxu0 0
        %621 = vmatmul.mubr.bf16.gmra.mrb[0].mxu0 %v426
        %v622 = vpop.f32.mrb[0].mxu0
        %v623 = vadd.f32 %v380, %v622
        %v624 = vpop.f32.mrb[0].mxu0
        %v625 = vadd.f32 %v384, %v624
        %v626 = vpop.f32.mrb[0].mxu0
        %v627 = vadd.f32 %v380, %v626
        %v628 = vpop.f32.mrb[0].mxu0
        %v629 = vadd.f32 %v384, %v628
        %630 = vmatprep.mubr.bf16.mxu0 0
        %631 = vmatmul.mubr.bf16.gmra.mrb[0].mxu0 %v427
        %v632 = vpop.f32.mrb[0].mxu0
        %v633 = vadd.f32 %v380, %v632
        %v634 = vpop.f32.mrb[0].mxu0
        %v635 = vadd.f32 %v384, %v634
        %v636 = vpop.f32.mrb[0].mxu0
        %v637 = vadd.f32 %v380, %v636
        %v638 = vpop.f32.mrb[0].mxu0
        %v639 = vadd.f32 %v384, %v638
        %640 = vmatprep.mubr.bf16.mxu0 0
        %641 = vmatmul.mubr.bf16.gmra.mrb[0].mxu0 %v428
        %v642 = vpop.f32.mrb[0].mxu0
        %v643 = vadd.f32 %v380, %v642
        %v644 = vpop.f32.mrb[0].mxu0
        %v645 = vadd.f32 %v384, %v644
        %v646 = vpop.f32.mrb[0].mxu0
        %v647 = vadd.f32 %v380, %v646
        %v648 = vpop.f32.mrb[0].mxu0
        %v649 = vadd.f32 %v384, %v648
        %650 = vmatprep.mubr.bf16.mxu0 0
        %651 = vmatmul.mubr.bf16.gmra.mrb[0].mxu0 %v429
        %v652 = vpop.f32.mrb[0].mxu0
        %v653 = vadd.f32 %v380, %v652
        %v654 = vpop.f32.mrb[0].mxu0
        %v655 = vadd.f32 %v384, %v654
        %v656 = vpop.f32.mrb[0].mxu0
        %v657 = vadd.f32 %v380, %v656
        %v658 = vpop.f32.mrb[0].mxu0
        %v659 = vadd.f32 %v384, %v658
        %660 = vmatprep.mubr.bf16.mxu0 0
        %661 = vmatmul.mubr.bf16.gmra.mrb[0].mxu0 %v430
        %v662 = vpop.f32.mrb[0].mxu0
        %v663 = vadd.f32 %v380, %v662
        %v664 = vpop.f32.mrb[0].mxu0
        %v665 = vadd.f32 %v384, %v664
        %v666 = vpop.f32.mrb[0].mxu0
        %v667 = vadd.f32 %v380, %v666
        %v668 = vpop.f32.mrb[0].mxu0
        %v669 = vadd.f32 %v384, %v668
        %670 = vmatprep.mubr.bf16.mxu0 0
        %671 = vmatmul.mubr.bf16.gmra.mrb[0].mxu0 %v431
        %v672 = vpop.f32.mrb[0].mxu0
        %v673 = vadd.f32 %v380, %v672
        %v674 = vpop.f32.mrb[0].mxu0
        %v675 = vadd.f32 %v384, %v674
        %v676 = vpop.f32.mrb[0].mxu0
        %v677 = vadd.f32 %v380, %v676
        %v678 = vpop.f32.mrb[0].mxu0
        %v679 = vadd.f32 %v384, %v678
        %680 = vdwg.mxu0
        %681 = vmatprep.subr.bf16.mxu0 0
        %682 = vmatpush1.bf16.msra.mxu0 %v522
        %683 = vmatprep.subr.bf16.mxu0 0
        %684 = vmatpush1.bf16.msra.mxu0 %v525
        %685 = vmatprep.subr.bf16.mxu0 0
        %686 = vmatpush1.bf16.msra.mxu0 %v528
        %687 = vmatprep.subr.bf16.mxu0 0
        %688 = vmatpush1.bf16.msra.mxu0 %v531
        %689 = vmatprep.subr.bf16.mxu0 0
        %690 = vmatpush1.bf16.msra.mxu0 %v534
        %691 = vmatprep.subr.bf16.mxu0 0
        %692 = vmatpush1.bf16.msra.mxu0 %v537
        %693 = vmatprep.subr.bf16.mxu0 0
        %694 = vmatpush1.bf16.msra.mxu0 %v540
        %695 = vmatprep.subr.bf16.mxu0 0
        %696 = vmatpush1.bf16.msra.mxu0 %v543
        %697 = vmatprep.subr.bf16.mxu0 0
        %698 = vmatpush1.bf16.msra.mxu0 0
        %699 = vmatprep.subr.bf16.mxu0 0
        %700 = vmatpush1.bf16.msra.mxu0 0
        %701 = vmatprep.subr.bf16.mxu0 0
        %702 = vmatpush1.bf16.msra.mxu0 0
        %703 = vmatprep.subr.bf16.mxu0 0
        %704 = vmatpush1.bf16.msra.mxu0 0
        %705 = vmatprep.subr.bf16.mxu0 0
        %706 = vmatpush1.bf16.msra.mxu0 0
        %707 = vmatprep.subr.bf16.mxu0 0
        %708 = vmatpush1.bf16.msra.mxu0 0
        %709 = vmatprep.subr.bf16.mxu0 0
        %710 = vmatpush1.bf16.msra.mxu0 0
        %711 = vmatprep.subr.bf16.mxu0 0
        %712 = vmatpush1.bf16.msra.mxu0 0
        %713 = vmatprep.mubr.bf16.mxu0 0
        %714 = vmatmul.mubr.bf16.gmra.mrb[0].mxu0 %v424
        %v715 = vpop.f32.mrb[0].mxu0
        %v716 = vadd.f32 %v388, %v715
        %v717 = vpop.f32.mrb[0].mxu0
        %v718 = vpop.f32.mrb[0].mxu0
        %v719 = vadd.f32 %v388, %v718
        %v720 = vpop.f32.mrb[0].mxu0
        %721 = vmatprep.mubr.bf16.mxu0 0
        %722 = vmatmul.mubr.bf16.gmra.mrb[0].mxu0 %v425
        %v723 = vpop.f32.mrb[0].mxu0
        %v724 = vadd.f32 %v388, %v723
        %v725 = vpop.f32.mrb[0].mxu0
        %v726 = vpop.f32.mrb[0].mxu0
        %v727 = vadd.f32 %v388, %v726
        %v728 = vpop.f32.mrb[0].mxu0
        %729 = vmatprep.mubr.bf16.mxu0 0
        %730 = vmatmul.mubr.bf16.gmra.mrb[0].mxu0 %v426
        %v731 = vpop.f32.mrb[0].mxu0
        %v732 = vadd.f32 %v388, %v731
        %v733 = vpop.f32.mrb[0].mxu0
        %v734 = vpop.f32.mrb[0].mxu0
        %v735 = vadd.f32 %v388, %v734
        %v736 = vpop.f32.mrb[0].mxu0
        %737 = vmatprep.mubr.bf16.mxu0 0
        %738 = vmatmul.mubr.bf16.gmra.mrb[0].mxu0 %v427
        %v739 = vpop.f32.mrb[0].mxu0
        %v740 = vadd.f32 %v388, %v739
        %v741 = vpop.f32.mrb[0].mxu0
        %v742 = vpop.f32.mrb[0].mxu0
        %v743 = vadd.f32 %v388, %v742
        %v744 = vpop.f32.mrb[0].mxu0
        %745 = vmatprep.mubr.bf16.mxu0 0
        %746 = vmatmul.mubr.bf16.gmra.mrb[0].mxu0 %v428
        %v747 = vpop.f32.mrb[0].mxu0
        %v748 = vadd.f32 %v388, %v747
        %v749 = vpop.f32.mrb[0].mxu0
        %v750 = vpop.f32.mrb[0].mxu0
        %v751 = vadd.f32 %v388, %v750
        %v752 = vpop.f32.mrb[0].mxu0
        %753 = vmatprep.mubr.bf16.mxu0 0
        %754 = vmatmul.mubr.bf16.gmra.mrb[0].mxu0 %v429
        %v755 = vpop.f32.mrb[0].mxu0
        %v756 = vadd.f32 %v388, %v755
        %v757 = vpop.f32.mrb[0].mxu0
        %v758 = vpop.f32.mrb[0].mxu0
        %v759 = vadd.f32 %v388, %v758
        %v760 = vpop.f32.mrb[0].mxu0
        %761 = vmatprep.mubr.bf16.mxu0 0
        %762 = vmatmul.mubr.bf16.gmra.mrb[0].mxu0 %v430
        %v763 = vpop.f32.mrb[0].mxu0
        %v764 = vadd.f32 %v388, %v763
        %v765 = vpop.f32.mrb[0].mxu0
        %v766 = vpop.f32.mrb[0].mxu0
        %v767 = vadd.f32 %v388, %v766
        %v768 = vpop.f32.mrb[0].mxu0
        %769 = vmatprep.mubr.bf16.mxu0 0
        %770 = vmatmul.mubr.bf16.gmra.mrb[0].mxu0 %v431
        %v771 = vpop.f32.mrb[0].mxu0
        %v772 = vadd.f32 %v388, %v771
        %v773 = vpop.f32.mrb[0].mxu0
        %v774 = vpop.f32.mrb[0].mxu0
        %v775 = vadd.f32 %v388, %v774
        %v776 = vpop.f32.mrb[0].mxu0
        %777 = vdwg.mxu0
        %794 = vrot.lane.b32.xlu0 %v603, 96
        %v795 = vpop.permute.xlu0 %794
        %796 = vrot.lane.b32.xlu0 %v607, 96
        %v797 = vpop.permute.xlu0 %796
        %798 = vrot.lane.b32.xlu0 %v613, 96
        %v799 = vpop.permute.xlu0 %798
        %800 = vrot.lane.b32.xlu0 %v617, 96
        %v801 = vpop.permute.xlu0 %800
        %802 = vrot.lane.b32.xlu0 %v623, 96
        %v803 = vpop.permute.xlu0 %802
        %804 = vrot.lane.b32.xlu0 %v627, 96
        %v805 = vpop.permute.xlu0 %804
        %806 = vrot.lane.b32.xlu0 %v633, 96
        %v807 = vpop.permute.xlu0 %806
        %808 = vrot.lane.b32.xlu0 %v637, 96
        %v809 = vpop.permute.xlu0 %808
        %810 = vrot.lane.b32.xlu0 %v643, 96
        %v811 = vpop.permute.xlu0 %810
        %812 = vrot.lane.b32.xlu0 %v647, 96
        %v813 = vpop.permute.xlu0 %812
        %814 = vrot.lane.b32.xlu0 %v653, 96
        %v815 = vpop.permute.xlu0 %814
        %816 = vrot.lane.b32.xlu0 %v657, 96
        %v817 = vpop.permute.xlu0 %816
        %818 = vrot.lane.b32.xlu0 %v663, 96
        %v819 = vpop.permute.xlu0 %818
        %820 = vrot.lane.b32.xlu0 %v667, 96
        %v821 = vpop.permute.xlu0 %820
        %822 = vrot.lane.b32.xlu0 %v673, 96
        %v823 = vpop.permute.xlu0 %822
        %824 = vrot.lane.b32.xlu0 %v677, 96
        %v825 = vpop.permute.xlu0 %824
        %842 = vrot.lane.b32.xlu0 %v603, 64
        %v843 = vpop.permute.xlu0 %842
        %844 = vrot.lane.b32.xlu0 %v607, 64
        %v845 = vpop.permute.xlu0 %844
        %846 = vrot.lane.b32.xlu0 %v613, 64
        %v847 = vpop.permute.xlu0 %846
        %848 = vrot.lane.b32.xlu0 %v617, 64
        %v849 = vpop.permute.xlu0 %848
        %850 = vrot.lane.b32.xlu0 %v623, 64
        %v851 = vpop.permute.xlu0 %850
        %852 = vrot.lane.b32.xlu0 %v627, 64
        %v853 = vpop.permute.xlu0 %852
        %854 = vrot.lane.b32.xlu0 %v633, 64
        %v855 = vpop.permute.xlu0 %854
        %856 = vrot.lane.b32.xlu0 %v637, 64
        %v857 = vpop.permute.xlu0 %856
        %858 = vrot.lane.b32.xlu0 %v643, 64
        %v859 = vpop.permute.xlu0 %858
        %860 = vrot.lane.b32.xlu0 %v647, 64
        %v861 = vpop.permute.xlu0 %860
        %862 = vrot.lane.b32.xlu0 %v653, 64
        %v863 = vpop.permute.xlu0 %862
        %864 = vrot.lane.b32.xlu0 %v657, 64
        %v865 = vpop.permute.xlu0 %864
        %866 = vrot.lane.b32.xlu0 %v663, 64
        %v867 = vpop.permute.xlu0 %866
        %868 = vrot.lane.b32.xlu0 %v667, 64
        %v869 = vpop.permute.xlu0 %868
        %870 = vrot.lane.b32.xlu0 %v673, 64
        %v871 = vpop.permute.xlu0 %870
        %872 = vrot.lane.b32.xlu0 %v677, 64
        %v873 = vpop.permute.xlu0 %872
        %890 = vrot.lane.b32.xlu0 %v603, 32
        %v891 = vpop.permute.xlu0 %890
        %892 = vrot.lane.b32.xlu0 %v607, 32
        %v893 = vpop.permute.xlu0 %892
        %894 = vrot.lane.b32.xlu0 %v613, 32
        %v895 = vpop.permute.xlu0 %894
        %896 = vrot.lane.b32.xlu0 %v617, 32
        %v897 = vpop.permute.xlu0 %896
        %898 = vrot.lane.b32.xlu0 %v623, 32
        %v899 = vpop.permute.xlu0 %898
        %900 = vrot.lane.b32.xlu0 %v627, 32
        %v901 = vpop.permute.xlu0 %900
        %902 = vrot.lane.b32.xlu0 %v633, 32
        %v903 = vpop.permute.xlu0 %902
        %904 = vrot.lane.b32.xlu0 %v637, 32
        %v905 = vpop.permute.xlu0 %904
        %906 = vrot.lane.b32.xlu0 %v643, 32
        %v907 = vpop.permute.xlu0 %906
        %908 = vrot.lane.b32.xlu0 %v647, 32
        %v909 = vpop.permute.xlu0 %908
        %910 = vrot.lane.b32.xlu0 %v653, 32
        %v911 = vpop.permute.xlu0 %910
        %912 = vrot.lane.b32.xlu0 %v657, 32
        %v913 = vpop.permute.xlu0 %912
        %914 = vrot.lane.b32.xlu0 %v663, 32
        %v915 = vpop.permute.xlu0 %914
        %916 = vrot.lane.b32.xlu0 %v667, 32
        %v917 = vpop.permute.xlu0 %916
        %918 = vrot.lane.b32.xlu0 %v673, 32
        %v919 = vpop.permute.xlu0 %918
        %920 = vrot.lane.b32.xlu0 %v677, 32
        %v921 = vpop.permute.xlu0 %920
        %v938 = vpack.c.bf16 %v607, %v603
        %v939 = vpack.c.bf16 %v617, %v613
        %v940 = vpack.c.bf16 %v627, %v623
        %v941 = vpack.c.bf16 %v637, %v633
        %v942 = vpack.c.bf16 %v647, %v643
        %v943 = vpack.c.bf16 %v657, %v653
        %v944 = vpack.c.bf16 %v667, %v663
        %v945 = vpack.c.bf16 %v677, %v673
        %v946 = vpack.c.bf16 %v797, %v795
        %v947 = vpack.c.bf16 %v801, %v799
        %v948 = vpack.c.bf16 %v805, %v803
        %v949 = vpack.c.bf16 %v809, %v807
        %v950 = vpack.c.bf16 %v813, %v811
        %v951 = vpack.c.bf16 %v817, %v815
        %v952 = vpack.c.bf16 %v821, %v819
        %v953 = vpack.c.bf16 %v825, %v823
        %v954 = vpack.c.bf16 %v845, %v843
        %v955 = vpack.c.bf16 %v849, %v847
        %v956 = vpack.c.bf16 %v853, %v851
        %v957 = vpack.c.bf16 %v857, %v855
        %v958 = vpack.c.bf16 %v861, %v859
        %v959 = vpack.c.bf16 %v865, %v863
        %v960 = vpack.c.bf16 %v869, %v867
        %v961 = vpack.c.bf16 %v873, %v871
        %v962 = vpack.c.bf16 %v893, %v891
        %v963 = vpack.c.bf16 %v897, %v895
        %v964 = vpack.c.bf16 %v901, %v899
        %v965 = vpack.c.bf16 %v905, %v903
        %v966 = vpack.c.bf16 %v909, %v907
        %v967 = vpack.c.bf16 %v913, %v911
        %v968 = vpack.c.bf16 %v917, %v915
        %v969 = vpack.c.bf16 %v921, %v919
        %986 = vrot.lane.b32.xlu0 %v605, 96
        %v987 = vpop.permute.xlu0 %986
        %988 = vrot.lane.b32.xlu0 %v609, 96
        %v989 = vpop.permute.xlu0 %988
        %990 = vrot.lane.b32.xlu0 %v615, 96
        %v991 = vpop.permute.xlu0 %990
        %992 = vrot.lane.b32.xlu0 %v619, 96
        %v993 = vpop.permute.xlu0 %992
        %994 = vrot.lane.b32.xlu0 %v625, 96
        %v995 = vpop.permute.xlu0 %994
        %996 = vrot.lane.b32.xlu0 %v629, 96
        %v997 = vpop.permute.xlu0 %996
        %998 = vrot.lane.b32.xlu0 %v635, 96
        %v999 = vpop.permute.xlu0 %998
        %1000 = vrot.lane.b32.xlu0 %v639, 96
        %v1001 = vpop.permute.xlu0 %1000
        %1002 = vrot.lane.b32.xlu0 %v645, 96
        %v1003 = vpop.permute.xlu0 %1002
        %1004 = vrot.lane.b32.xlu0 %v649, 96
        %v1005 = vpop.permute.xlu0 %1004
        %1006 = vrot.lane.b32.xlu0 %v655, 96
        %v1007 = vpop.permute.xlu0 %1006
        %1008 = vrot.lane.b32.xlu0 %v659, 96
        %v1009 = vpop.permute.xlu0 %1008
        %1010 = vrot.lane.b32.xlu0 %v665, 96
        %v1011 = vpop.permute.xlu0 %1010
        %1012 = vrot.lane.b32.xlu0 %v669, 96
        %v1013 = vpop.permute.xlu0 %1012
        %1014 = vrot.lane.b32.xlu0 %v675, 96
        %v1015 = vpop.permute.xlu0 %1014
        %1016 = vrot.lane.b32.xlu0 %v679, 96
        %v1017 = vpop.permute.xlu0 %1016
        %1034 = vrot.lane.b32.xlu0 %v605, 64
        %v1035 = vpop.permute.xlu0 %1034
        %1036 = vrot.lane.b32.xlu0 %v609, 64
        %v1037 = vpop.permute.xlu0 %1036
        %1038 = vrot.lane.b32.xlu0 %v615, 64
        %v1039 = vpop.permute.xlu0 %1038
        %1040 = vrot.lane.b32.xlu0 %v619, 64
        %v1041 = vpop.permute.xlu0 %1040
        %1042 = vrot.lane.b32.xlu0 %v625, 64
        %v1043 = vpop.permute.xlu0 %1042
        %1044 = vrot.lane.b32.xlu0 %v629, 64
        %v1045 = vpop.permute.xlu0 %1044
        %1046 = vrot.lane.b32.xlu0 %v635, 64
        %v1047 = vpop.permute.xlu0 %1046
        %1048 = vrot.lane.b32.xlu0 %v639, 64
        %v1049 = vpop.permute.xlu0 %1048
        %1050 = vrot.lane.b32.xlu0 %v645, 64
        %v1051 = vpop.permute.xlu0 %1050
        %1052 = vrot.lane.b32.xlu0 %v649, 64
        %v1053 = vpop.permute.xlu0 %1052
        %1054 = vrot.lane.b32.xlu0 %v655, 64
        %v1055 = vpop.permute.xlu0 %1054
        %1056 = vrot.lane.b32.xlu0 %v659, 64
        %v1057 = vpop.permute.xlu0 %1056
        %1058 = vrot.lane.b32.xlu0 %v665, 64
        %v1059 = vpop.permute.xlu0 %1058
        %1060 = vrot.lane.b32.xlu0 %v669, 64
        %v1061 = vpop.permute.xlu0 %1060
        %1062 = vrot.lane.b32.xlu0 %v675, 64
        %v1063 = vpop.permute.xlu0 %1062
        %1064 = vrot.lane.b32.xlu0 %v679, 64
        %v1065 = vpop.permute.xlu0 %1064
        %1082 = vrot.lane.b32.xlu0 %v605, 32
        %v1083 = vpop.permute.xlu0 %1082
        %1084 = vrot.lane.b32.xlu0 %v609, 32
        %v1085 = vpop.permute.xlu0 %1084
        %1086 = vrot.lane.b32.xlu0 %v615, 32
        %v1087 = vpop.permute.xlu0 %1086
        %1088 = vrot.lane.b32.xlu0 %v619, 32
        %v1089 = vpop.permute.xlu0 %1088
        %1090 = vrot.lane.b32.xlu0 %v625, 32
        %v1091 = vpop.permute.xlu0 %1090
        %1092 = vrot.lane.b32.xlu0 %v629, 32
        %v1093 = vpop.permute.xlu0 %1092
        %1094 = vrot.lane.b32.xlu0 %v635, 32
        %v1095 = vpop.permute.xlu0 %1094
        %1096 = vrot.lane.b32.xlu0 %v639, 32
        %v1097 = vpop.permute.xlu0 %1096
        %1098 = vrot.lane.b32.xlu0 %v645, 32
        %v1099 = vpop.permute.xlu0 %1098
        %1100 = vrot.lane.b32.xlu0 %v649, 32
        %v1101 = vpop.permute.xlu0 %1100
        %1102 = vrot.lane.b32.xlu0 %v655, 32
        %v1103 = vpop.permute.xlu0 %1102
        %1104 = vrot.lane.b32.xlu0 %v659, 32
        %v1105 = vpop.permute.xlu0 %1104
        %1106 = vrot.lane.b32.xlu0 %v665, 32
        %v1107 = vpop.permute.xlu0 %1106
        %1108 = vrot.lane.b32.xlu0 %v669, 32
        %v1109 = vpop.permute.xlu0 %1108
        %1110 = vrot.lane.b32.xlu0 %v675, 32
        %v1111 = vpop.permute.xlu0 %1110
        %1112 = vrot.lane.b32.xlu0 %v679, 32
        %v1113 = vpop.permute.xlu0 %1112
        %v1130 = vpack.c.bf16 %v609, %v605
        %v1131 = vpack.c.bf16 %v619, %v615
        %v1132 = vpack.c.bf16 %v629, %v625
        %v1133 = vpack.c.bf16 %v639, %v635
        %v1134 = vpack.c.bf16 %v649, %v645
        %v1135 = vpack.c.bf16 %v659, %v655
        %v1136 = vpack.c.bf16 %v669, %v665
        %v1137 = vpack.c.bf16 %v679, %v675
        %v1138 = vpack.c.bf16 %v989, %v987
        %v1139 = vpack.c.bf16 %v993, %v991
        %v1140 = vpack.c.bf16 %v997, %v995
        %v1141 = vpack.c.bf16 %v1001, %v999
        %v1142 = vpack.c.bf16 %v1005, %v1003
        %v1143 = vpack.c.bf16 %v1009, %v1007
        %v1144 = vpack.c.bf16 %v1013, %v1011
        %v1145 = vpack.c.bf16 %v1017, %v1015
        %v1146 = vpack.c.bf16 %v1037, %v1035
        %v1147 = vpack.c.bf16 %v1041, %v1039
        %v1148 = vpack.c.bf16 %v1045, %v1043
        %v1149 = vpack.c.bf16 %v1049, %v1047
        %v1150 = vpack.c.bf16 %v1053, %v1051
        %v1151 = vpack.c.bf16 %v1057, %v1055
        %v1152 = vpack.c.bf16 %v1061, %v1059
        %v1153 = vpack.c.bf16 %v1065, %v1063
        %v1154 = vpack.c.bf16 %v1085, %v1083
        %v1155 = vpack.c.bf16 %v1089, %v1087
        %v1156 = vpack.c.bf16 %v1093, %v1091
        %v1157 = vpack.c.bf16 %v1097, %v1095
        %v1158 = vpack.c.bf16 %v1101, %v1099
        %v1159 = vpack.c.bf16 %v1105, %v1103
        %v1160 = vpack.c.bf16 %v1109, %v1107
        %v1161 = vpack.c.bf16 %v1113, %v1111
        %1178 = vrot.lane.b32.xlu0 %v716, 96
        %v1179 = vpop.permute.xlu0 %1178
        %1180 = vrot.lane.b32.xlu0 %v719, 96
        %v1181 = vpop.permute.xlu0 %1180
        %1182 = vrot.lane.b32.xlu0 %v724, 96
        %v1183 = vpop.permute.xlu0 %1182
        %1184 = vrot.lane.b32.xlu0 %v727, 96
        %v1185 = vpop.permute.xlu0 %1184
        %1186 = vrot.lane.b32.xlu0 %v732, 96
        %v1187 = vpop.permute.xlu0 %1186
        %1188 = vrot.lane.b32.xlu0 %v735, 96
        %v1189 = vpop.permute.xlu0 %1188
        %1190 = vrot.lane.b32.xlu0 %v740, 96
        %v1191 = vpop.permute.xlu0 %1190
        %1192 = vrot.lane.b32.xlu0 %v743, 96
        %v1193 = vpop.permute.xlu0 %1192
        %1194 = vrot.lane.b32.xlu0 %v748, 96
        %v1195 = vpop.permute.xlu0 %1194
        %1196 = vrot.lane.b32.xlu0 %v751, 96
        %v1197 = vpop.permute.xlu0 %1196
        %1198 = vrot.lane.b32.xlu0 %v756, 96
        %v1199 = vpop.permute.xlu0 %1198
        %1200 = vrot.lane.b32.xlu0 %v759, 96
        %v1201 = vpop.permute.xlu0 %1200
        %1202 = vrot.lane.b32.xlu0 %v764, 96
        %v1203 = vpop.permute.xlu0 %1202
        %1204 = vrot.lane.b32.xlu0 %v767, 96
        %v1205 = vpop.permute.xlu0 %1204
        %1206 = vrot.lane.b32.xlu0 %v772, 96
        %v1207 = vpop.permute.xlu0 %1206
        %1208 = vrot.lane.b32.xlu0 %v775, 96
        %v1209 = vpop.permute.xlu0 %1208
        %1226 = vrot.lane.b32.xlu0 %v716, 64
        %v1227 = vpop.permute.xlu0 %1226
        %1228 = vrot.lane.b32.xlu0 %v719, 64
        %v1229 = vpop.permute.xlu0 %1228
        %1230 = vrot.lane.b32.xlu0 %v724, 64
        %v1231 = vpop.permute.xlu0 %1230
        %1232 = vrot.lane.b32.xlu0 %v727, 64
        %v1233 = vpop.permute.xlu0 %1232
        %1234 = vrot.lane.b32.xlu0 %v732, 64
        %v1235 = vpop.permute.xlu0 %1234
        %1236 = vrot.lane.b32.xlu0 %v735, 64
        %v1237 = vpop.permute.xlu0 %1236
        %1238 = vrot.lane.b32.xlu0 %v740, 64
        %v1239 = vpop.permute.xlu0 %1238
        %1240 = vrot.lane.b32.xlu0 %v743, 64
        %v1241 = vpop.permute.xlu0 %1240
        %1242 = vrot.lane.b32.xlu0 %v748, 64
        %v1243 = vpop.permute.xlu0 %1242
        %1244 = vrot.lane.b32.xlu0 %v751, 64
        %v1245 = vpop.permute.xlu0 %1244
        %1246 = vrot.lane.b32.xlu0 %v756, 64
        %v1247 = vpop.permute.xlu0 %1246
        %1248 = vrot.lane.b32.xlu0 %v759, 64
        %v1249 = vpop.permute.xlu0 %1248
        %1250 = vrot.lane.b32.xlu0 %v764, 64
        %v1251 = vpop.permute.xlu0 %1250
        %1252 = vrot.lane.b32.xlu0 %v767, 64
        %v1253 = vpop.permute.xlu0 %1252
        %1254 = vrot.lane.b32.xlu0 %v772, 64
        %v1255 = vpop.permute.xlu0 %1254
        %1256 = vrot.lane.b32.xlu0 %v775, 64
        %v1257 = vpop.permute.xlu0 %1256
        %1274 = vrot.lane.b32.xlu0 %v716, 32
        %v1275 = vpop.permute.xlu0 %1274
        %1276 = vrot.lane.b32.xlu0 %v719, 32
        %v1277 = vpop.permute.xlu0 %1276
        %1278 = vrot.lane.b32.xlu0 %v724, 32
        %v1279 = vpop.permute.xlu0 %1278
        %1280 = vrot.lane.b32.xlu0 %v727, 32
        %v1281 = vpop.permute.xlu0 %1280
        %1282 = vrot.lane.b32.xlu0 %v732, 32
        %v1283 = vpop.permute.xlu0 %1282
        %1284 = vrot.lane.b32.xlu0 %v735, 32
        %v1285 = vpop.permute.xlu0 %1284
        %1286 = vrot.lane.b32.xlu0 %v740, 32
        %v1287 = vpop.permute.xlu0 %1286
        %1288 = vrot.lane.b32.xlu0 %v743, 32
        %v1289 = vpop.permute.xlu0 %1288
        %1290 = vrot.lane.b32.xlu0 %v748, 32
        %v1291 = vpop.permute.xlu0 %1290
        %1292 = vrot.lane.b32.xlu0 %v751, 32
        %v1293 = vpop.permute.xlu0 %1292
        %1294 = vrot.lane.b32.xlu0 %v756, 32
        %v1295 = vpop.permute.xlu0 %1294
        %1296 = vrot.lane.b32.xlu0 %v759, 32
        %v1297 = vpop.permute.xlu0 %1296
        %1298 = vrot.lane.b32.xlu0 %v764, 32
        %v1299 = vpop.permute.xlu0 %1298
        %1300 = vrot.lane.b32.xlu0 %v767, 32
        %v1301 = vpop.permute.xlu0 %1300
        %1302 = vrot.lane.b32.xlu0 %v772, 32
        %v1303 = vpop.permute.xlu0 %1302
        %1304 = vrot.lane.b32.xlu0 %v775, 32
        %v1305 = vpop.permute.xlu0 %1304
        %v1322 = vpack.c.bf16 %v719, %v716
        %v1323 = vpack.c.bf16 %v727, %v724
        %v1324 = vpack.c.bf16 %v735, %v732
        %v1325 = vpack.c.bf16 %v743, %v740
        %v1326 = vpack.c.bf16 %v751, %v748
        %v1327 = vpack.c.bf16 %v759, %v756
        %v1328 = vpack.c.bf16 %v767, %v764
        %v1329 = vpack.c.bf16 %v775, %v772
        %v1330 = vpack.c.bf16 %v1181, %v1179
        %v1331 = vpack.c.bf16 %v1185, %v1183
        %v1332 = vpack.c.bf16 %v1189, %v1187
        %v1333 = vpack.c.bf16 %v1193, %v1191
        %v1334 = vpack.c.bf16 %v1197, %v1195
        %v1335 = vpack.c.bf16 %v1201, %v1199
        %v1336 = vpack.c.bf16 %v1205, %v1203
        %v1337 = vpack.c.bf16 %v1209, %v1207
        %v1338 = vpack.c.bf16 %v1229, %v1227
        %v1339 = vpack.c.bf16 %v1233, %v1231
        %v1340 = vpack.c.bf16 %v1237, %v1235
        %v1341 = vpack.c.bf16 %v1241, %v1239
        %v1342 = vpack.c.bf16 %v1245, %v1243
        %v1343 = vpack.c.bf16 %v1249, %v1247
        %v1344 = vpack.c.bf16 %v1253, %v1251
        %v1345 = vpack.c.bf16 %v1257, %v1255
        %v1346 = vpack.c.bf16 %v1277, %v1275
        %v1347 = vpack.c.bf16 %v1281, %v1279
        %v1348 = vpack.c.bf16 %v1285, %v1283
        %v1349 = vpack.c.bf16 %v1289, %v1287
        %v1350 = vpack.c.bf16 %v1293, %v1291
        %v1351 = vpack.c.bf16 %v1297, %v1295
        %v1352 = vpack.c.bf16 %v1301, %v1299
        %v1353 = vpack.c.bf16 %v1305, %v1303
        %vm1354 = vcmask 261120
        %v1356 = vsel %vm1354, %v938, 0
        %v1359 = vsel %vm1354, %v939, 0
        %v1362 = vsel %vm1354, %v940, 0
        %v1365 = vsel %vm1354, %v941, 0
        %v1368 = vsel %vm1354, %v942, 0
        %v1371 = vsel %vm1354, %v943, 0
        %v1374 = vsel %vm1354, %v944, 0
        %v1377 = vsel %vm1354, %v945, 0
        %v1380 = vsel %vm1354, %v1130, 0
        %v1383 = vsel %vm1354, %v1131, 0
        %v1386 = vsel %vm1354, %v1132, 0
        %v1389 = vsel %vm1354, %v1133, 0
        %v1392 = vsel %vm1354, %v1134, 0
        %v1395 = vsel %vm1354, %v1135, 0
        %v1398 = vsel %vm1354, %v1136, 0
        %v1401 = vsel %vm1354, %v1137, 0
        %1403 = vmatprep.subr.bf16.mxu0 0
        %1404 = vmatpush1.bf16.xpose.msra.mxu0 %v1380
        %1405 = vmatprep.subr.bf16.mxu0 0
        %1406 = vmatpush1.bf16.xpose.msra.mxu0 %v1383
        %1407 = vmatprep.subr.bf16.mxu0 0
        %1408 = vmatpush1.bf16.xpose.msra.mxu0 %v1386
        %1409 = vmatprep.subr.bf16.mxu0 0
        %1410 = vmatpush1.bf16.xpose.msra.mxu0 %v1389
        %1411 = vmatprep.subr.bf16.mxu0 0
        %1412 = vmatpush1.bf16.xpose.msra.mxu0 %v1392
        %1413 = vmatprep.subr.bf16.mxu0 0
        %1414 = vmatpush1.bf16.xpose.msra.mxu0 %v1395
        %1415 = vmatprep.subr.bf16.mxu0 0
        %1416 = vmatpush1.bf16.xpose.msra.mxu0 %v1398
        %1417 = vmatprep.subr.bf16.mxu0 0
        %1418 = vmatpush1.bf16.xpose.msra.mxu0 %v1401
        %1419 = vmatprep.subr.bf16.mxu0 0
        %1420 = vmatpush1.bf16.xpose.msra.mxu0 0
        %1421 = vmatprep.subr.bf16.mxu0 0
        %1422 = vmatpush1.bf16.xpose.msra.mxu0 0
        %1423 = vmatprep.subr.bf16.mxu0 0
        %1424 = vmatpush1.bf16.xpose.msra.mxu0 0
        %1425 = vmatprep.subr.bf16.mxu0 0
        %1426 = vmatpush1.bf16.xpose.msra.mxu0 0
        %1427 = vmatprep.subr.bf16.mxu0 0
        %1428 = vmatpush1.bf16.xpose.msra.mxu0 0
        %1429 = vmatprep.subr.bf16.mxu0 0
        %1430 = vmatpush1.bf16.xpose.msra.mxu0 0
        %1431 = vmatprep.subr.bf16.mxu0 0
        %1432 = vmatpush1.bf16.xpose.msra.mxu0 0
        %1433 = vmatprep.subr.bf16.mxu0 0
        %1434 = vmatpush1.bf16.xpose.msra.mxu0 0
        %1435 = vmatprep.mubr.bf16.mxu0 0
        %1436 = vmatmul.mubr.bf16.gmra.mrb[0].mxu0 %v1356
        %v1437 = vpop.f32.mrb[0].mxu0
        %v1438 = vadd.f32 0.0, %v1437
        %v1439 = vpop.f32.mrb[0].mxu0
        %v1440 = vpop.f32.mrb[0].mxu0
        %v1441 = vadd.f32 0.0, %v1440
        %v1442 = vpop.f32.mrb[0].mxu0
        %1443 = vmatprep.mubr.bf16.mxu0 0
        %1444 = vmatmul.mubr.bf16.gmra.mrb[0].mxu0 %v1359
        %v1445 = vpop.f32.mrb[0].mxu0
        %v1446 = vadd.f32 0.0, %v1445
        %v1447 = vpop.f32.mrb[0].mxu0
        %v1448 = vpop.f32.mrb[0].mxu0
        %v1449 = vadd.f32 0.0, %v1448
        %v1450 = vpop.f32.mrb[0].mxu0
        %1451 = vmatprep.mubr.bf16.mxu0 0
        %1452 = vmatmul.mubr.bf16.gmra.mrb[0].mxu0 %v1362
        %v1453 = vpop.f32.mrb[0].mxu0
        %v1454 = vadd.f32 0.0, %v1453
        %v1455 = vpop.f32.mrb[0].mxu0
        %v1456 = vpop.f32.mrb[0].mxu0
        %v1457 = vadd.f32 0.0, %v1456
        %v1458 = vpop.f32.mrb[0].mxu0
        %1459 = vmatprep.mubr.bf16.mxu0 0
        %1460 = vmatmul.mubr.bf16.gmra.mrb[0].mxu0 %v1365
        %v1461 = vpop.f32.mrb[0].mxu0
        %v1462 = vadd.f32 0.0, %v1461
        %v1463 = vpop.f32.mrb[0].mxu0
        %v1464 = vpop.f32.mrb[0].mxu0
        %v1465 = vadd.f32 0.0, %v1464
        %v1466 = vpop.f32.mrb[0].mxu0
        %1467 = vmatprep.mubr.bf16.mxu0 0
        %1468 = vmatmul.mubr.bf16.gmra.mrb[0].mxu0 %v1368
        %v1469 = vpop.f32.mrb[0].mxu0
        %v1470 = vadd.f32 0.0, %v1469
        %v1471 = vpop.f32.mrb[0].mxu0
        %v1472 = vpop.f32.mrb[0].mxu0
        %v1473 = vadd.f32 0.0, %v1472
        %v1474 = vpop.f32.mrb[0].mxu0
        %1475 = vmatprep.mubr.bf16.mxu0 0
        %1476 = vmatmul.mubr.bf16.gmra.mrb[0].mxu0 %v1371
        %v1477 = vpop.f32.mrb[0].mxu0
        %v1478 = vadd.f32 0.0, %v1477
        %v1479 = vpop.f32.mrb[0].mxu0
        %v1480 = vpop.f32.mrb[0].mxu0
        %v1481 = vadd.f32 0.0, %v1480
        %v1482 = vpop.f32.mrb[0].mxu0
        %1483 = vmatprep.mubr.bf16.mxu0 0
        %1484 = vmatmul.mubr.bf16.gmra.mrb[0].mxu0 %v1374
        %v1485 = vpop.f32.mrb[0].mxu0
        %v1486 = vadd.f32 0.0, %v1485
        %v1487 = vpop.f32.mrb[0].mxu0
        %v1488 = vpop.f32.mrb[0].mxu0
        %v1489 = vadd.f32 0.0, %v1488
        %v1490 = vpop.f32.mrb[0].mxu0
        %1491 = vmatprep.mubr.bf16.mxu0 0
        %1492 = vmatmul.mubr.bf16.gmra.mrb[0].mxu0 %v1377
        %v1493 = vpop.f32.mrb[0].mxu0
        %v1494 = vadd.f32 0.0, %v1493
        %v1495 = vpop.f32.mrb[0].mxu0
        %v1496 = vpop.f32.mrb[0].mxu0
        %v1497 = vadd.f32 0.0, %v1496
        %v1498 = vpop.f32.mrb[0].mxu0
        %1499 = vdwg.mxu0
        %v1501 = vsel %vm1354, %v946, 0
        %v1504 = vsel %vm1354, %v947, 0
        %v1507 = vsel %vm1354, %v948, 0
        %v1510 = vsel %vm1354, %v949, 0
        %v1513 = vsel %vm1354, %v950, 0
        %v1516 = vsel %vm1354, %v951, 0
        %v1519 = vsel %vm1354, %v952, 0
        %v1522 = vsel %vm1354, %v953, 0
        %v1525 = vsel %vm1354, %v1138, 0
        %v1528 = vsel %vm1354, %v1139, 0
        %v1531 = vsel %vm1354, %v1140, 0
        %v1534 = vsel %vm1354, %v1141, 0
        %v1537 = vsel %vm1354, %v1142, 0
        %v1540 = vsel %vm1354, %v1143, 0
        %v1543 = vsel %vm1354, %v1144, 0
        %v1546 = vsel %vm1354, %v1145, 0
        %1548 = vmatprep.subr.bf16.mxu0 0
        %1549 = vmatpush1.bf16.xpose.msra.mxu0 %v1525
        %1550 = vmatprep.subr.bf16.mxu0 0
        %1551 = vmatpush1.bf16.xpose.msra.mxu0 %v1528
        %1552 = vmatprep.subr.bf16.mxu0 0
        %1553 = vmatpush1.bf16.xpose.msra.mxu0 %v1531
        %1554 = vmatprep.subr.bf16.mxu0 0
        %1555 = vmatpush1.bf16.xpose.msra.mxu0 %v1534
        %1556 = vmatprep.subr.bf16.mxu0 0
        %1557 = vmatpush1.bf16.xpose.msra.mxu0 %v1537
        %1558 = vmatprep.subr.bf16.mxu0 0
        %1559 = vmatpush1.bf16.xpose.msra.mxu0 %v1540
        %1560 = vmatprep.subr.bf16.mxu0 0
        %1561 = vmatpush1.bf16.xpose.msra.mxu0 %v1543
        %1562 = vmatprep.subr.bf16.mxu0 0
        %1563 = vmatpush1.bf16.xpose.msra.mxu0 %v1546
        %1564 = vmatprep.subr.bf16.mxu0 0
        %1565 = vmatpush1.bf16.xpose.msra.mxu0 0
        %1566 = vmatprep.subr.bf16.mxu0 0
        %1567 = vmatpush1.bf16.xpose.msra.mxu0 0
        %1568 = vmatprep.subr.bf16.mxu0 0
        %1569 = vmatpush1.bf16.xpose.msra.mxu0 0
        %1570 = vmatprep.subr.bf16.mxu0 0
        %1571 = vmatpush1.bf16.xpose.msra.mxu0 0
        %1572 = vmatprep.subr.bf16.mxu0 0
        %1573 = vmatpush1.bf16.xpose.msra.mxu0 0
        %1574 = vmatprep.subr.bf16.mxu0 0
        %1575 = vmatpush1.bf16.xpose.msra.mxu0 0
        %1576 = vmatprep.subr.bf16.mxu0 0
        %1577 = vmatpush1.bf16.xpose.msra.mxu0 0
        %1578 = vmatprep.subr.bf16.mxu0 0
        %1579 = vmatpush1.bf16.xpose.msra.mxu0 0
        %1580 = vmatprep.mubr.bf16.mxu0 0
        %1581 = vmatmul.mubr.bf16.gmra.mrb[0].mxu0 %v1501
        %v1582 = vpop.f32.mrb[0].mxu0
        %v1583 = vadd.f32 0.0, %v1582
        %v1584 = vpop.f32.mrb[0].mxu0
        %v1585 = vpop.f32.mrb[0].mxu0
        %v1586 = vadd.f32 0.0, %v1585
        %v1587 = vpop.f32.mrb[0].mxu0
        %1588 = vmatprep.mubr.bf16.mxu0 0
        %1589 = vmatmul.mubr.bf16.gmra.mrb[0].mxu0 %v1504
        %v1590 = vpop.f32.mrb[0].mxu0
        %v1591 = vadd.f32 0.0, %v1590
        %v1592 = vpop.f32.mrb[0].mxu0
        %v1593 = vpop.f32.mrb[0].mxu0
        %v1594 = vadd.f32 0.0, %v1593
        %v1595 = vpop.f32.mrb[0].mxu0
        %1596 = vmatprep.mubr.bf16.mxu0 0
        %1597 = vmatmul.mubr.bf16.gmra.mrb[0].mxu0 %v1507
        %v1598 = vpop.f32.mrb[0].mxu0
        %v1599 = vadd.f32 0.0, %v1598
        %v1600 = vpop.f32.mrb[0].mxu0
        %v1601 = vpop.f32.mrb[0].mxu0
        %v1602 = vadd.f32 0.0, %v1601
        %v1603 = vpop.f32.mrb[0].mxu0
        %1604 = vmatprep.mubr.bf16.mxu0 0
        %1605 = vmatmul.mubr.bf16.gmra.mrb[0].mxu0 %v1510
        %v1606 = vpop.f32.mrb[0].mxu0
        %v1607 = vadd.f32 0.0, %v1606
        %v1608 = vpop.f32.mrb[0].mxu0
        %v1609 = vpop.f32.mrb[0].mxu0
        %v1610 = vadd.f32 0.0, %v1609
        %v1611 = vpop.f32.mrb[0].mxu0
        %1612 = vmatprep.mubr.bf16.mxu0 0
        %1613 = vmatmul.mubr.bf16.gmra.mrb[0].mxu0 %v1513
        %v1614 = vpop.f32.mrb[0].mxu0
        %v1615 = vadd.f32 0.0, %v1614
        %v1616 = vpop.f32.mrb[0].mxu0
        %v1617 = vpop.f32.mrb[0].mxu0
        %v1618 = vadd.f32 0.0, %v1617
        %v1619 = vpop.f32.mrb[0].mxu0
        %1620 = vmatprep.mubr.bf16.mxu0 0
        %1621 = vmatmul.mubr.bf16.gmra.mrb[0].mxu0 %v1516
        %v1622 = vpop.f32.mrb[0].mxu0
        %v1623 = vadd.f32 0.0, %v1622
        %v1624 = vpop.f32.mrb[0].mxu0
        %v1625 = vpop.f32.mrb[0].mxu0
        %v1626 = vadd.f32 0.0, %v1625
        %v1627 = vpop.f32.mrb[0].mxu0
        %1628 = vmatprep.mubr.bf16.mxu0 0
        %1629 = vmatmul.mubr.bf16.gmra.mrb[0].mxu0 %v1519
        %v1630 = vpop.f32.mrb[0].mxu0
        %v1631 = vadd.f32 0.0, %v1630
        %v1632 = vpop.f32.mrb[0].mxu0
        %v1633 = vpop.f32.mrb[0].mxu0
        %v1634 = vadd.f32 0.0, %v1633
        %v1635 = vpop.f32.mrb[0].mxu0
        %1636 = vmatprep.mubr.bf16.mxu0 0
        %1637 = vmatmul.mubr.bf16.gmra.mrb[0].mxu0 %v1522
        %v1638 = vpop.f32.mrb[0].mxu0
        %v1639 = vadd.f32 0.0, %v1638
        %v1640 = vpop.f32.mrb[0].mxu0
        %v1641 = vpop.f32.mrb[0].mxu0
        %v1642 = vadd.f32 0.0, %v1641
        %v1643 = vpop.f32.mrb[0].mxu0
        %1644 = vdwg.mxu0
        %v1646 = vsel %vm1354, %v954, 0
        %v1649 = vsel %vm1354, %v955, 0
        %v1652 = vsel %vm1354, %v956, 0
        %v1655 = vsel %vm1354, %v957, 0
        %v1658 = vsel %vm1354, %v958, 0
        %v1661 = vsel %vm1354, %v959, 0
        %v1664 = vsel %vm1354, %v960, 0
        %v1667 = vsel %vm1354, %v961, 0
        %v1670 = vsel %vm1354, %v1146, 0
        %v1673 = vsel %vm1354, %v1147, 0
        %v1676 = vsel %vm1354, %v1148, 0
        %v1679 = vsel %vm1354, %v1149, 0
        %v1682 = vsel %vm1354, %v1150, 0
        %v1685 = vsel %vm1354, %v1151, 0
        %v1688 = vsel %vm1354, %v1152, 0
        %v1691 = vsel %vm1354, %v1153, 0
        %1693 = vmatprep.subr.bf16.mxu0 0
        %1694 = vmatpush1.bf16.xpose.msra.mxu0 %v1670
        %1695 = vmatprep.subr.bf16.mxu0 0
        %1696 = vmatpush1.bf16.xpose.msra.mxu0 %v1673
        %1697 = vmatprep.subr.bf16.mxu0 0
        %1698 = vmatpush1.bf16.xpose.msra.mxu0 %v1676
        %1699 = vmatprep.subr.bf16.mxu0 0
        %1700 = vmatpush1.bf16.xpose.msra.mxu0 %v1679
        %1701 = vmatprep.subr.bf16.mxu0 0
        %1702 = vmatpush1.bf16.xpose.msra.mxu0 %v1682
        %1703 = vmatprep.subr.bf16.mxu0 0
        %1704 = vmatpush1.bf16.xpose.msra.mxu0 %v1685
        %1705 = vmatprep.subr.bf16.mxu0 0
        %1706 = vmatpush1.bf16.xpose.msra.mxu0 %v1688
        %1707 = vmatprep.subr.bf16.mxu0 0
        %1708 = vmatpush1.bf16.xpose.msra.mxu0 %v1691
        %1709 = vmatprep.subr.bf16.mxu0 0
        %1710 = vmatpush1.bf16.xpose.msra.mxu0 0
        %1711 = vmatprep.subr.bf16.mxu0 0
        %1712 = vmatpush1.bf16.xpose.msra.mxu0 0
        %1713 = vmatprep.subr.bf16.mxu0 0
        %1714 = vmatpush1.bf16.xpose.msra.mxu0 0
        %1715 = vmatprep.subr.bf16.mxu0 0
        %1716 = vmatpush1.bf16.xpose.msra.mxu0 0
        %1717 = vmatprep.subr.bf16.mxu0 0
        %1718 = vmatpush1.bf16.xpose.msra.mxu0 0
        %1719 = vmatprep.subr.bf16.mxu0 0
        %1720 = vmatpush1.bf16.xpose.msra.mxu0 0
        %1721 = vmatprep.subr.bf16.mxu0 0
        %1722 = vmatpush1.bf16.xpose.msra.mxu0 0
        %1723 = vmatprep.subr.bf16.mxu0 0
        %1724 = vmatpush1.bf16.xpose.msra.mxu0 0
        %1725 = vmatprep.mubr.bf16.mxu0 0
        %1726 = vmatmul.mubr.bf16.gmra.mrb[0].mxu0 %v1646
        %v1727 = vpop.f32.mrb[0].mxu0
        %v1728 = vadd.f32 0.0, %v1727
        %v1729 = vpop.f32.mrb[0].mxu0
        %v1730 = vpop.f32.mrb[0].mxu0
        %v1731 = vadd.f32 0.0, %v1730
        %v1732 = vpop.f32.mrb[0].mxu0
        %1733 = vmatprep.mubr.bf16.mxu0 0
        %1734 = vmatmul.mubr.bf16.gmra.mrb[0].mxu0 %v1649
        %v1735 = vpop.f32.mrb[0].mxu0
        %v1736 = vadd.f32 0.0, %v1735
        %v1737 = vpop.f32.mrb[0].mxu0
        %v1738 = vpop.f32.mrb[0].mxu0
        %v1739 = vadd.f32 0.0, %v1738
        %v1740 = vpop.f32.mrb[0].mxu0
        %1741 = vmatprep.mubr.bf16.mxu0 0
        %1742 = vmatmul.mubr.bf16.gmra.mrb[0].mxu0 %v1652
        %v1743 = vpop.f32.mrb[0].mxu0
        %v1744 = vadd.f32 0.0, %v1743
        %v1745 = vpop.f32.mrb[0].mxu0
        %v1746 = vpop.f32.mrb[0].mxu0
        %v1747 = vadd.f32 0.0, %v1746
        %v1748 = vpop.f32.mrb[0].mxu0
        %1749 = vmatprep.mubr.bf16.mxu0 0
        %1750 = vmatmul.mubr.bf16.gmra.mrb[0].mxu0 %v1655
        %v1751 = vpop.f32.mrb[0].mxu0
        %v1752 = vadd.f32 0.0, %v1751
        %v1753 = vpop.f32.mrb[0].mxu0
        %v1754 = vpop.f32.mrb[0].mxu0
        %v1755 = vadd.f32 0.0, %v1754
        %v1756 = vpop.f32.mrb[0].mxu0
        %1757 = vmatprep.mubr.bf16.mxu0 0
        %1758 = vmatmul.mubr.bf16.gmra.mrb[0].mxu0 %v1658
        %v1759 = vpop.f32.mrb[0].mxu0
        %v1760 = vadd.f32 0.0, %v1759
        %v1761 = vpop.f32.mrb[0].mxu0
        %v1762 = vpop.f32.mrb[0].mxu0
        %v1763 = vadd.f32 0.0, %v1762
        %v1764 = vpop.f32.mrb[0].mxu0
        %1765 = vmatprep.mubr.bf16.mxu0 0
        %1766 = vmatmul.mubr.bf16.gmra.mrb[0].mxu0 %v1661
        %v1767 = vpop.f32.mrb[0].mxu0
        %v1768 = vadd.f32 0.0, %v1767
        %v1769 = vpop.f32.mrb[0].mxu0
        %v1770 = vpop.f32.mrb[0].mxu0
        %v1771 = vadd.f32 0.0, %v1770
        %v1772 = vpop.f32.mrb[0].mxu0
        %1773 = vmatprep.mubr.bf16.mxu0 0
        %1774 = vmatmul.mubr.bf16.gmra.mrb[0].mxu0 %v1664
        %v1775 = vpop.f32.mrb[0].mxu0
        %v1776 = vadd.f32 0.0, %v1775
        %v1777 = vpop.f32.mrb[0].mxu0
        %v1778 = vpop.f32.mrb[0].mxu0
        %v1779 = vadd.f32 0.0, %v1778
        %v1780 = vpop.f32.mrb[0].mxu0
        %1781 = vmatprep.mubr.bf16.mxu0 0
        %1782 = vmatmul.mubr.bf16.gmra.mrb[0].mxu0 %v1667
        %v1783 = vpop.f32.mrb[0].mxu0
        %v1784 = vadd.f32 0.0, %v1783
        %v1785 = vpop.f32.mrb[0].mxu0
        %v1786 = vpop.f32.mrb[0].mxu0
        %v1787 = vadd.f32 0.0, %v1786
        %v1788 = vpop.f32.mrb[0].mxu0
        %1789 = vdwg.mxu0
        %v1791 = vsel %vm1354, %v962, 0
        %v1794 = vsel %vm1354, %v963, 0
        %v1797 = vsel %vm1354, %v964, 0
        %v1800 = vsel %vm1354, %v965, 0
        %v1803 = vsel %vm1354, %v966, 0
        %v1806 = vsel %vm1354, %v967, 0
        %v1809 = vsel %vm1354, %v968, 0
        %v1812 = vsel %vm1354, %v969, 0
        %v1815 = vsel %vm1354, %v1154, 0
        %v1818 = vsel %vm1354, %v1155, 0
        %v1821 = vsel %vm1354, %v1156, 0
        %v1824 = vsel %vm1354, %v1157, 0
        %v1827 = vsel %vm1354, %v1158, 0
        %v1830 = vsel %vm1354, %v1159, 0
        %v1833 = vsel %vm1354, %v1160, 0
        %v1836 = vsel %vm1354, %v1161, 0
        %1838 = vmatprep.subr.bf16.mxu0 0
        %1839 = vmatpush1.bf16.xpose.msra.mxu0 %v1815
        %1840 = vmatprep.subr.bf16.mxu0 0
        %1841 = vmatpush1.bf16.xpose.msra.mxu0 %v1818
        %1842 = vmatprep.subr.bf16.mxu0 0
        %1843 = vmatpush1.bf16.xpose.msra.mxu0 %v1821
        %1844 = vmatprep.subr.bf16.mxu0 0
        %1845 = vmatpush1.bf16.xpose.msra.mxu0 %v1824
        %1846 = vmatprep.subr.bf16.mxu0 0
        %1847 = vmatpush1.bf16.xpose.msra.mxu0 %v1827
        %1848 = vmatprep.subr.bf16.mxu0 0
        %1849 = vmatpush1.bf16.xpose.msra.mxu0 %v1830
        %1850 = vmatprep.subr.bf16.mxu0 0
        %1851 = vmatpush1.bf16.xpose.msra.mxu0 %v1833
        %1852 = vmatprep.subr.bf16.mxu0 0
        %1853 = vmatpush1.bf16.xpose.msra.mxu0 %v1836
        %1854 = vmatprep.subr.bf16.mxu0 0
        %1855 = vmatpush1.bf16.xpose.msra.mxu0 0
        %1856 = vmatprep.subr.bf16.mxu0 0
        %1857 = vmatpush1.bf16.xpose.msra.mxu0 0
        %1858 = vmatprep.subr.bf16.mxu0 0
        %1859 = vmatpush1.bf16.xpose.msra.mxu0 0
        %1860 = vmatprep.subr.bf16.mxu0 0
        %1861 = vmatpush1.bf16.xpose.msra.mxu0 0
        %1862 = vmatprep.subr.bf16.mxu0 0
        %1863 = vmatpush1.bf16.xpose.msra.mxu0 0
        %1864 = vmatprep.subr.bf16.mxu0 0
        %1865 = vmatpush1.bf16.xpose.msra.mxu0 0
        %1866 = vmatprep.subr.bf16.mxu0 0
        %1867 = vmatpush1.bf16.xpose.msra.mxu0 0
        %1868 = vmatprep.subr.bf16.mxu0 0
        %1869 = vmatpush1.bf16.xpose.msra.mxu0 0
        %1870 = vmatprep.mubr.bf16.mxu0 0
        %1871 = vmatmul.mubr.bf16.gmra.mrb[0].mxu0 %v1791
        %v1872 = vpop.f32.mrb[0].mxu0
        %v1873 = vadd.f32 0.0, %v1872
        %v1874 = vpop.f32.mrb[0].mxu0
        %v1875 = vpop.f32.mrb[0].mxu0
        %v1876 = vadd.f32 0.0, %v1875
        %v1877 = vpop.f32.mrb[0].mxu0
        %1878 = vmatprep.mubr.bf16.mxu0 0
        %1879 = vmatmul.mubr.bf16.gmra.mrb[0].mxu0 %v1794
        %v1880 = vpop.f32.mrb[0].mxu0
        %v1881 = vadd.f32 0.0, %v1880
        %v1882 = vpop.f32.mrb[0].mxu0
        %v1883 = vpop.f32.mrb[0].mxu0
        %v1884 = vadd.f32 0.0, %v1883
        %v1885 = vpop.f32.mrb[0].mxu0
        %1886 = vmatprep.mubr.bf16.mxu0 0
        %1887 = vmatmul.mubr.bf16.gmra.mrb[0].mxu0 %v1797
        %v1888 = vpop.f32.mrb[0].mxu0
        %v1889 = vadd.f32 0.0, %v1888
        %v1890 = vpop.f32.mrb[0].mxu0
        %v1891 = vpop.f32.mrb[0].mxu0
        %v1892 = vadd.f32 0.0, %v1891
        %v1893 = vpop.f32.mrb[0].mxu0
        %1894 = vmatprep.mubr.bf16.mxu0 0
        %1895 = vmatmul.mubr.bf16.gmra.mrb[0].mxu0 %v1800
        %v1896 = vpop.f32.mrb[0].mxu0
        %v1897 = vadd.f32 0.0, %v1896
        %v1898 = vpop.f32.mrb[0].mxu0
        %v1899 = vpop.f32.mrb[0].mxu0
        %v1900 = vadd.f32 0.0, %v1899
        %v1901 = vpop.f32.mrb[0].mxu0
        %1902 = vmatprep.mubr.bf16.mxu0 0
        %1903 = vmatmul.mubr.bf16.gmra.mrb[0].mxu0 %v1803
        %v1904 = vpop.f32.mrb[0].mxu0
        %v1905 = vadd.f32 0.0, %v1904
        %v1906 = vpop.f32.mrb[0].mxu0
        %v1907 = vpop.f32.mrb[0].mxu0
        %v1908 = vadd.f32 0.0, %v1907
        %v1909 = vpop.f32.mrb[0].mxu0
        %1910 = vmatprep.mubr.bf16.mxu0 0
        %1911 = vmatmul.mubr.bf16.gmra.mrb[0].mxu0 %v1806
        %v1912 = vpop.f32.mrb[0].mxu0
        %v1913 = vadd.f32 0.0, %v1912
        %v1914 = vpop.f32.mrb[0].mxu0
        %v1915 = vpop.f32.mrb[0].mxu0
        %v1916 = vadd.f32 0.0, %v1915
        %v1917 = vpop.f32.mrb[0].mxu0
        %1918 = vmatprep.mubr.bf16.mxu0 0
        %1919 = vmatmul.mubr.bf16.gmra.mrb[0].mxu0 %v1809
        %v1920 = vpop.f32.mrb[0].mxu0
        %v1921 = vadd.f32 0.0, %v1920
        %v1922 = vpop.f32.mrb[0].mxu0
        %v1923 = vpop.f32.mrb[0].mxu0
        %v1924 = vadd.f32 0.0, %v1923
        %v1925 = vpop.f32.mrb[0].mxu0
        %1926 = vmatprep.mubr.bf16.mxu0 0
        %1927 = vmatmul.mubr.bf16.gmra.mrb[0].mxu0 %v1812
        %v1928 = vpop.f32.mrb[0].mxu0
        %v1929 = vadd.f32 0.0, %v1928
        %v1930 = vpop.f32.mrb[0].mxu0
        %v1931 = vpop.f32.mrb[0].mxu0
        %v1932 = vadd.f32 0.0, %v1931
        %v1933 = vpop.f32.mrb[0].mxu0
        %1934 = vdwg.mxu0
        %1935 = vmax.xlane.f32.xlu0 %v1438
        %v1936 = vpop.xlane.xlu0 %1935
        %1937 = vmax.xlane.f32.xlu0 %v1441
        %v1938 = vpop.xlane.xlu0 %1937
        %1939 = vmax.xlane.f32.xlu0 %v1446
        %v1940 = vpop.xlane.xlu0 %1939
        %1941 = vmax.xlane.f32.xlu0 %v1449
        %v1942 = vpop.xlane.xlu0 %1941
        %1943 = vmax.xlane.f32.xlu0 %v1454
        %v1944 = vpop.xlane.xlu0 %1943
        %1945 = vmax.xlane.f32.xlu0 %v1457
        %v1946 = vpop.xlane.xlu0 %1945
        %1947 = vmax.xlane.f32.xlu0 %v1462
        %v1948 = vpop.xlane.xlu0 %1947
        %1949 = vmax.xlane.f32.xlu0 %v1465
        %v1950 = vpop.xlane.xlu0 %1949
        %1951 = vmax.xlane.f32.xlu0 %v1470
        %v1952 = vpop.xlane.xlu0 %1951
        %1953 = vmax.xlane.f32.xlu0 %v1473
        %v1954 = vpop.xlane.xlu0 %1953
        %1955 = vmax.xlane.f32.xlu0 %v1478
        %v1956 = vpop.xlane.xlu0 %1955
        %1957 = vmax.xlane.f32.xlu0 %v1481
        %v1958 = vpop.xlane.xlu0 %1957
        %1959 = vmax.xlane.f32.xlu0 %v1486
        %v1960 = vpop.xlane.xlu0 %1959
        %1961 = vmax.xlane.f32.xlu0 %v1489
        %v1962 = vpop.xlane.xlu0 %1961
        %1963 = vmax.xlane.f32.xlu0 %v1494
        %v1964 = vpop.xlane.xlu0 %1963
        %1965 = vmax.xlane.f32.xlu0 %v1497
        %v1966 = vpop.xlane.xlu0 %1965
        %1967 = vmax.xlane.f32.xlu0 %v1583
        %v1968 = vpop.xlane.xlu0 %1967
        %1969 = vmax.xlane.f32.xlu0 %v1586
        %v1970 = vpop.xlane.xlu0 %1969
        %1971 = vmax.xlane.f32.xlu0 %v1591
        %v1972 = vpop.xlane.xlu0 %1971
        %1973 = vmax.xlane.f32.xlu0 %v1594
        %v1974 = vpop.xlane.xlu0 %1973
        %1975 = vmax.xlane.f32.xlu0 %v1599
        %v1976 = vpop.xlane.xlu0 %1975
        %1977 = vmax.xlane.f32.xlu0 %v1602
        %v1978 = vpop.xlane.xlu0 %1977
        %1979 = vmax.xlane.f32.xlu0 %v1607
        %v1980 = vpop.xlane.xlu0 %1979
        %1981 = vmax.xlane.f32.xlu0 %v1610
        %v1982 = vpop.xlane.xlu0 %1981
        %1983 = vmax.xlane.f32.xlu0 %v1615
        %v1984 = vpop.xlane.xlu0 %1983
        %1985 = vmax.xlane.f32.xlu0 %v1618
        %v1986 = vpop.xlane.xlu0 %1985
        %1987 = vmax.xlane.f32.xlu0 %v1623
        %v1988 = vpop.xlane.xlu0 %1987
        %1989 = vmax.xlane.f32.xlu0 %v1626
        %v1990 = vpop.xlane.xlu0 %1989
        %1991 = vmax.xlane.f32.xlu0 %v1631
        %v1992 = vpop.xlane.xlu0 %1991
        %1993 = vmax.xlane.f32.xlu0 %v1634
        %v1994 = vpop.xlane.xlu0 %1993
        %1995 = vmax.xlane.f32.xlu0 %v1639
        %v1996 = vpop.xlane.xlu0 %1995
        %1997 = vmax.xlane.f32.xlu0 %v1642
        %v1998 = vpop.xlane.xlu0 %1997
        %1999 = vmax.xlane.f32.xlu0 %v1728
        %v2000 = vpop.xlane.xlu0 %1999
        %2001 = vmax.xlane.f32.xlu0 %v1731
        %v2002 = vpop.xlane.xlu0 %2001
        %2003 = vmax.xlane.f32.xlu0 %v1736
        %v2004 = vpop.xlane.xlu0 %2003
        %2005 = vmax.xlane.f32.xlu0 %v1739
        %v2006 = vpop.xlane.xlu0 %2005
        %2007 = vmax.xlane.f32.xlu0 %v1744
        %v2008 = vpop.xlane.xlu0 %2007
        %2009 = vmax.xlane.f32.xlu0 %v1747
        %v2010 = vpop.xlane.xlu0 %2009
        %2011 = vmax.xlane.f32.xlu0 %v1752
        %v2012 = vpop.xlane.xlu0 %2011
        %2013 = vmax.xlane.f32.xlu0 %v1755
        %v2014 = vpop.xlane.xlu0 %2013
        %2015 = vmax.xlane.f32.xlu0 %v1760
        %v2016 = vpop.xlane.xlu0 %2015
        %2017 = vmax.xlane.f32.xlu0 %v1763
        %v2018 = vpop.xlane.xlu0 %2017
        %2019 = vmax.xlane.f32.xlu0 %v1768
        %v2020 = vpop.xlane.xlu0 %2019
        %2021 = vmax.xlane.f32.xlu0 %v1771
        %v2022 = vpop.xlane.xlu0 %2021
        %2023 = vmax.xlane.f32.xlu0 %v1776
        %v2024 = vpop.xlane.xlu0 %2023
        %2025 = vmax.xlane.f32.xlu0 %v1779
        %v2026 = vpop.xlane.xlu0 %2025
        %2027 = vmax.xlane.f32.xlu0 %v1784
        %v2028 = vpop.xlane.xlu0 %2027
        %2029 = vmax.xlane.f32.xlu0 %v1787
        %v2030 = vpop.xlane.xlu0 %2029
        %2031 = vmax.xlane.f32.xlu0 %v1873
        %v2032 = vpop.xlane.xlu0 %2031
        %2033 = vmax.xlane.f32.xlu0 %v1876
        %v2034 = vpop.xlane.xlu0 %2033
        %2035 = vmax.xlane.f32.xlu0 %v1881
        %v2036 = vpop.xlane.xlu0 %2035
        %2037 = vmax.xlane.f32.xlu0 %v1884
        %v2038 = vpop.xlane.xlu0 %2037
        %2039 = vmax.xlane.f32.xlu0 %v1889
        %v2040 = vpop.xlane.xlu0 %2039
        %2041 = vmax.xlane.f32.xlu0 %v1892
        %v2042 = vpop.xlane.xlu0 %2041
        %2043 = vmax.xlane.f32.xlu0 %v1897
        %v2044 = vpop.xlane.xlu0 %2043
        %2045 = vmax.xlane.f32.xlu0 %v1900
        %v2046 = vpop.xlane.xlu0 %2045
        %2047 = vmax.xlane.f32.xlu0 %v1905
        %v2048 = vpop.xlane.xlu0 %2047
        %2049 = vmax.xlane.f32.xlu0 %v1908
        %v2050 = vpop.xlane.xlu0 %2049
        %2051 = vmax.xlane.f32.xlu0 %v1913
        %v2052 = vpop.xlane.xlu0 %2051
        %2053 = vmax.xlane.f32.xlu0 %v1916
        %v2054 = vpop.xlane.xlu0 %2053
        %2055 = vmax.xlane.f32.xlu0 %v1921
        %v2056 = vpop.xlane.xlu0 %2055
        %2057 = vmax.xlane.f32.xlu0 %v1924
        %v2058 = vpop.xlane.xlu0 %2057
        %2059 = vmax.xlane.f32.xlu0 %v1929
        %v2060 = vpop.xlane.xlu0 %2059
        %2061 = vmax.xlane.f32.xlu0 %v1932
        %v2062 = vpop.xlane.xlu0 %2061
        %v2063 = vsub.f32 %v1438, %v1936
        %v2064 = vsub.f32 %v1441, %v1938
        %v2065 = vsub.f32 %v1446, %v1940
        %v2066 = vsub.f32 %v1449, %v1942
        %v2067 = vsub.f32 %v1454, %v1944
        %v2068 = vsub.f32 %v1457, %v1946
        %v2069 = vsub.f32 %v1462, %v1948
        %v2070 = vsub.f32 %v1465, %v1950
        %v2071 = vsub.f32 %v1470, %v1952
        %v2072 = vsub.f32 %v1473, %v1954
        %v2073 = vsub.f32 %v1478, %v1956
        %v2074 = vsub.f32 %v1481, %v1958
        %v2075 = vsub.f32 %v1486, %v1960
        %v2076 = vsub.f32 %v1489, %v1962
        %v2077 = vsub.f32 %v1494, %v1964
        %v2078 = vsub.f32 %v1497, %v1966
        %v2079 = vsub.f32 %v1583, %v1968
        %v2080 = vsub.f32 %v1586, %v1970
        %v2081 = vsub.f32 %v1591, %v1972
        %v2082 = vsub.f32 %v1594, %v1974
        %v2083 = vsub.f32 %v1599, %v1976
        %v2084 = vsub.f32 %v1602, %v1978
        %v2085 = vsub.f32 %v1607, %v1980
        %v2086 = vsub.f32 %v1610, %v1982
        %v2087 = vsub.f32 %v1615, %v1984
        %v2088 = vsub.f32 %v1618, %v1986
        %v2089 = vsub.f32 %v1623, %v1988
        %v2090 = vsub.f32 %v1626, %v1990
        %v2091 = vsub.f32 %v1631, %v1992
        %v2092 = vsub.f32 %v1634, %v1994
        %v2093 = vsub.f32 %v1639, %v1996
        %v2094 = vsub.f32 %v1642, %v1998
        %v2095 = vsub.f32 %v1728, %v2000
        %v2096 = vsub.f32 %v1731, %v2002
        %v2097 = vsub.f32 %v1736, %v2004
        %v2098 = vsub.f32 %v1739, %v2006
        %v2099 = vsub.f32 %v1744, %v2008
        %v2100 = vsub.f32 %v1747, %v2010
        %v2101 = vsub.f32 %v1752, %v2012
        %v2102 = vsub.f32 %v1755, %v2014
        %v2103 = vsub.f32 %v1760, %v2016
        %v2104 = vsub.f32 %v1763, %v2018
        %v2105 = vsub.f32 %v1768, %v2020
        %v2106 = vsub.f32 %v1771, %v2022
        %v2107 = vsub.f32 %v1776, %v2024
        %v2108 = vsub.f32 %v1779, %v2026
        %v2109 = vsub.f32 %v1784, %v2028
        %v2110 = vsub.f32 %v1787, %v2030
        %v2111 = vsub.f32 %v1873, %v2032
        %v2112 = vsub.f32 %v1876, %v2034
        %v2113 = vsub.f32 %v1881, %v2036
        %v2114 = vsub.f32 %v1884, %v2038
        %v2115 = vsub.f32 %v1889, %v2040
        %v2116 = vsub.f32 %v1892, %v2042
        %v2117 = vsub.f32 %v1897, %v2044
        %v2118 = vsub.f32 %v1900, %v2046
        %v2119 = vsub.f32 %v1905, %v2048
        %v2120 = vsub.f32 %v1908, %v2050
        %v2121 = vsub.f32 %v1913, %v2052
        %v2122 = vsub.f32 %v1916, %v2054
        %v2123 = vsub.f32 %v1921, %v2056
        %v2124 = vsub.f32 %v1924, %v2058
        %v2125 = vsub.f32 %v1929, %v2060
        %v2126 = vsub.f32 %v1932, %v2062
        %v2127 = vmul.f32 %v2063, 1.442695
        %v2128 = vpow.pop %v2127
        %v2129 = vmul.f32 %v2064, 1.442695
        %v2130 = vpow.pop %v2129
        %v2131 = vmul.f32 %v2065, 1.442695
        %v2132 = vpow.pop %v2131
        %v2133 = vmul.f32 %v2066, 1.442695
        %v2134 = vpow.pop %v2133
        %v2135 = vmul.f32 %v2067, 1.442695
        %v2136 = vpow.pop %v2135
        %v2137 = vmul.f32 %v2068, 1.442695
        %v2138 = vpow.pop %v2137
        %v2139 = vmul.f32 %v2069, 1.442695
        %v2140 = vpow.pop %v2139
        %v2141 = vmul.f32 %v2070, 1.442695
        %v2142 = vpow.pop %v2141
        %v2143 = vmul.f32 %v2071, 1.442695
        %v2144 = vpow.pop %v2143
        %v2145 = vmul.f32 %v2072, 1.442695
        %v2146 = vpow.pop %v2145
        %v2147 = vmul.f32 %v2073, 1.442695
        %v2148 = vpow.pop %v2147
        %v2149 = vmul.f32 %v2074, 1.442695
        %v2150 = vpow.pop %v2149
        %v2151 = vmul.f32 %v2075, 1.442695
        %v2152 = vpow.pop %v2151
        %v2153 = vmul.f32 %v2076, 1.442695
        %v2154 = vpow.pop %v2153
        %v2155 = vmul.f32 %v2077, 1.442695
        %v2156 = vpow.pop %v2155
        %v2157 = vmul.f32 %v2078, 1.442695
        %v2158 = vpow.pop %v2157
        %v2159 = vmul.f32 %v2079, 1.442695
        %v2160 = vpow.pop %v2159
        %v2161 = vmul.f32 %v2080, 1.442695
        %v2162 = vpow.pop %v2161
        %v2163 = vmul.f32 %v2081, 1.442695
        %v2164 = vpow.pop %v2163
        %v2165 = vmul.f32 %v2082, 1.442695
        %v2166 = vpow.pop %v2165
        %v2167 = vmul.f32 %v2083, 1.442695
        %v2168 = vpow.pop %v2167
        %v2169 = vmul.f32 %v2084, 1.442695
        %v2170 = vpow.pop %v2169
        %v2171 = vmul.f32 %v2085, 1.442695
        %v2172 = vpow.pop %v2171
        %v2173 = vmul.f32 %v2086, 1.442695
        %v2174 = vpow.pop %v2173
        %v2175 = vmul.f32 %v2087, 1.442695
        %v2176 = vpow.pop %v2175
        %v2177 = vmul.f32 %v2088, 1.442695
        %v2178 = vpow.pop %v2177
        %v2179 = vmul.f32 %v2089, 1.442695
        %v2180 = vpow.pop %v2179
        %v2181 = vmul.f32 %v2090, 1.442695
        %v2182 = vpow.pop %v2181
        %v2183 = vmul.f32 %v2091, 1.442695
        %v2184 = vpow.pop %v2183
        %v2185 = vmul.f32 %v2092, 1.442695
        %v2186 = vpow.pop %v2185
        %v2187 = vmul.f32 %v2093, 1.442695
        %v2188 = vpow.pop %v2187
        %v2189 = vmul.f32 %v2094, 1.442695
        %v2190 = vpow.pop %v2189
        %v2191 = vmul.f32 %v2095, 1.442695
        %v2192 = vpow.pop %v2191
        %v2193 = vmul.f32 %v2096, 1.442695
        %v2194 = vpow.pop %v2193
        %v2195 = vmul.f32 %v2097, 1.442695
        %v2196 = vpow.pop %v2195
        %v2197 = vmul.f32 %v2098, 1.442695
        %v2198 = vpow.pop %v2197
        %v2199 = vmul.f32 %v2099, 1.442695
        %v2200 = vpow.pop %v2199
        %v2201 = vmul.f32 %v2100, 1.442695
        %v2202 = vpow.pop %v2201
        %v2203 = vmul.f32 %v2101, 1.442695
        %v2204 = vpow.pop %v2203
        %v2205 = vmul.f32 %v2102, 1.442695
        %v2206 = vpow.pop %v2205
        %v2207 = vmul.f32 %v2103, 1.442695
        %v2208 = vpow.pop %v2207
        %v2209 = vmul.f32 %v2104, 1.442695
        %v2210 = vpow.pop %v2209
        %v2211 = vmul.f32 %v2105, 1.442695
        %v2212 = vpow.pop %v2211
        %v2213 = vmul.f32 %v2106, 1.442695
        %v2214 = vpow.pop %v2213
        %v2215 = vmul.f32 %v2107, 1.442695
        %v2216 = vpow.pop %v2215
        %v2217 = vmul.f32 %v2108, 1.442695
        %v2218 = vpow.pop %v2217
        %v2219 = vmul.f32 %v2109, 1.442695
        %v2220 = vpow.pop %v2219
        %v2221 = vmul.f32 %v2110, 1.442695
        %v2222 = vpow.pop %v2221
        %v2223 = vmul.f32 %v2111, 1.442695
        %v2224 = vpow.pop %v2223
        %v2225 = vmul.f32 %v2112, 1.442695
        %v2226 = vpow.pop %v2225
        %v2227 = vmul.f32 %v2113, 1.442695
        %v2228 = vpow.pop %v2227
        %v2229 = vmul.f32 %v2114, 1.442695
        %v2230 = vpow.pop %v2229
        %v2231 = vmul.f32 %v2115, 1.442695
        %v2232 = vpow.pop %v2231
        %v2233 = vmul.f32 %v2116, 1.442695
        %v2234 = vpow.pop %v2233
        %v2235 = vmul.f32 %v2117, 1.442695
        %v2236 = vpow.pop %v2235
        %v2237 = vmul.f32 %v2118, 1.442695
        %v2238 = vpow.pop %v2237
        %v2239 = vmul.f32 %v2119, 1.442695
        %v2240 = vpow.pop %v2239
        %v2241 = vmul.f32 %v2120, 1.442695
        %v2242 = vpow.pop %v2241
        %v2243 = vmul.f32 %v2121, 1.442695
        %v2244 = vpow.pop %v2243
        %v2245 = vmul.f32 %v2122, 1.442695
        %v2246 = vpow.pop %v2245
        %v2247 = vmul.f32 %v2123, 1.442695
        %v2248 = vpow.pop %v2247
        %v2249 = vmul.f32 %v2124, 1.442695
        %v2250 = vpow.pop %v2249
        %v2251 = vmul.f32 %v2125, 1.442695
        %v2252 = vpow.pop %v2251
        %v2253 = vmul.f32 %v2126, 1.442695
        %v2254 = vpow.pop %v2253
        %2255 = vadd.xlane.f32.xlu0 %v2128
        %v2256 = vpop.xlane.xlu0 %2255
        %2257 = vadd.xlane.f32.xlu0 %v2130
        %v2258 = vpop.xlane.xlu0 %2257
        %2259 = vadd.xlane.f32.xlu0 %v2132
        %v2260 = vpop.xlane.xlu0 %2259
        %2261 = vadd.xlane.f32.xlu0 %v2134
        %v2262 = vpop.xlane.xlu0 %2261
        %2263 = vadd.xlane.f32.xlu0 %v2136
        %v2264 = vpop.xlane.xlu0 %2263
        %2265 = vadd.xlane.f32.xlu0 %v2138
        %v2266 = vpop.xlane.xlu0 %2265
        %2267 = vadd.xlane.f32.xlu0 %v2140
        %v2268 = vpop.xlane.xlu0 %2267
        %2269 = vadd.xlane.f32.xlu0 %v2142
        %v2270 = vpop.xlane.xlu0 %2269
        %2271 = vadd.xlane.f32.xlu0 %v2144
        %v2272 = vpop.xlane.xlu0 %2271
        %2273 = vadd.xlane.f32.xlu0 %v2146
        %v2274 = vpop.xlane.xlu0 %2273
        %2275 = vadd.xlane.f32.xlu0 %v2148
        %v2276 = vpop.xlane.xlu0 %2275
        %2277 = vadd.xlane.f32.xlu0 %v2150
        %v2278 = vpop.xlane.xlu0 %2277
        %2279 = vadd.xlane.f32.xlu0 %v2152
        %v2280 = vpop.xlane.xlu0 %2279
        %2281 = vadd.xlane.f32.xlu0 %v2154
        %v2282 = vpop.xlane.xlu0 %2281
        %2283 = vadd.xlane.f32.xlu0 %v2156
        %v2284 = vpop.xlane.xlu0 %2283
        %2285 = vadd.xlane.f32.xlu0 %v2158
        %v2286 = vpop.xlane.xlu0 %2285
        %2287 = vadd.xlane.f32.xlu0 %v2160
        %v2288 = vpop.xlane.xlu0 %2287
        %2289 = vadd.xlane.f32.xlu0 %v2162
        %v2290 = vpop.xlane.xlu0 %2289
        %2291 = vadd.xlane.f32.xlu0 %v2164
        %v2292 = vpop.xlane.xlu0 %2291
        %2293 = vadd.xlane.f32.xlu0 %v2166
        %v2294 = vpop.xlane.xlu0 %2293
        %2295 = vadd.xlane.f32.xlu0 %v2168
        %v2296 = vpop.xlane.xlu0 %2295
        %2297 = vadd.xlane.f32.xlu0 %v2170
        %v2298 = vpop.xlane.xlu0 %2297
        %2299 = vadd.xlane.f32.xlu0 %v2172
        %v2300 = vpop.xlane.xlu0 %2299
        %2301 = vadd.xlane.f32.xlu0 %v2174
        %v2302 = vpop.xlane.xlu0 %2301
        %2303 = vadd.xlane.f32.xlu0 %v2176
        %v2304 = vpop.xlane.xlu0 %2303
        %2305 = vadd.xlane.f32.xlu0 %v2178
        %v2306 = vpop.xlane.xlu0 %2305
        %2307 = vadd.xlane.f32.xlu0 %v2180
        %v2308 = vpop.xlane.xlu0 %2307
        %2309 = vadd.xlane.f32.xlu0 %v2182
        %v2310 = vpop.xlane.xlu0 %2309
        %2311 = vadd.xlane.f32.xlu0 %v2184
        %v2312 = vpop.xlane.xlu0 %2311
        %2313 = vadd.xlane.f32.xlu0 %v2186
        %v2314 = vpop.xlane.xlu0 %2313
        %2315 = vadd.xlane.f32.xlu0 %v2188
        %v2316 = vpop.xlane.xlu0 %2315
        %2317 = vadd.xlane.f32.xlu0 %v2190
        %v2318 = vpop.xlane.xlu0 %2317
        %2319 = vadd.xlane.f32.xlu0 %v2192
        %v2320 = vpop.xlane.xlu0 %2319
        %2321 = vadd.xlane.f32.xlu0 %v2194
        %v2322 = vpop.xlane.xlu0 %2321
        %2323 = vadd.xlane.f32.xlu0 %v2196
        %v2324 = vpop.xlane.xlu0 %2323
        %2325 = vadd.xlane.f32.xlu0 %v2198
        %v2326 = vpop.xlane.xlu0 %2325
        %2327 = vadd.xlane.f32.xlu0 %v2200
        %v2328 = vpop.xlane.xlu0 %2327
        %2329 = vadd.xlane.f32.xlu0 %v2202
        %v2330 = vpop.xlane.xlu0 %2329
        %2331 = vadd.xlane.f32.xlu0 %v2204
        %v2332 = vpop.xlane.xlu0 %2331
        %2333 = vadd.xlane.f32.xlu0 %v2206
        %v2334 = vpop.xlane.xlu0 %2333
        %2335 = vadd.xlane.f32.xlu0 %v2208
        %v2336 = vpop.xlane.xlu0 %2335
        %2337 = vadd.xlane.f32.xlu0 %v2210
        %v2338 = vpop.xlane.xlu0 %2337
        %2339 = vadd.xlane.f32.xlu0 %v2212
        %v2340 = vpop.xlane.xlu0 %2339
        %2341 = vadd.xlane.f32.xlu0 %v2214
        %v2342 = vpop.xlane.xlu0 %2341
        %2343 = vadd.xlane.f32.xlu0 %v2216
        %v2344 = vpop.xlane.xlu0 %2343
        %2345 = vadd.xlane.f32.xlu0 %v2218
        %v2346 = vpop.xlane.xlu0 %2345
        %2347 = vadd.xlane.f32.xlu0 %v2220
        %v2348 = vpop.xlane.xlu0 %2347
        %2349 = vadd.xlane.f32.xlu0 %v2222
        %v2350 = vpop.xlane.xlu0 %2349
        %2351 = vadd.xlane.f32.xlu0 %v2224
        %v2352 = vpop.xlane.xlu0 %2351
        %2353 = vadd.xlane.f32.xlu0 %v2226
        %v2354 = vpop.xlane.xlu0 %2353
        %2355 = vadd.xlane.f32.xlu0 %v2228
        %v2356 = vpop.xlane.xlu0 %2355
        %2357 = vadd.xlane.f32.xlu0 %v2230
        %v2358 = vpop.xlane.xlu0 %2357
        %2359 = vadd.xlane.f32.xlu0 %v2232
        %v2360 = vpop.xlane.xlu0 %2359
        %2361 = vadd.xlane.f32.xlu0 %v2234
        %v2362 = vpop.xlane.xlu0 %2361
        %2363 = vadd.xlane.f32.xlu0 %v2236
        %v2364 = vpop.xlane.xlu0 %2363
        %2365 = vadd.xlane.f32.xlu0 %v2238
        %v2366 = vpop.xlane.xlu0 %2365
        %2367 = vadd.xlane.f32.xlu0 %v2240
        %v2368 = vpop.xlane.xlu0 %2367
        %2369 = vadd.xlane.f32.xlu0 %v2242
        %v2370 = vpop.xlane.xlu0 %2369
        %2371 = vadd.xlane.f32.xlu0 %v2244
        %v2372 = vpop.xlane.xlu0 %2371
        %2373 = vadd.xlane.f32.xlu0 %v2246
        %v2374 = vpop.xlane.xlu0 %2373
        %2375 = vadd.xlane.f32.xlu0 %v2248
        %v2376 = vpop.xlane.xlu0 %2375
        %2377 = vadd.xlane.f32.xlu0 %v2250
        %v2378 = vpop.xlane.xlu0 %2377
        %2379 = vadd.xlane.f32.xlu0 %v2252
        %v2380 = vpop.xlane.xlu0 %2379
        %2381 = vadd.xlane.f32.xlu0 %v2254
        %v2382 = vpop.xlane.xlu0 %2381
        %v2383 = vpack.c.bf16 %v2130, %v2128
        %v2384 = vpack.c.bf16 %v2134, %v2132
        %v2385 = vpack.c.bf16 %v2138, %v2136
        %v2386 = vpack.c.bf16 %v2142, %v2140
        %v2387 = vpack.c.bf16 %v2146, %v2144
        %v2388 = vpack.c.bf16 %v2150, %v2148
        %v2389 = vpack.c.bf16 %v2154, %v2152
        %v2390 = vpack.c.bf16 %v2158, %v2156
        %v2391 = vpack.c.bf16 %v2162, %v2160
        %v2392 = vpack.c.bf16 %v2166, %v2164
        %v2393 = vpack.c.bf16 %v2170, %v2168
        %v2394 = vpack.c.bf16 %v2174, %v2172
        %v2395 = vpack.c.bf16 %v2178, %v2176
        %v2396 = vpack.c.bf16 %v2182, %v2180
        %v2397 = vpack.c.bf16 %v2186, %v2184
        %v2398 = vpack.c.bf16 %v2190, %v2188
        %v2399 = vpack.c.bf16 %v2194, %v2192
        %v2400 = vpack.c.bf16 %v2198, %v2196
        %v2401 = vpack.c.bf16 %v2202, %v2200
        %v2402 = vpack.c.bf16 %v2206, %v2204
        %v2403 = vpack.c.bf16 %v2210, %v2208
        %v2404 = vpack.c.bf16 %v2214, %v2212
        %v2405 = vpack.c.bf16 %v2218, %v2216
        %v2406 = vpack.c.bf16 %v2222, %v2220
        %v2407 = vpack.c.bf16 %v2226, %v2224
        %v2408 = vpack.c.bf16 %v2230, %v2228
        %v2409 = vpack.c.bf16 %v2234, %v2232
        %v2410 = vpack.c.bf16 %v2238, %v2236
        %v2411 = vpack.c.bf16 %v2242, %v2240
        %v2412 = vpack.c.bf16 %v2246, %v2244
        %v2413 = vpack.c.bf16 %v2250, %v2248
        %v2414 = vpack.c.bf16 %v2254, %v2252
        %2415 = vmatprep.subr.bf16.mxu0 0
        %2416 = vmatpush1.bf16.msra.mxu0 %v1322
        %2417 = vmatprep.subr.bf16.mxu0 0
        %2418 = vmatpush1.bf16.msra.mxu0 %v1323
        %2419 = vmatprep.subr.bf16.mxu0 0
        %2420 = vmatpush1.bf16.msra.mxu0 %v1324
        %2421 = vmatprep.subr.bf16.mxu0 0
        %2422 = vmatpush1.bf16.msra.mxu0 %v1325
        %2423 = vmatprep.subr.bf16.mxu0 0
        %2424 = vmatpush1.bf16.msra.mxu0 %v1326
        %2425 = vmatprep.subr.bf16.mxu0 0
        %2426 = vmatpush1.bf16.msra.mxu0 %v1327
        %2427 = vmatprep.subr.bf16.mxu0 0
        %2428 = vmatpush1.bf16.msra.mxu0 %v1328
        %2429 = vmatprep.subr.bf16.mxu0 0
        %2430 = vmatpush1.bf16.msra.mxu0 %v1329
        %2431 = vmatprep.subr.bf16.mxu0 0
        %2432 = vmatpush1.bf16.msra.mxu0 0
        %2433 = vmatprep.subr.bf16.mxu0 0
        %2434 = vmatpush1.bf16.msra.mxu0 0
        %2435 = vmatprep.subr.bf16.mxu0 0
        %2436 = vmatpush1.bf16.msra.mxu0 0
        %2437 = vmatprep.subr.bf16.mxu0 0
        %2438 = vmatpush1.bf16.msra.mxu0 0
        %2439 = vmatprep.subr.bf16.mxu0 0
        %2440 = vmatpush1.bf16.msra.mxu0 0
        %2441 = vmatprep.subr.bf16.mxu0 0
        %2442 = vmatpush1.bf16.msra.mxu0 0
        %2443 = vmatprep.subr.bf16.mxu0 0
        %2444 = vmatpush1.bf16.msra.mxu0 0
        %2445 = vmatprep.subr.bf16.mxu0 0
        %2446 = vmatpush1.bf16.msra.mxu0 0
        %2447 = vmatprep.mubr.bf16.mxu0 0
        %2448 = vmatmul.mubr.bf16.gmra.mrb[0].mxu0 %v2383
        %v2449 = vpop.f32.mrb[0].mxu0
        %v2450 = vadd.f32 0.0, %v2449
        %v2451 = vpop.f32.mrb[0].mxu0
        %v2452 = vpop.f32.mrb[0].mxu0
        %v2453 = vadd.f32 0.0, %v2452
        %v2454 = vpop.f32.mrb[0].mxu0
        %2455 = vmatprep.mubr.bf16.mxu0 0
        %2456 = vmatmul.mubr.bf16.gmra.mrb[0].mxu0 %v2384
        %v2457 = vpop.f32.mrb[0].mxu0
        %v2458 = vadd.f32 0.0, %v2457
        %v2459 = vpop.f32.mrb[0].mxu0
        %v2460 = vpop.f32.mrb[0].mxu0
        %v2461 = vadd.f32 0.0, %v2460
        %v2462 = vpop.f32.mrb[0].mxu0
        %2463 = vmatprep.mubr.bf16.mxu0 0
        %2464 = vmatmul.mubr.bf16.gmra.mrb[0].mxu0 %v2385
        %v2465 = vpop.f32.mrb[0].mxu0
        %v2466 = vadd.f32 0.0, %v2465
        %v2467 = vpop.f32.mrb[0].mxu0
        %v2468 = vpop.f32.mrb[0].mxu0
        %v2469 = vadd.f32 0.0, %v2468
        %v2470 = vpop.f32.mrb[0].mxu0
        %2471 = vmatprep.mubr.bf16.mxu0 0
        %2472 = vmatmul.mubr.bf16.gmra.mrb[0].mxu0 %v2386
        %v2473 = vpop.f32.mrb[0].mxu0
        %v2474 = vadd.f32 0.0, %v2473
        %v2475 = vpop.f32.mrb[0].mxu0
        %v2476 = vpop.f32.mrb[0].mxu0
        %v2477 = vadd.f32 0.0, %v2476
        %v2478 = vpop.f32.mrb[0].mxu0
        %2479 = vmatprep.mubr.bf16.mxu0 0
        %2480 = vmatmul.mubr.bf16.gmra.mrb[0].mxu0 %v2387
        %v2481 = vpop.f32.mrb[0].mxu0
        %v2482 = vadd.f32 0.0, %v2481
        %v2483 = vpop.f32.mrb[0].mxu0
        %v2484 = vpop.f32.mrb[0].mxu0
        %v2485 = vadd.f32 0.0, %v2484
        %v2486 = vpop.f32.mrb[0].mxu0
        %2487 = vmatprep.mubr.bf16.mxu0 0
        %2488 = vmatmul.mubr.bf16.gmra.mrb[0].mxu0 %v2388
        %v2489 = vpop.f32.mrb[0].mxu0
        %v2490 = vadd.f32 0.0, %v2489
        %v2491 = vpop.f32.mrb[0].mxu0
        %v2492 = vpop.f32.mrb[0].mxu0
        %v2493 = vadd.f32 0.0, %v2492
        %v2494 = vpop.f32.mrb[0].mxu0
        %2495 = vmatprep.mubr.bf16.mxu0 0
        %2496 = vmatmul.mubr.bf16.gmra.mrb[0].mxu0 %v2389
        %v2497 = vpop.f32.mrb[0].mxu0
        %v2498 = vadd.f32 0.0, %v2497
        %v2499 = vpop.f32.mrb[0].mxu0
        %v2500 = vpop.f32.mrb[0].mxu0
        %v2501 = vadd.f32 0.0, %v2500
        %v2502 = vpop.f32.mrb[0].mxu0
        %2503 = vmatprep.mubr.bf16.mxu0 0
        %2504 = vmatmul.mubr.bf16.gmra.mrb[0].mxu0 %v2390
        %v2505 = vpop.f32.mrb[0].mxu0
        %v2506 = vadd.f32 0.0, %v2505
        %v2507 = vpop.f32.mrb[0].mxu0
        %v2508 = vpop.f32.mrb[0].mxu0
        %v2509 = vadd.f32 0.0, %v2508
        %v2510 = vpop.f32.mrb[0].mxu0
        %2511 = vdwg.mxu0
        %2512 = vmatprep.subr.bf16.mxu0 0
        %2513 = vmatpush1.bf16.msra.mxu0 %v1330
        %2514 = vmatprep.subr.bf16.mxu0 0
        %2515 = vmatpush1.bf16.msra.mxu0 %v1331
        %2516 = vmatprep.subr.bf16.mxu0 0
        %2517 = vmatpush1.bf16.msra.mxu0 %v1332
        %2518 = vmatprep.subr.bf16.mxu0 0
        %2519 = vmatpush1.bf16.msra.mxu0 %v1333
        %2520 = vmatprep.subr.bf16.mxu0 0
        %2521 = vmatpush1.bf16.msra.mxu0 %v1334
        %2522 = vmatprep.subr.bf16.mxu0 0
        %2523 = vmatpush1.bf16.msra.mxu0 %v1335
        %2524 = vmatprep.subr.bf16.mxu0 0
        %2525 = vmatpush1.bf16.msra.mxu0 %v1336
        %2526 = vmatprep.subr.bf16.mxu0 0
        %2527 = vmatpush1.bf16.msra.mxu0 %v1337
        %2528 = vmatprep.subr.bf16.mxu0 0
        %2529 = vmatpush1.bf16.msra.mxu0 0
        %2530 = vmatprep.subr.bf16.mxu0 0
        %2531 = vmatpush1.bf16.msra.mxu0 0
        %2532 = vmatprep.subr.bf16.mxu0 0
        %2533 = vmatpush1.bf16.msra.mxu0 0
        %2534 = vmatprep.subr.bf16.mxu0 0
        %2535 = vmatpush1.bf16.msra.mxu0 0
        %2536 = vmatprep.subr.bf16.mxu0 0
        %2537 = vmatpush1.bf16.msra.mxu0 0
        %2538 = vmatprep.subr.bf16.mxu0 0
        %2539 = vmatpush1.bf16.msra.mxu0 0
        %2540 = vmatprep.subr.bf16.mxu0 0
        %2541 = vmatpush1.bf16.msra.mxu0 0
        %2542 = vmatprep.subr.bf16.mxu0 0
        %2543 = vmatpush1.bf16.msra.mxu0 0
        %2544 = vmatprep.mubr.bf16.mxu0 0
        %2545 = vmatmul.mubr.bf16.gmra.mrb[0].mxu0 %v2391
        %v2546 = vpop.f32.mrb[0].mxu0
        %v2547 = vadd.f32 0.0, %v2546
        %v2548 = vpop.f32.mrb[0].mxu0
        %v2549 = vpop.f32.mrb[0].mxu0
        %v2550 = vadd.f32 0.0, %v2549
        %v2551 = vpop.f32.mrb[0].mxu0
        %2552 = vmatprep.mubr.bf16.mxu0 0
        %2553 = vmatmul.mubr.bf16.gmra.mrb[0].mxu0 %v2392
        %v2554 = vpop.f32.mrb[0].mxu0
        %v2555 = vadd.f32 0.0, %v2554
        %v2556 = vpop.f32.mrb[0].mxu0
        %v2557 = vpop.f32.mrb[0].mxu0
        %v2558 = vadd.f32 0.0, %v2557
        %v2559 = vpop.f32.mrb[0].mxu0
        %2560 = vmatprep.mubr.bf16.mxu0 0
        %2561 = vmatmul.mubr.bf16.gmra.mrb[0].mxu0 %v2393
        %v2562 = vpop.f32.mrb[0].mxu0
        %v2563 = vadd.f32 0.0, %v2562
        %v2564 = vpop.f32.mrb[0].mxu0
        %v2565 = vpop.f32.mrb[0].mxu0
        %v2566 = vadd.f32 0.0, %v2565
        %v2567 = vpop.f32.mrb[0].mxu0
        %2568 = vmatprep.mubr.bf16.mxu0 0
        %2569 = vmatmul.mubr.bf16.gmra.mrb[0].mxu0 %v2394
        %v2570 = vpop.f32.mrb[0].mxu0
        %v2571 = vadd.f32 0.0, %v2570
        %v2572 = vpop.f32.mrb[0].mxu0
        %v2573 = vpop.f32.mrb[0].mxu0
        %v2574 = vadd.f32 0.0, %v2573
        %v2575 = vpop.f32.mrb[0].mxu0
        %2576 = vmatprep.mubr.bf16.mxu0 0
        %2577 = vmatmul.mubr.bf16.gmra.mrb[0].mxu0 %v2395
        %v2578 = vpop.f32.mrb[0].mxu0
        %v2579 = vadd.f32 0.0, %v2578
        %v2580 = vpop.f32.mrb[0].mxu0
        %v2581 = vpop.f32.mrb[0].mxu0
        %v2582 = vadd.f32 0.0, %v2581
        %v2583 = vpop.f32.mrb[0].mxu0
        %2584 = vmatprep.mubr.bf16.mxu0 0
        %2585 = vmatmul.mubr.bf16.gmra.mrb[0].mxu0 %v2396
        %v2586 = vpop.f32.mrb[0].mxu0
        %v2587 = vadd.f32 0.0, %v2586
        %v2588 = vpop.f32.mrb[0].mxu0
        %v2589 = vpop.f32.mrb[0].mxu0
        %v2590 = vadd.f32 0.0, %v2589
        %v2591 = vpop.f32.mrb[0].mxu0
        %2592 = vmatprep.mubr.bf16.mxu0 0
        %2593 = vmatmul.mubr.bf16.gmra.mrb[0].mxu0 %v2397
        %v2594 = vpop.f32.mrb[0].mxu0
        %v2595 = vadd.f32 0.0, %v2594
        %v2596 = vpop.f32.mrb[0].mxu0
        %v2597 = vpop.f32.mrb[0].mxu0
        %v2598 = vadd.f32 0.0, %v2597
        %v2599 = vpop.f32.mrb[0].mxu0
        %2600 = vmatprep.mubr.bf16.mxu0 0
        %2601 = vmatmul.mubr.bf16.gmra.mrb[0].mxu0 %v2398
        %v2602 = vpop.f32.mrb[0].mxu0
        %v2603 = vadd.f32 0.0, %v2602
        %v2604 = vpop.f32.mrb[0].mxu0
        %v2605 = vpop.f32.mrb[0].mxu0
        %v2606 = vadd.f32 0.0, %v2605
        %v2607 = vpop.f32.mrb[0].mxu0
        %2608 = vdwg.mxu0
        %2609 = vmatprep.subr.bf16.mxu0 0
        %2610 = vmatpush1.bf16.msra.mxu0 %v1338
        %2611 = vmatprep.subr.bf16.mxu0 0
        %2612 = vmatpush1.bf16.msra.mxu0 %v1339
        %2613 = vmatprep.subr.bf16.mxu0 0
        %2614 = vmatpush1.bf16.msra.mxu0 %v1340
        %2615 = vmatprep.subr.bf16.mxu0 0
        %2616 = vmatpush1.bf16.msra.mxu0 %v1341
        %2617 = vmatprep.subr.bf16.mxu0 0
        %2618 = vmatpush1.bf16.msra.mxu0 %v1342
        %2619 = vmatprep.subr.bf16.mxu0 0
        %2620 = vmatpush1.bf16.msra.mxu0 %v1343
        %2621 = vmatprep.subr.bf16.mxu0 0
        %2622 = vmatpush1.bf16.msra.mxu0 %v1344
        %2623 = vmatprep.subr.bf16.mxu0 0
        %2624 = vmatpush1.bf16.msra.mxu0 %v1345
        %2625 = vmatprep.subr.bf16.mxu0 0
        %2626 = vmatpush1.bf16.msra.mxu0 0
        %2627 = vmatprep.subr.bf16.mxu0 0
        %2628 = vmatpush1.bf16.msra.mxu0 0
        %2629 = vmatprep.subr.bf16.mxu0 0
        %2630 = vmatpush1.bf16.msra.mxu0 0
        %2631 = vmatprep.subr.bf16.mxu0 0
        %2632 = vmatpush1.bf16.msra.mxu0 0
        %2633 = vmatprep.subr.bf16.mxu0 0
        %2634 = vmatpush1.bf16.msra.mxu0 0
        %2635 = vmatprep.subr.bf16.mxu0 0
        %2636 = vmatpush1.bf16.msra.mxu0 0
        %2637 = vmatprep.subr.bf16.mxu0 0
        %2638 = vmatpush1.bf16.msra.mxu0 0
        %2639 = vmatprep.subr.bf16.mxu0 0
        %2640 = vmatpush1.bf16.msra.mxu0 0
        %2641 = vmatprep.mubr.bf16.mxu0 0
        %2642 = vmatmul.mubr.bf16.gmra.mrb[0].mxu0 %v2399
        %v2643 = vpop.f32.mrb[0].mxu0
        %v2644 = vadd.f32 0.0, %v2643
        %v2645 = vpop.f32.mrb[0].mxu0
        %v2646 = vpop.f32.mrb[0].mxu0
        %v2647 = vadd.f32 0.0, %v2646
        %v2648 = vpop.f32.mrb[0].mxu0
        %2649 = vmatprep.mubr.bf16.mxu0 0
        %2650 = vmatmul.mubr.bf16.gmra.mrb[0].mxu0 %v2400
        %v2651 = vpop.f32.mrb[0].mxu0
        %v2652 = vadd.f32 0.0, %v2651
        %v2653 = vpop.f32.mrb[0].mxu0
        %v2654 = vpop.f32.mrb[0].mxu0
        %v2655 = vadd.f32 0.0, %v2654
        %v2656 = vpop.f32.mrb[0].mxu0
        %2657 = vmatprep.mubr.bf16.mxu0 0
        %2658 = vmatmul.mubr.bf16.gmra.mrb[0].mxu0 %v2401
        %v2659 = vpop.f32.mrb[0].mxu0
        %v2660 = vadd.f32 0.0, %v2659
        %v2661 = vpop.f32.mrb[0].mxu0
        %v2662 = vpop.f32.mrb[0].mxu0
        %v2663 = vadd.f32 0.0, %v2662
        %v2664 = vpop.f32.mrb[0].mxu0
        %2665 = vmatprep.mubr.bf16.mxu0 0
        %2666 = vmatmul.mubr.bf16.gmra.mrb[0].mxu0 %v2402
        %v2667 = vpop.f32.mrb[0].mxu0
        %v2668 = vadd.f32 0.0, %v2667
        %v2669 = vpop.f32.mrb[0].mxu0
        %v2670 = vpop.f32.mrb[0].mxu0
        %v2671 = vadd.f32 0.0, %v2670
        %v2672 = vpop.f32.mrb[0].mxu0
        %2673 = vmatprep.mubr.bf16.mxu0 0
        %2674 = vmatmul.mubr.bf16.gmra.mrb[0].mxu0 %v2403
        %v2675 = vpop.f32.mrb[0].mxu0
        %v2676 = vadd.f32 0.0, %v2675
        %v2677 = vpop.f32.mrb[0].mxu0
        %v2678 = vpop.f32.mrb[0].mxu0
        %v2679 = vadd.f32 0.0, %v2678
        %v2680 = vpop.f32.mrb[0].mxu0
        %2681 = vmatprep.mubr.bf16.mxu0 0
        %2682 = vmatmul.mubr.bf16.gmra.mrb[0].mxu0 %v2404
        %v2683 = vpop.f32.mrb[0].mxu0
        %v2684 = vadd.f32 0.0, %v2683
        %v2685 = vpop.f32.mrb[0].mxu0
        %v2686 = vpop.f32.mrb[0].mxu0
        %v2687 = vadd.f32 0.0, %v2686
        %v2688 = vpop.f32.mrb[0].mxu0
        %2689 = vmatprep.mubr.bf16.mxu0 0
        %2690 = vmatmul.mubr.bf16.gmra.mrb[0].mxu0 %v2405
        %v2691 = vpop.f32.mrb[0].mxu0
        %v2692 = vadd.f32 0.0, %v2691
        %v2693 = vpop.f32.mrb[0].mxu0
        %v2694 = vpop.f32.mrb[0].mxu0
        %v2695 = vadd.f32 0.0, %v2694
        %v2696 = vpop.f32.mrb[0].mxu0
        %2697 = vmatprep.mubr.bf16.mxu0 0
        %2698 = vmatmul.mubr.bf16.gmra.mrb[0].mxu0 %v2406
        %v2699 = vpop.f32.mrb[0].mxu0
        %v2700 = vadd.f32 0.0, %v2699
        %v2701 = vpop.f32.mrb[0].mxu0
        %v2702 = vpop.f32.mrb[0].mxu0
        %v2703 = vadd.f32 0.0, %v2702
        %v2704 = vpop.f32.mrb[0].mxu0
        %2705 = vdwg.mxu0
        %2706 = vmatprep.subr.bf16.mxu0 0
        %2707 = vmatpush1.bf16.msra.mxu0 %v1346
        %2708 = vmatprep.subr.bf16.mxu0 0
        %2709 = vmatpush1.bf16.msra.mxu0 %v1347
        %2710 = vmatprep.subr.bf16.mxu0 0
        %2711 = vmatpush1.bf16.msra.mxu0 %v1348
        %2712 = vmatprep.subr.bf16.mxu0 0
        %2713 = vmatpush1.bf16.msra.mxu0 %v1349
        %2714 = vmatprep.subr.bf16.mxu0 0
        %2715 = vmatpush1.bf16.msra.mxu0 %v1350
        %2716 = vmatprep.subr.bf16.mxu0 0
        %2717 = vmatpush1.bf16.msra.mxu0 %v1351
        %2718 = vmatprep.subr.bf16.mxu0 0
        %2719 = vmatpush1.bf16.msra.mxu0 %v1352
        %2720 = vmatprep.subr.bf16.mxu0 0
        %2721 = vmatpush1.bf16.msra.mxu0 %v1353
        %2722 = vmatprep.subr.bf16.mxu0 0
        %2723 = vmatpush1.bf16.msra.mxu0 0
        %2724 = vmatprep.subr.bf16.mxu0 0
        %2725 = vmatpush1.bf16.msra.mxu0 0
        %2726 = vmatprep.subr.bf16.mxu0 0
        %2727 = vmatpush1.bf16.msra.mxu0 0
        %2728 = vmatprep.subr.bf16.mxu0 0
        %2729 = vmatpush1.bf16.msra.mxu0 0
        %2730 = vmatprep.subr.bf16.mxu0 0
        %2731 = vmatpush1.bf16.msra.mxu0 0
        %2732 = vmatprep.subr.bf16.mxu0 0
        %2733 = vmatpush1.bf16.msra.mxu0 0
        %2734 = vmatprep.subr.bf16.mxu0 0
        %2735 = vmatpush1.bf16.msra.mxu0 0
        %2736 = vmatprep.subr.bf16.mxu0 0
        %2737 = vmatpush1.bf16.msra.mxu0 0
        %2738 = vmatprep.mubr.bf16.mxu0 0
        %2739 = vmatmul.mubr.bf16.gmra.mrb[0].mxu0 %v2407
        %v2740 = vpop.f32.mrb[0].mxu0
        %v2741 = vadd.f32 0.0, %v2740
        %v2742 = vpop.f32.mrb[0].mxu0
        %v2743 = vpop.f32.mrb[0].mxu0
        %v2744 = vadd.f32 0.0, %v2743
        %v2745 = vpop.f32.mrb[0].mxu0
        %2746 = vmatprep.mubr.bf16.mxu0 0
        %2747 = vmatmul.mubr.bf16.gmra.mrb[0].mxu0 %v2408
        %v2748 = vpop.f32.mrb[0].mxu0
        %v2749 = vadd.f32 0.0, %v2748
        %v2750 = vpop.f32.mrb[0].mxu0
        %v2751 = vpop.f32.mrb[0].mxu0
        %v2752 = vadd.f32 0.0, %v2751
        %v2753 = vpop.f32.mrb[0].mxu0
        %2754 = vmatprep.mubr.bf16.mxu0 0
        %2755 = vmatmul.mubr.bf16.gmra.mrb[0].mxu0 %v2409
        %v2756 = vpop.f32.mrb[0].mxu0
        %v2757 = vadd.f32 0.0, %v2756
        %v2758 = vpop.f32.mrb[0].mxu0
        %v2759 = vpop.f32.mrb[0].mxu0
        %v2760 = vadd.f32 0.0, %v2759
        %v2761 = vpop.f32.mrb[0].mxu0
        %2762 = vmatprep.mubr.bf16.mxu0 0
        %2763 = vmatmul.mubr.bf16.gmra.mrb[0].mxu0 %v2410
        %v2764 = vpop.f32.mrb[0].mxu0
        %v2765 = vadd.f32 0.0, %v2764
        %v2766 = vpop.f32.mrb[0].mxu0
        %v2767 = vpop.f32.mrb[0].mxu0
        %v2768 = vadd.f32 0.0, %v2767
        %v2769 = vpop.f32.mrb[0].mxu0
        %2770 = vmatprep.mubr.bf16.mxu0 0
        %2771 = vmatmul.mubr.bf16.gmra.mrb[0].mxu0 %v2411
        %v2772 = vpop.f32.mrb[0].mxu0
        %v2773 = vadd.f32 0.0, %v2772
        %v2774 = vpop.f32.mrb[0].mxu0
        %v2775 = vpop.f32.mrb[0].mxu0
        %v2776 = vadd.f32 0.0, %v2775
        %v2777 = vpop.f32.mrb[0].mxu0
        %2778 = vmatprep.mubr.bf16.mxu0 0
        %2779 = vmatmul.mubr.bf16.gmra.mrb[0].mxu0 %v2412
        %v2780 = vpop.f32.mrb[0].mxu0
        %v2781 = vadd.f32 0.0, %v2780
        %v2782 = vpop.f32.mrb[0].mxu0
        %v2783 = vpop.f32.mrb[0].mxu0
        %v2784 = vadd.f32 0.0, %v2783
        %v2785 = vpop.f32.mrb[0].mxu0
        %2786 = vmatprep.mubr.bf16.mxu0 0
        %2787 = vmatmul.mubr.bf16.gmra.mrb[0].mxu0 %v2413
        %v2788 = vpop.f32.mrb[0].mxu0
        %v2789 = vadd.f32 0.0, %v2788
        %v2790 = vpop.f32.mrb[0].mxu0
        %v2791 = vpop.f32.mrb[0].mxu0
        %v2792 = vadd.f32 0.0, %v2791
        %v2793 = vpop.f32.mrb[0].mxu0
        %2794 = vmatprep.mubr.bf16.mxu0 0
        %2795 = vmatmul.mubr.bf16.gmra.mrb[0].mxu0 %v2414
        %v2796 = vpop.f32.mrb[0].mxu0
        %v2797 = vadd.f32 0.0, %v2796
        %v2798 = vpop.f32.mrb[0].mxu0
        %v2799 = vpop.f32.mrb[0].mxu0
        %v2800 = vadd.f32 0.0, %v2799
        %v2801 = vpop.f32.mrb[0].mxu0
        %2802 = vdwg.mxu0
        %v2803 = vrcp.pop %v2256
        %v2804 = vrcp.pop %v2258
        %v2805 = vrcp.pop %v2260
        %v2806 = vrcp.pop %v2262
        %v2807 = vrcp.pop %v2264
        %v2808 = vrcp.pop %v2266
        %v2809 = vrcp.pop %v2268
        %v2810 = vrcp.pop %v2270
        %v2811 = vrcp.pop %v2272
        %v2812 = vrcp.pop %v2274
        %v2813 = vrcp.pop %v2276
        %v2814 = vrcp.pop %v2278
        %v2815 = vrcp.pop %v2280
        %v2816 = vrcp.pop %v2282
        %v2817 = vrcp.pop %v2284
        %v2818 = vrcp.pop %v2286
        %v2819 = vrcp.pop %v2288
        %v2820 = vrcp.pop %v2290
        %v2821 = vrcp.pop %v2292
        %v2822 = vrcp.pop %v2294
        %v2823 = vrcp.pop %v2296
        %v2824 = vrcp.pop %v2298
        %v2825 = vrcp.pop %v2300
        %v2826 = vrcp.pop %v2302
        %v2827 = vrcp.pop %v2304
        %v2828 = vrcp.pop %v2306
        %v2829 = vrcp.pop %v2308
        %v2830 = vrcp.pop %v2310
        %v2831 = vrcp.pop %v2312
        %v2832 = vrcp.pop %v2314
        %v2833 = vrcp.pop %v2316
        %v2834 = vrcp.pop %v2318
        %v2835 = vrcp.pop %v2320
        %v2836 = vrcp.pop %v2322
        %v2837 = vrcp.pop %v2324
        %v2838 = vrcp.pop %v2326
        %v2839 = vrcp.pop %v2328
        %v2840 = vrcp.pop %v2330
        %v2841 = vrcp.pop %v2332
        %v2842 = vrcp.pop %v2334
        %v2843 = vrcp.pop %v2336
        %v2844 = vrcp.pop %v2338
        %v2845 = vrcp.pop %v2340
        %v2846 = vrcp.pop %v2342
        %v2847 = vrcp.pop %v2344
        %v2848 = vrcp.pop %v2346
        %v2849 = vrcp.pop %v2348
        %v2850 = vrcp.pop %v2350
        %v2851 = vrcp.pop %v2352
        %v2852 = vrcp.pop %v2354
        %v2853 = vrcp.pop %v2356
        %v2854 = vrcp.pop %v2358
        %v2855 = vrcp.pop %v2360
        %v2856 = vrcp.pop %v2362
        %v2857 = vrcp.pop %v2364
        %v2858 = vrcp.pop %v2366
        %v2859 = vrcp.pop %v2368
        %v2860 = vrcp.pop %v2370
        %v2861 = vrcp.pop %v2372
        %v2862 = vrcp.pop %v2374
        %v2863 = vrcp.pop %v2376
        %v2864 = vrcp.pop %v2378
        %v2865 = vrcp.pop %v2380
        %v2866 = vrcp.pop %v2382
        %v2867 = vmul.f32 %v2450, %v2803
        %v2868 = vmul.f32 %v2453, %v2804
        %v2869 = vmul.f32 %v2458, %v2805
        %v2870 = vmul.f32 %v2461, %v2806
        %v2871 = vmul.f32 %v2466, %v2807
        %v2872 = vmul.f32 %v2469, %v2808
        %v2873 = vmul.f32 %v2474, %v2809
        %v2874 = vmul.f32 %v2477, %v2810
        %v2875 = vmul.f32 %v2482, %v2811
        %v2876 = vmul.f32 %v2485, %v2812
        %v2877 = vmul.f32 %v2490, %v2813
        %v2878 = vmul.f32 %v2493, %v2814
        %v2879 = vmul.f32 %v2498, %v2815
        %v2880 = vmul.f32 %v2501, %v2816
        %v2881 = vmul.f32 %v2506, %v2817
        %v2882 = vmul.f32 %v2509, %v2818
        %v2883 = vmul.f32 %v2547, %v2819
        %v2884 = vmul.f32 %v2550, %v2820
        %v2885 = vmul.f32 %v2555, %v2821
        %v2886 = vmul.f32 %v2558, %v2822
        %v2887 = vmul.f32 %v2563, %v2823
        %v2888 = vmul.f32 %v2566, %v2824
        %v2889 = vmul.f32 %v2571, %v2825
        %v2890 = vmul.f32 %v2574, %v2826
        %v2891 = vmul.f32 %v2579, %v2827
        %v2892 = vmul.f32 %v2582, %v2828
        %v2893 = vmul.f32 %v2587, %v2829
        %v2894 = vmul.f32 %v2590, %v2830
        %v2895 = vmul.f32 %v2595, %v2831
        %v2896 = vmul.f32 %v2598, %v2832
        %v2897 = vmul.f32 %v2603, %v2833
        %v2898 = vmul.f32 %v2606, %v2834
        %v2899 = vmul.f32 %v2644, %v2835
        %v2900 = vmul.f32 %v2647, %v2836
        %v2901 = vmul.f32 %v2652, %v2837
        %v2902 = vmul.f32 %v2655, %v2838
        %v2903 = vmul.f32 %v2660, %v2839
        %v2904 = vmul.f32 %v2663, %v2840
        %v2905 = vmul.f32 %v2668, %v2841
        %v2906 = vmul.f32 %v2671, %v2842
        %v2907 = vmul.f32 %v2676, %v2843
        %v2908 = vmul.f32 %v2679, %v2844
        %v2909 = vmul.f32 %v2684, %v2845
        %v2910 = vmul.f32 %v2687, %v2846
        %v2911 = vmul.f32 %v2692, %v2847
        %v2912 = vmul.f32 %v2695, %v2848
        %v2913 = vmul.f32 %v2700, %v2849
        %v2914 = vmul.f32 %v2703, %v2850
        %v2915 = vmul.f32 %v2741, %v2851
        %v2916 = vmul.f32 %v2744, %v2852
        %v2917 = vmul.f32 %v2749, %v2853
        %v2918 = vmul.f32 %v2752, %v2854
        %v2919 = vmul.f32 %v2757, %v2855
        %v2920 = vmul.f32 %v2760, %v2856
        %v2921 = vmul.f32 %v2765, %v2857
        %v2922 = vmul.f32 %v2768, %v2858
        %v2923 = vmul.f32 %v2773, %v2859
        %v2924 = vmul.f32 %v2776, %v2860
        %v2925 = vmul.f32 %v2781, %v2861
        %v2926 = vmul.f32 %v2784, %v2862
        %v2927 = vmul.f32 %v2789, %v2863
        %v2928 = vmul.f32 %v2792, %v2864
        %v2929 = vmul.f32 %v2797, %v2865
        %v2930 = vmul.f32 %v2800, %v2866
        %2947 = vrot.lane.b32.xlu0 %v2883, 32
        %v2948 = vpop.permute.xlu0 %2947
        %2949 = vrot.lane.b32.xlu0 %v2884, 32
        %v2950 = vpop.permute.xlu0 %2949
        %2951 = vrot.lane.b32.xlu0 %v2885, 32
        %v2952 = vpop.permute.xlu0 %2951
        %2953 = vrot.lane.b32.xlu0 %v2886, 32
        %v2954 = vpop.permute.xlu0 %2953
        %2955 = vrot.lane.b32.xlu0 %v2887, 32
        %v2956 = vpop.permute.xlu0 %2955
        %2957 = vrot.lane.b32.xlu0 %v2888, 32
        %v2958 = vpop.permute.xlu0 %2957
        %2959 = vrot.lane.b32.xlu0 %v2889, 32
        %v2960 = vpop.permute.xlu0 %2959
        %2961 = vrot.lane.b32.xlu0 %v2890, 32
        %v2962 = vpop.permute.xlu0 %2961
        %2963 = vrot.lane.b32.xlu0 %v2891, 32
        %v2964 = vpop.permute.xlu0 %2963
        %2965 = vrot.lane.b32.xlu0 %v2892, 32
        %v2966 = vpop.permute.xlu0 %2965
        %2967 = vrot.lane.b32.xlu0 %v2893, 32
        %v2968 = vpop.permute.xlu0 %2967
        %2969 = vrot.lane.b32.xlu0 %v2894, 32
        %v2970 = vpop.permute.xlu0 %2969
        %2971 = vrot.lane.b32.xlu0 %v2895, 32
        %v2972 = vpop.permute.xlu0 %2971
        %2973 = vrot.lane.b32.xlu0 %v2896, 32
        %v2974 = vpop.permute.xlu0 %2973
        %2975 = vrot.lane.b32.xlu0 %v2897, 32
        %v2976 = vpop.permute.xlu0 %2975
        %2977 = vrot.lane.b32.xlu0 %v2898, 32
        %v2978 = vpop.permute.xlu0 %2977
        %3011 = vrot.lane.b32.xlu0 %v2899, 64
        %v3012 = vpop.permute.xlu0 %3011
        %3013 = vrot.lane.b32.xlu0 %v2900, 64
        %v3014 = vpop.permute.xlu0 %3013
        %3015 = vrot.lane.b32.xlu0 %v2901, 64
        %v3016 = vpop.permute.xlu0 %3015
        %3017 = vrot.lane.b32.xlu0 %v2902, 64
        %v3018 = vpop.permute.xlu0 %3017
        %3019 = vrot.lane.b32.xlu0 %v2903, 64
        %v3020 = vpop.permute.xlu0 %3019
        %3021 = vrot.lane.b32.xlu0 %v2904, 64
        %v3022 = vpop.permute.xlu0 %3021
        %3023 = vrot.lane.b32.xlu0 %v2905, 64
        %v3024 = vpop.permute.xlu0 %3023
        %3025 = vrot.lane.b32.xlu0 %v2906, 64
        %v3026 = vpop.permute.xlu0 %3025
        %3027 = vrot.lane.b32.xlu0 %v2907, 64
        %v3028 = vpop.permute.xlu0 %3027
        %3029 = vrot.lane.b32.xlu0 %v2908, 64
        %v3030 = vpop.permute.xlu0 %3029
        %3031 = vrot.lane.b32.xlu0 %v2909, 64
        %v3032 = vpop.permute.xlu0 %3031
        %3033 = vrot.lane.b32.xlu0 %v2910, 64
        %v3034 = vpop.permute.xlu0 %3033
        %3035 = vrot.lane.b32.xlu0 %v2911, 64
        %v3036 = vpop.permute.xlu0 %3035
        %3037 = vrot.lane.b32.xlu0 %v2912, 64
        %v3038 = vpop.permute.xlu0 %3037
        %3039 = vrot.lane.b32.xlu0 %v2913, 64
        %v3040 = vpop.permute.xlu0 %3039
        %3041 = vrot.lane.b32.xlu0 %v2914, 64
        %v3042 = vpop.permute.xlu0 %3041
        %3075 = vrot.lane.b32.xlu0 %v2915, 96
        %v3076 = vpop.permute.xlu0 %3075
        %3077 = vrot.lane.b32.xlu0 %v2916, 96
        %v3078 = vpop.permute.xlu0 %3077
        %3079 = vrot.lane.b32.xlu0 %v2917, 96
        %v3080 = vpop.permute.xlu0 %3079
        %3081 = vrot.lane.b32.xlu0 %v2918, 96
        %v3082 = vpop.permute.xlu0 %3081
        %3083 = vrot.lane.b32.xlu0 %v2919, 96
        %v3084 = vpop.permute.xlu0 %3083
        %3085 = vrot.lane.b32.xlu0 %v2920, 96
        %v3086 = vpop.permute.xlu0 %3085
        %3087 = vrot.lane.b32.xlu0 %v2921, 96
        %v3088 = vpop.permute.xlu0 %3087
        %3089 = vrot.lane.b32.xlu0 %v2922, 96
        %v3090 = vpop.permute.xlu0 %3089
        %3091 = vrot.lane.b32.xlu0 %v2923, 96
        %v3092 = vpop.permute.xlu0 %3091
        %3093 = vrot.lane.b32.xlu0 %v2924, 96
        %v3094 = vpop.permute.xlu0 %3093
        %3095 = vrot.lane.b32.xlu0 %v2925, 96
        %v3096 = vpop.permute.xlu0 %3095
        %3097 = vrot.lane.b32.xlu0 %v2926, 96
        %v3098 = vpop.permute.xlu0 %3097
        %3099 = vrot.lane.b32.xlu0 %v2927, 96
        %v3100 = vpop.permute.xlu0 %3099
        %3101 = vrot.lane.b32.xlu0 %v2928, 96
        %v3102 = vpop.permute.xlu0 %3101
        %3103 = vrot.lane.b32.xlu0 %v2929, 96
        %v3104 = vpop.permute.xlu0 %3103
        %3105 = vrot.lane.b32.xlu0 %v2930, 96
        %v3106 = vpop.permute.xlu0 %3105
        %v3123 = vsel %vm1354, %v2867, %v2948
        %v3124 = vsel %vm1354, %v2868, %v2950
        %v3125 = vsel %vm1354, %v2869, %v2952
        %v3126 = vsel %vm1354, %v2870, %v2954
        %v3127 = vsel %vm1354, %v2871, %v2956
        %v3128 = vsel %vm1354, %v2872, %v2958
        %v3129 = vsel %vm1354, %v2873, %v2960
        %v3130 = vsel %vm1354, %v2874, %v2962
        %v3131 = vsel %vm1354, %v2875, %v2964
        %v3132 = vsel %vm1354, %v2876, %v2966
        %v3133 = vsel %vm1354, %v2877, %v2968
        %v3134 = vsel %vm1354, %v2878, %v2970
        %v3135 = vsel %vm1354, %v2879, %v2972
        %v3136 = vsel %vm1354, %v2880, %v2974
        %v3137 = vsel %vm1354, %v2881, %v2976
        %v3138 = vsel %vm1354, %v2882, %v2978
        %vm3139 = vcmask 523264
        %v3140 = vsel %vm3139, %v3123, %v3012
        %v3141 = vsel %vm3139, %v3124, %v3014
        %v3142 = vsel %vm3139, %v3125, %v3016
        %v3143 = vsel %vm3139, %v3126, %v3018
        %v3144 = vsel %vm3139, %v3127, %v3020
        %v3145 = vsel %vm3139, %v3128, %v3022
        %v3146 = vsel %vm3139, %v3129, %v3024
        %v3147 = vsel %vm3139, %v3130, %v3026
        %v3148 = vsel %vm3139, %v3131, %v3028
        %v3149 = vsel %vm3139, %v3132, %v3030
        %v3150 = vsel %vm3139, %v3133, %v3032
        %v3151 = vsel %vm3139, %v3134, %v3034
        %v3152 = vsel %vm3139, %v3135, %v3036
        %v3153 = vsel %vm3139, %v3136, %v3038
        %v3154 = vsel %vm3139, %v3137, %v3040
        %v3155 = vsel %vm3139, %v3138, %v3042
        %vm3156 = vcmask 785408
        %v3157 = vsel %vm3156, %v3140, %v3076
        %v3158 = vsel %vm3156, %v3141, %v3078
        %v3159 = vsel %vm3156, %v3142, %v3080
        %v3160 = vsel %vm3156, %v3143, %v3082
        %v3161 = vsel %vm3156, %v3144, %v3084
        %v3162 = vsel %vm3156, %v3145, %v3086
        %v3163 = vsel %vm3156, %v3146, %v3088
        %v3164 = vsel %vm3156, %v3147, %v3090
        %v3165 = vsel %vm3156, %v3148, %v3092
        %v3166 = vsel %vm3156, %v3149, %v3094
        %v3167 = vsel %vm3156, %v3150, %v3096
        %v3168 = vsel %vm3156, %v3151, %v3098
        %v3169 = vsel %vm3156, %v3152, %v3100
        %v3170 = vsel %vm3156, %v3153, %v3102
        %v3171 = vsel %vm3156, %v3154, %v3104
        %v3172 = vsel %vm3156, %v3155, %v3106
        %v3173 = vpack.c.bf16 %v3158, %v3157
        %v3174 = vpack.c.bf16 %v3160, %v3159
        %v3175 = vpack.c.bf16 %v3162, %v3161
        %v3176 = vpack.c.bf16 %v3164, %v3163
        %v3177 = vpack.c.bf16 %v3166, %v3165
        %v3178 = vpack.c.bf16 %v3168, %v3167
        %v3179 = vpack.c.bf16 %v3170, %v3169
        %v3180 = vpack.c.bf16 %v3172, %v3171
        %v3181 = vld [vmem:[#allocation7] sm:$0xf]
        %v3182 = vld [vmem:[#allocation7 + $0x4] sm:$0xf]
        %v3183 = vld [vmem:[#allocation7 + $0x8] sm:$0xf]
        %v3184 = vld [vmem:[#allocation7 + $0xc] sm:$0xf]
        %v3185 = vld [vmem:[#allocation7 + $0x10] sm:$0xf]
        %v3186 = vld [vmem:[#allocation7 + $0x14] sm:$0xf]
        %v3187 = vld [vmem:[#allocation7 + $0x18] sm:$0xf]
        %v3188 = vld [vmem:[#allocation7 + $0x1c] sm:$0xf]
        %v3189 = vld [vmem:[#allocation7 + $0x20] sm:$0xf]
        %v3190 = vld [vmem:[#allocation7 + $0x24] sm:$0xf]
        %v3191 = vld [vmem:[#allocation7 + $0x28] sm:$0xf]
        %v3192 = vld [vmem:[#allocation7 + $0x2c] sm:$0xf]
        %v3193 = vld [vmem:[#allocation7 + $0x30] sm:$0xf]
        %v3194 = vld [vmem:[#allocation7 + $0x34] sm:$0xf]
        %v3195 = vld [vmem:[#allocation7 + $0x38] sm:$0xf]
        %v3196 = vld [vmem:[#allocation7 + $0x3c] sm:$0xf]
        %v3197 = vld [vmem:[%s4] sm:$0x1]
        %v3199 = vlaneseq
        %v3200 = vshrl.u32 %v3199, 7
        %v3201 = vsub.s32 0, %v3200
        %v3202 = vrot.slane %v3197, %v3201
        %v3220 = vunpack.c.l.b16 %v3181
        %v3221 = vunpack.c.l.b16 %v3182
        %v3222 = vunpack.c.l.b16 %v3183
        %v3223 = vunpack.c.l.b16 %v3184
        %v3224 = vunpack.c.l.b16 %v3185
        %v3225 = vunpack.c.l.b16 %v3186
        %v3226 = vunpack.c.l.b16 %v3187
        %v3227 = vunpack.c.l.b16 %v3188
        %v3228 = vunpack.c.l.b16 %v3189
        %v3229 = vunpack.c.l.b16 %v3190
        %v3230 = vunpack.c.l.b16 %v3191
        %v3231 = vunpack.c.l.b16 %v3192
        %v3232 = vunpack.c.l.b16 %v3193
        %v3233 = vunpack.c.l.b16 %v3194
        %v3234 = vunpack.c.l.b16 %v3195
        %v3235 = vunpack.c.l.b16 %v3196
        %v3236 = vpack.c.b16 %v3221, %v3220
        %v3237 = vpack.c.b16 %v3223, %v3222
        %v3238 = vpack.c.b16 %v3225, %v3224
        %v3239 = vpack.c.b16 %v3227, %v3226
        %v3240 = vpack.c.b16 %v3229, %v3228
        %v3241 = vpack.c.b16 %v3231, %v3230
        %v3242 = vpack.c.b16 %v3233, %v3232
        %v3243 = vpack.c.b16 %v3235, %v3234
        %3252 = vmatprep.subr.bf16.mxu0 0
        %3253 = vmatpush1.bf16.msra.mxu0 %v3236
        %3254 = vmatprep.subr.bf16.mxu0 0
        %3255 = vmatpush1.bf16.msra.mxu0 %v3237
        %3256 = vmatprep.subr.bf16.mxu0 0
        %3257 = vmatpush1.bf16.msra.mxu0 %v3238
        %3258 = vmatprep.subr.bf16.mxu0 0
        %3259 = vmatpush1.bf16.msra.mxu0 %v3239
        %3260 = vmatprep.subr.bf16.mxu0 0
        %3261 = vmatpush1.bf16.msra.mxu0 %v3240
        %3262 = vmatprep.subr.bf16.mxu0 0
        %3263 = vmatpush1.bf16.msra.mxu0 %v3241
        %3264 = vmatprep.subr.bf16.mxu0 0
        %3265 = vmatpush1.bf16.msra.mxu0 %v3242
        %3266 = vmatprep.subr.bf16.mxu0 0
        %3267 = vmatpush1.bf16.msra.mxu0 %v3243
        %3268 = vmatprep.subr.bf16.mxu0 0
        %3269 = vmatpush1.bf16.msra.mxu0 0
        %3270 = vmatprep.subr.bf16.mxu0 0
        %3271 = vmatpush1.bf16.msra.mxu0 0
        %3272 = vmatprep.subr.bf16.mxu0 0
        %3273 = vmatpush1.bf16.msra.mxu0 0
        %3274 = vmatprep.subr.bf16.mxu0 0
        %3275 = vmatpush1.bf16.msra.mxu0 0
        %3276 = vmatprep.subr.bf16.mxu0 0
        %3277 = vmatpush1.bf16.msra.mxu0 0
        %3278 = vmatprep.subr.bf16.mxu0 0
        %3279 = vmatpush1.bf16.msra.mxu0 0
        %3280 = vmatprep.subr.bf16.mxu0 0
        %3281 = vmatpush1.bf16.msra.mxu0 0
        %3282 = vmatprep.subr.bf16.mxu0 0
        %3283 = vmatpush1.bf16.msra.mxu0 0
        %3284 = vmatprep.mubr.bf16.mxu0 0
        %3285 = vmatmul.mubr.bf16.gmra.mrb[0].mxu0 %v3173
        %v3286 = vpop.f32.mrb[0].mxu0
        %v3287 = vadd.f32 %v3202, %v3286
        %v3288 = vpop.f32.mrb[0].mxu0
        %v3289 = vpop.f32.mrb[0].mxu0
        %v3290 = vadd.f32 %v3202, %v3289
        %v3291 = vpop.f32.mrb[0].mxu0
        %3292 = vmatprep.mubr.bf16.mxu0 0
        %3293 = vmatmul.mubr.bf16.gmra.mrb[0].mxu0 %v3174
        %v3294 = vpop.f32.mrb[0].mxu0
        %v3295 = vadd.f32 %v3202, %v3294
        %v3296 = vpop.f32.mrb[0].mxu0
        %v3297 = vpop.f32.mrb[0].mxu0
        %v3298 = vadd.f32 %v3202, %v3297
        %v3299 = vpop.f32.mrb[0].mxu0
        %3300 = vmatprep.mubr.bf16.mxu0 0
        %3301 = vmatmul.mubr.bf16.gmra.mrb[0].mxu0 %v3175
        %v3302 = vpop.f32.mrb[0].mxu0
        %v3303 = vadd.f32 %v3202, %v3302
        %v3304 = vpop.f32.mrb[0].mxu0
        %v3305 = vpop.f32.mrb[0].mxu0
        %v3306 = vadd.f32 %v3202, %v3305
        %v3307 = vpop.f32.mrb[0].mxu0
        %3308 = vmatprep.mubr.bf16.mxu0 0
        %3309 = vmatmul.mubr.bf16.gmra.mrb[0].mxu0 %v3176
        %v3310 = vpop.f32.mrb[0].mxu0
        %v3311 = vadd.f32 %v3202, %v3310
        %v3312 = vpop.f32.mrb[0].mxu0
        %v3313 = vpop.f32.mrb[0].mxu0
        %v3314 = vadd.f32 %v3202, %v3313
        %v3315 = vpop.f32.mrb[0].mxu0
        %3316 = vmatprep.mubr.bf16.mxu0 0
        %3317 = vmatmul.mubr.bf16.gmra.mrb[0].mxu0 %v3177
        %v3318 = vpop.f32.mrb[0].mxu0
        %v3319 = vadd.f32 %v3202, %v3318
        %v3320 = vpop.f32.mrb[0].mxu0
        %v3321 = vpop.f32.mrb[0].mxu0
        %v3322 = vadd.f32 %v3202, %v3321
        %v3323 = vpop.f32.mrb[0].mxu0
        %3324 = vmatprep.mubr.bf16.mxu0 0
        %3325 = vmatmul.mubr.bf16.gmra.mrb[0].mxu0 %v3178
        %v3326 = vpop.f32.mrb[0].mxu0
        %v3327 = vadd.f32 %v3202, %v3326
        %v3328 = vpop.f32.mrb[0].mxu0
        %v3329 = vpop.f32.mrb[0].mxu0
        %v3330 = vadd.f32 %v3202, %v3329
        %v3331 = vpop.f32.mrb[0].mxu0
        %3332 = vmatprep.mubr.bf16.mxu0 0
        %3333 = vmatmul.mubr.bf16.gmra.mrb[0].mxu0 %v3179
        %v3334 = vpop.f32.mrb[0].mxu0
        %v3335 = vadd.f32 %v3202, %v3334
        %v3336 = vpop.f32.mrb[0].mxu0
        %v3337 = vpop.f32.mrb[0].mxu0
        %v3338 = vadd.f32 %v3202, %v3337
        %v3339 = vpop.f32.mrb[0].mxu0
        %3340 = vmatprep.mubr.bf16.mxu0 0
        %3341 = vmatmul.mubr.bf16.gmra.mrb[0].mxu0 %v3180
        %v3342 = vpop.f32.mrb[0].mxu0
        %v3343 = vadd.f32 %v3202, %v3342
        %v3344 = vpop.f32.mrb[0].mxu0
        %v3345 = vpop.f32.mrb[0].mxu0
        %v3346 = vadd.f32 %v3202, %v3345
        %v3347 = vpop.f32.mrb[0].mxu0
        %3348 = vdwg.mxu0
        %v3349 = vadd.f32 %v3157, %v3287
        %v3350 = vadd.f32 %v3158, %v3290
        %v3351 = vadd.f32 %v3159, %v3295
        %v3352 = vadd.f32 %v3160, %v3298
        %v3353 = vadd.f32 %v3161, %v3303
        %v3354 = vadd.f32 %v3162, %v3306
        %v3355 = vadd.f32 %v3163, %v3311
        %v3356 = vadd.f32 %v3164, %v3314
        %v3357 = vadd.f32 %v3165, %v3319
        %v3358 = vadd.f32 %v3166, %v3322
        %v3359 = vadd.f32 %v3167, %v3327
        %v3360 = vadd.f32 %v3168, %v3330
        %v3361 = vadd.f32 %v3169, %v3335
        %v3362 = vadd.f32 %v3170, %v3338
        %v3363 = vadd.f32 %v3171, %v3343
        %v3364 = vadd.f32 %v3172, %v3346
        %3365 = vadd.xlane.f32.xlu0 %v3349
        %v3366 = vpop.xlane.xlu0 %3365
        %3367 = vadd.xlane.f32.xlu0 %v3350
        %v3368 = vpop.xlane.xlu0 %3367
        %3369 = vadd.xlane.f32.xlu0 %v3351
        %v3370 = vpop.xlane.xlu0 %3369
        %3371 = vadd.xlane.f32.xlu0 %v3352
        %v3372 = vpop.xlane.xlu0 %3371
        %3373 = vadd.xlane.f32.xlu0 %v3353
        %v3374 = vpop.xlane.xlu0 %3373
        %3375 = vadd.xlane.f32.xlu0 %v3354
        %v3376 = vpop.xlane.xlu0 %3375
        %3377 = vadd.xlane.f32.xlu0 %v3355
        %v3378 = vpop.xlane.xlu0 %3377
        %3379 = vadd.xlane.f32.xlu0 %v3356
        %v3380 = vpop.xlane.xlu0 %3379
        %3381 = vadd.xlane.f32.xlu0 %v3357
        %v3382 = vpop.xlane.xlu0 %3381
        %3383 = vadd.xlane.f32.xlu0 %v3358
        %v3384 = vpop.xlane.xlu0 %3383
        %3385 = vadd.xlane.f32.xlu0 %v3359
        %v3386 = vpop.xlane.xlu0 %3385
        %3387 = vadd.xlane.f32.xlu0 %v3360
        %v3388 = vpop.xlane.xlu0 %3387
        %3389 = vadd.xlane.f32.xlu0 %v3361
        %v3390 = vpop.xlane.xlu0 %3389
        %3391 = vadd.xlane.f32.xlu0 %v3362
        %v3392 = vpop.xlane.xlu0 %3391
        %3393 = vadd.xlane.f32.xlu0 %v3363
        %v3394 = vpop.xlane.xlu0 %3393
        %3395 = vadd.xlane.f32.xlu0 %v3364
        %v3396 = vpop.xlane.xlu0 %3395
        %v3397 = vrcp.pop 128.0
        %v3398 = vmul.f32 %v3366, %v3397
        %v3399 = vmul.f32 %v3368, %v3397
        %v3400 = vmul.f32 %v3370, %v3397
        %v3401 = vmul.f32 %v3372, %v3397
        %v3402 = vmul.f32 %v3374, %v3397
        %v3403 = vmul.f32 %v3376, %v3397
        %v3404 = vmul.f32 %v3378, %v3397
        %v3405 = vmul.f32 %v3380, %v3397
        %v3406 = vmul.f32 %v3382, %v3397
        %v3407 = vmul.f32 %v3384, %v3397
        %v3408 = vmul.f32 %v3386, %v3397
        %v3409 = vmul.f32 %v3388, %v3397
        %v3410 = vmul.f32 %v3390, %v3397
        %v3411 = vmul.f32 %v3392, %v3397
        %v3412 = vmul.f32 %v3394, %v3397
        %v3413 = vmul.f32 %v3396, %v3397
        %v3414 = vsub.f32 %v3349, %v3398
        %v3415 = vsub.f32 %v3350, %v3399
        %v3416 = vsub.f32 %v3351, %v3400
        %v3417 = vsub.f32 %v3352, %v3401
        %v3418 = vsub.f32 %v3353, %v3402
        %v3419 = vsub.f32 %v3354, %v3403
        %v3420 = vsub.f32 %v3355, %v3404
        %v3421 = vsub.f32 %v3356, %v3405
        %v3422 = vsub.f32 %v3357, %v3406
        %v3423 = vsub.f32 %v3358, %v3407
        %v3424 = vsub.f32 %v3359, %v3408
        %v3425 = vsub.f32 %v3360, %v3409
        %v3426 = vsub.f32 %v3361, %v3410
        %v3427 = vsub.f32 %v3362, %v3411
        %v3428 = vsub.f32 %v3363, %v3412
        %v3429 = vsub.f32 %v3364, %v3413
        %v3430 = vmul.f32 %v3414, %v3414
        %v3431 = vmul.f32 %v3415, %v3415
        %v3432 = vmul.f32 %v3416, %v3416
        %v3433 = vmul.f32 %v3417, %v3417
        %v3434 = vmul.f32 %v3418, %v3418
        %v3435 = vmul.f32 %v3419, %v3419
        %v3436 = vmul.f32 %v3420, %v3420
        %v3437 = vmul.f32 %v3421, %v3421
        %v3438 = vmul.f32 %v3422, %v3422
        %v3439 = vmul.f32 %v3423, %v3423
        %v3440 = vmul.f32 %v3424, %v3424
        %v3441 = vmul.f32 %v3425, %v3425
        %v3442 = vmul.f32 %v3426, %v3426
        %v3443 = vmul.f32 %v3427, %v3427
        %v3444 = vmul.f32 %v3428, %v3428
        %v3445 = vmul.f32 %v3429, %v3429
        %3446 = vadd.xlane.f32.xlu0 %v3430
        %v3447 = vpop.xlane.xlu0 %3446
        %3448 = vadd.xlane.f32.xlu0 %v3431
        %v3449 = vpop.xlane.xlu0 %3448
        %3450 = vadd.xlane.f32.xlu0 %v3432
        %v3451 = vpop.xlane.xlu0 %3450
        %3452 = vadd.xlane.f32.xlu0 %v3433
        %v3453 = vpop.xlane.xlu0 %3452
        %3454 = vadd.xlane.f32.xlu0 %v3434
        %v3455 = vpop.xlane.xlu0 %3454
        %3456 = vadd.xlane.f32.xlu0 %v3435
        %v3457 = vpop.xlane.xlu0 %3456
        %3458 = vadd.xlane.f32.xlu0 %v3436
        %v3459 = vpop.xlane.xlu0 %3458
        %3460 = vadd.xlane.f32.xlu0 %v3437
        %v3461 = vpop.xlane.xlu0 %3460
        %3462 = vadd.xlane.f32.xlu0 %v3438
        %v3463 = vpop.xlane.xlu0 %3462
        %3464 = vadd.xlane.f32.xlu0 %v3439
        %v3465 = vpop.xlane.xlu0 %3464
        %3466 = vadd.xlane.f32.xlu0 %v3440
        %v3467 = vpop.xlane.xlu0 %3466
        %3468 = vadd.xlane.f32.xlu0 %v3441
        %v3469 = vpop.xlane.xlu0 %3468
        %3470 = vadd.xlane.f32.xlu0 %v3442
        %v3471 = vpop.xlane.xlu0 %3470
        %3472 = vadd.xlane.f32.xlu0 %v3443
        %v3473 = vpop.xlane.xlu0 %3472
        %3474 = vadd.xlane.f32.xlu0 %v3444
        %v3475 = vpop.xlane.xlu0 %3474
        %3476 = vadd.xlane.f32.xlu0 %v3445
        %v3477 = vpop.xlane.xlu0 %3476
        %v3478 = vmul.f32 %v3447, %v3397
        %v3479 = vmul.f32 %v3449, %v3397
        %v3480 = vmul.f32 %v3451, %v3397
        %v3481 = vmul.f32 %v3453, %v3397
        %v3482 = vmul.f32 %v3455, %v3397
        %v3483 = vmul.f32 %v3457, %v3397
        %v3484 = vmul.f32 %v3459, %v3397
        %v3485 = vmul.f32 %v3461, %v3397
        %v3486 = vmul.f32 %v3463, %v3397
        %v3487 = vmul.f32 %v3465, %v3397
        %v3488 = vmul.f32 %v3467, %v3397
        %v3489 = vmul.f32 %v3469, %v3397
        %v3490 = vmul.f32 %v3471, %v3397
        %v3491 = vmul.f32 %v3473, %v3397
        %v3492 = vmul.f32 %v3475, %v3397
        %v3493 = vmul.f32 %v3477, %v3397
        %v3494 = vadd.f32 %v3478, 1e-05
        %v3495 = vadd.f32 %v3479, 1e-05
        %v3496 = vadd.f32 %v3480, 1e-05
        %v3497 = vadd.f32 %v3481, 1e-05
        %v3498 = vadd.f32 %v3482, 1e-05
        %v3499 = vadd.f32 %v3483, 1e-05
        %v3500 = vadd.f32 %v3484, 1e-05
        %v3501 = vadd.f32 %v3485, 1e-05
        %v3502 = vadd.f32 %v3486, 1e-05
        %v3503 = vadd.f32 %v3487, 1e-05
        %v3504 = vadd.f32 %v3488, 1e-05
        %v3505 = vadd.f32 %v3489, 1e-05
        %v3506 = vadd.f32 %v3490, 1e-05
        %v3507 = vadd.f32 %v3491, 1e-05
        %v3508 = vadd.f32 %v3492, 1e-05
        %v3509 = vadd.f32 %v3493, 1e-05
        %v3510 = vrsqrt.pop %v3494
        %v3511 = vrsqrt.pop %v3495
        %v3512 = vrsqrt.pop %v3496
        %v3513 = vrsqrt.pop %v3497
        %v3514 = vrsqrt.pop %v3498
        %v3515 = vrsqrt.pop %v3499
        %v3516 = vrsqrt.pop %v3500
        %v3517 = vrsqrt.pop %v3501
        %v3518 = vrsqrt.pop %v3502
        %v3519 = vrsqrt.pop %v3503
        %v3520 = vrsqrt.pop %v3504
        %v3521 = vrsqrt.pop %v3505
        %v3522 = vrsqrt.pop %v3506
        %v3523 = vrsqrt.pop %v3507
        %v3524 = vrsqrt.pop %v3508
        %v3525 = vrsqrt.pop %v3509
        %v3526 = vmul.f32 %v3414, %v3510
        %v3527 = vmul.f32 %v3415, %v3511
        %v3528 = vmul.f32 %v3416, %v3512
        %v3529 = vmul.f32 %v3417, %v3513
        %v3530 = vmul.f32 %v3418, %v3514
        %v3531 = vmul.f32 %v3419, %v3515
        %v3532 = vmul.f32 %v3420, %v3516
        %v3533 = vmul.f32 %v3421, %v3517
        %v3534 = vmul.f32 %v3422, %v3518
        %v3535 = vmul.f32 %v3423, %v3519
        %v3536 = vmul.f32 %v3424, %v3520
        %v3537 = vmul.f32 %v3425, %v3521
        %v3538 = vmul.f32 %v3426, %v3522
        %v3539 = vmul.f32 %v3427, %v3523
        %v3540 = vmul.f32 %v3428, %v3524
        %v3541 = vmul.f32 %v3429, %v3525
        %v3542 = vld [vmem:[%s5] sm:$0x1]
        %v3544 = vlaneseq
        %v3545 = vshrl.u32 %v3544, 7
        %v3546 = vsub.s32 0, %v3545
        %v3547 = vrot.slane %v3542, %v3546
        %v3549 = vmul.f32 %v3526, %v3547
        %v3550 = vmul.f32 %v3527, %v3547
        %v3551 = vmul.f32 %v3528, %v3547
        %v3552 = vmul.f32 %v3529, %v3547
        %v3553 = vmul.f32 %v3530, %v3547
        %v3554 = vmul.f32 %v3531, %v3547
        %v3555 = vmul.f32 %v3532, %v3547
        %v3556 = vmul.f32 %v3533, %v3547
        %v3557 = vmul.f32 %v3534, %v3547
        %v3558 = vmul.f32 %v3535, %v3547
        %v3559 = vmul.f32 %v3536, %v3547
        %v3560 = vmul.f32 %v3537, %v3547
        %v3561 = vmul.f32 %v3538, %v3547
        %v3562 = vmul.f32 %v3539, %v3547
        %v3563 = vmul.f32 %v3540, %v3547
        %v3564 = vmul.f32 %v3541, %v3547
        %v3565 = vld [vmem:[%s6] sm:$0x1]
        %v3567 = vlaneseq
        %v3568 = vshrl.u32 %v3567, 7
        %v3569 = vsub.s32 0, %v3568
        %v3570 = vrot.slane %v3565, %v3569
        %v3572 = vadd.f32 %v3549, %v3570
        %v3573 = vadd.f32 %v3550, %v3570
        %v3574 = vadd.f32 %v3551, %v3570
        %v3575 = vadd.f32 %v3552, %v3570
        %v3576 = vadd.f32 %v3553, %v3570
        %v3577 = vadd.f32 %v3554, %v3570
        %v3578 = vadd.f32 %v3555, %v3570
        %v3579 = vadd.f32 %v3556, %v3570
        %v3580 = vadd.f32 %v3557, %v3570
        %v3581 = vadd.f32 %v3558, %v3570
        %v3582 = vadd.f32 %v3559, %v3570
        %v3583 = vadd.f32 %v3560, %v3570
        %v3584 = vadd.f32 %v3561, %v3570
        %v3585 = vadd.f32 %v3562, %v3570
        %v3586 = vadd.f32 %v3563, %v3570
        %v3587 = vadd.f32 %v3564, %v3570
        %3588 = vst [vmem:[%s325] sm:$0xff] %v3572
        %3589 = vst [vmem:[%s325 + $0x8] sm:$0xff] %v3573
        %3590 = vst [vmem:[%s325 + $0x10] sm:$0xff] %v3574
        %3591 = vst [vmem:[%s325 + $0x18] sm:$0xff] %v3575
        %3592 = vst [vmem:[%s325 + $0x20] sm:$0xff] %v3576
        %3593 = vst [vmem:[%s325 + $0x28] sm:$0xff] %v3577
        %3594 = vst [vmem:[%s325 + $0x30] sm:$0xff] %v3578
        %3595 = vst [vmem:[%s325 + $0x38] sm:$0xff] %v3579
        %3596 = vst [vmem:[%s325 + $0x40] sm:$0xff] %v3580
        %3597 = vst [vmem:[%s325 + $0x48] sm:$0xff] %v3581
        %3598 = vst [vmem:[%s325 + $0x50] sm:$0xff] %v3582
        %3599 = vst [vmem:[%s325 + $0x58] sm:$0xff] %v3583
        %3600 = vst [vmem:[%s325 + $0x60] sm:$0xff] %v3584
        %3601 = vst [vmem:[%s325 + $0x68] sm:$0xff] %v3585
        %3602 = vst [vmem:[%s325 + $0x70] sm:$0xff] %v3586
        %3603 = vst [vmem:[%s325 + $0x78] sm:$0xff] %v3587
        %s3604 = sand.u32 %s185, 1
        %s3605 = scalar_lea.sflag [#allocation4], %s3604
        %s3606 = sand.u32 %s185, 1
        %s3607 = smul.addr %s3606, 128
        %s3608 = scalar_lea.vmem [#allocation8], %s3607
        // Predicated region
        $region61: #{tpu_custom_call.1} parent=47 // pred_check
          %p3609 = pneg %p195
        $region62: #{tpu_custom_call.1} parent=47 // pred_check_branch
          %3611 = sbr.rel (%p3609) target = $region64
        $region63: #{tpu_custom_call.1} parent=47 // pred_region
          %s3613 = ssub.s32 2048, 2048
          %3614 = vsyncadd %s3605, %s3613
          %s3615 = smul.addr %s25, 16
          %s3616 = smul.addr %s3615, 128
          %s3617 = scalar_lea.hbm %s7, %s3616
          %s3618 = sshll.u32 %s3608, 4
          %s3619 = int_to_ptr.vmem [resolvable:$true] %s3618
          %3624 = dma.vmem_to_hbm [thread:$0]  %s3619, 2048, %s3617, %s3605, 128, 128, 8
        $region64: #{tpu_custom_call.1} parent=47 // pred_fallthru
          _
      $region48: #{tpu_custom_call.1} parent=5 // pred_fallthru
        _
      %p3625 = scmp.le.s32.totalorder 2, %s20
      // Predicated region
      $region65: #{tpu_custom_call.1} parent=5 // pred_check
        %p3626 = pneg %p3625
      $region66: #{tpu_custom_call.1} parent=5 // pred_check_branch
        %3628 = sbr.rel (%p3626) target = $region68
      $region67: #{tpu_custom_call.1} parent=5 // pred_region
        %s3629 = ssub.s32 %s20, 2
        // Predicated region
        $region69: #{tpu_custom_call.1} parent=67 // pred_check
          %p3630 = pneg %p201
        $region70: #{tpu_custom_call.1} parent=67 // pred_check_branch
          %3632 = sbr.rel (%p3630) target = $region72
        $region71: #{tpu_custom_call.1} parent=67 // pred_region
          %s3633 = sand.u32 %s186, 1
          %s3634 = scalar_lea.sflag [#allocation4], %s3633
          %s3635 = sand.u32 %s186, 1
          %s3636 = smul.addr %s3635, 128
          %s3637 = scalar_lea.vmem [#allocation8], %s3636
          %3638 = dma.done %s3634, 2048
        $region72: #{tpu_custom_call.1} parent=67 // pred_fallthru
          _
      $region68: #{tpu_custom_call.1} parent=5 // pred_fallthru
        _
    $region6: #{tpu_custom_call.1} parent=1 // loop_footer
      %s24 = sadd.s32 1, %s20
    $region7: #{tpu_custom_call.1} parent=1 // loop_footer_branch
      %19 = sbr.rel target = $region3
    $region8: #{tpu_custom_call.1} parent=1 // loop_exit
      _
    %3639 = vsyncpa [#allocation3], 1
    %s3640 = scalar_lea.sflag [#allocation3], 1
    %3641 = vsyncpa %s3640, 1
    %3642 = vsyncpa [#allocation6], 1
    %3643 = vsyncpa [#allocation4], 1
    %s3644 = scalar_lea.sflag [#allocation4], 1
    %3645 = vsyncpa %s3644, 1

</llo_original>
